<compile_context>
chip_gen: v7x
topology: tpu7x:2x2x1
jax: 0.10.0
libtpu: 0.0.40
codegen_flags: <defaults>
</compile_context>

<pallas_src>
import functools

import jax
import jax.numpy as jnp
from jax.experimental import pallas as pl
from jax.experimental.pallas import tpu as pltpu


# ----------------------------- Pallas kernels ------------------------------

def _conv_pool_kernel(x_ref, w_ref, b_ref, o_ref, *, k_split):
    """Fused 3x3 valid conv + bias + ReLU + 2x2/2 max-pool for a batch block.

    x_ref: (4, R, K) bf16 -- pool-phase-major, tap-concatenated im2col rows
           (R = Bt * m_pad pooled positions, K = 9 * Cin).
    w_ref: (K, 128) bf16  -- conv weight, Cout zero-padded to 128 lanes.
    b_ref: (1, 128) f32   -- bias, zero-padded to 128 lanes.
    o_ref: (R, 128) bf16  -- relu(max_phase(conv) + b), lane-dense store.
    """
    w = w_ref[...]
    mx = None
    for p in range(4):                               # static unroll, 4 pool phases
        xp = x_ref[p]                                # (R, K) contiguous slab
        if k_split is None:
            s = jnp.dot(xp, w, preferred_element_type=jnp.float32)
        else:
            # 256 + remainder chunking keeps the 256-deep MXUs (v6e/v7x) full;
            # both split points are lane/sublane tile aligned.
            s = jnp.dot(xp[:, :k_split], w[:k_split],
                        preferred_element_type=jnp.float32)
            s = s + jnp.dot(xp[:, k_split:], w[k_split:],
                            preferred_element_type=jnp.float32)
        mx = s if mx is None else jnp.maximum(mx, s)
    # relu(max_p(s_p) + b) == max_p(relu(s_p + b)) since ReLU is monotone and
    # the bias is shared across pool phases.
    o_ref[...] = jnp.maximum(mx + b_ref[...], 0.0).astype(o_ref.dtype)


def _fc_fused_kernel(x_ref, w1_ref, b1_ref, w2_ref, b2_ref, o_ref):
    """relu(x @ w1 + b1) @ w2 + b2; hidden activation never leaves VMEM/vregs."""
    h = jnp.dot(x_ref[...], w1_ref[...], preferred_element_type=jnp.float32)
    h = jnp.maximum(h + b1_ref[...], 0.0).astype(jnp.bfloat16)
    y = jnp.dot(h, w2_ref[...], preferred_element_type=jnp.float32)
    o_ref[...] = y + b2_ref[...]


# ------------------------------ Wrappers -----------------------------------

def _pick_block_b(B, cap=8):
    """Largest divisor of B that is <= cap and keeps >= 2 grid steps for B>=2."""
    best = 1
    for d in range(1, min(cap, B) + 1):
        if B % d == 0 and (B // d >= 2 or B == 1):
            best = d
    return best


def conv_pool(x_cols, w, b, *, m_pad):
    """x_cols: (4, B*m_pad, K) bf16; w: (K, 128) bf16; b: (1, 128) f32.
    Returns (B*m_pad, 128) bf16 = relu(maxpool(conv)) with padded rows/lanes."""
    _, BM, K = x_cols.shape
    B = BM // m_pad
    Bt = _pick_block_b(B)
    rows = Bt * m_pad                                   # multiple of 8 (m_pad is)
    k_split = 256 if K > 256 else None
    kernel = functools.partial(_conv_pool_kernel, k_split=k_split)
    return pl.pallas_call(
        kernel,
        out_shape=jax.ShapeDtypeStruct((BM, 128), jnp.bfloat16),
        grid=(B // Bt,),
        in_specs=[pl.BlockSpec((4, rows, K), lambda i: (0, i, 0)),
                  pl.BlockSpec((K, 128), lambda i: (0, 0)),
                  pl.BlockSpec((1, 128), lambda i: (0, 0))],
        out_specs=pl.BlockSpec((rows, 128), lambda i: (i, 0)),
        compiler_params=pltpu.CompilerParams(
            dimension_semantics=("parallel",)),
    )(x_cols, w, b)


def fc_fused(x, w1, b1, w2, b2):
    """x: (B, K) bf16; w1: (K, 128) bf16; w2: (128, 128) bf16 (cols >= 10 zero)."""
    B, K = x.shape
    N = w2.shape[1]
    # TM <= 128 keeps both (TM,128) f32 accumulators + bf16 hidden well within
    # the 64-vreg file (review: avoid TM=256 spill risk).
    TM = B if B <= 128 else 128
    return pl.pallas_call(
        _fc_fused_kernel,
        out_shape=jax.ShapeDtypeStruct((B, N), jnp.float32),
        grid=(pl.cdiv(B, TM),),
        in_specs=[pl.BlockSpec((TM, K), lambda i: (i, 0)),
                  pl.BlockSpec(w1.shape, lambda i: (0, 0)),
                  pl.BlockSpec(b1.shape, lambda i: (0, 0)),
                  pl.BlockSpec(w2.shape, lambda i: (0, 0)),
                  pl.BlockSpec(b2.shape, lambda i: (0, 0))],
        out_specs=pl.BlockSpec((TM, N), lambda i: (i, 0)),
        compiler_params=pltpu.CompilerParams(
            dimension_semantics=("parallel",)),
    )(x, w1, b1, w2, b2)


# ------------------------- Layout plumbing (XLA) ----------------------------

def _im2col_pool_phases(x, Hp, Wp, m_pad):
    """Build the fused conv+pool im2col: for each pool phase (dy,dz) and pooled
    position (h',w'), concatenate the 9 conv taps along channels.

    x: (B, H, W, Cin) bf16.  Returns (4, B*m_pad, 9*Cin) bf16, rows of image b
    occupying [b*m_pad, b*m_pad + Hp*Wp); padded rows are zero."""
    B, H, W, Cin = x.shape
    # Max tap offset is dy+ki = 3, deepest strided read is 3 + 2*(Hp-1).
    assert H >= 2 * Hp + 2 and W >= 2 * Wp + 2, "input too small for pooled grid"
    M = Hp * Wp
    phases = []
    for dy in range(2):
        for dz in range(2):
            taps = []
            for ki in range(3):
                for kj in range(3):
                    r0, c0 = dy + ki, dz + kj
                    t = x[:, r0:r0 + 2 * Hp:2, c0:c0 + 2 * Wp:2, :]  # (B,Hp,Wp,Cin)
                    taps.append(t.reshape(B, M, Cin))
            ph = jnp.concatenate(taps, axis=-1)                      # (B, M, 9*Cin)
            ph = jnp.pad(ph, ((0, 0), (0, m_pad - M), (0, 0)))
            phases.append(ph.reshape(B * m_pad, 9 * Cin))
    return jnp.stack(phases, axis=0)                                 # (4,B*m_pad,K)


# conv1: 32x32 -> conv 30x30 -> pool 15x15 ; conv2: 15x15 -> 13x13 -> pool 6x6
_M1, _MP1 = 15 * 15, 232      # pooled rows and row padding (multiple of 8)
_M2, _MP2 = 6 * 6, 40


def simple_cnn_forward(x_nchw, pp):
    """Forward pass. x_nchw: (B, 3, 32, 32) f32 -> (B, 10) f32 logits."""
    B = x_nchw.shape[0]
    x = jnp.transpose(x_nchw, (0, 2, 3, 1)).astype(jnp.bfloat16)         # NHWC
    cols1 = _im2col_pool_phases(x, Hp=15, Wp=15, m_pad=_MP1)             # (4,B*232,27)
    c1 = conv_pool(cols1, pp["c1w"], pp["c1b"], m_pad=_MP1)              # (B*232,128)
    c1 = c1.reshape(B, _MP1, 128)[:, :_M1, :32].reshape(B, 15, 15, 32)
    cols2 = _im2col_pool_phases(c1, Hp=6, Wp=6, m_pad=_MP2)              # (4,B*40,288)
    c2 = conv_pool(cols2, pp["c2w"], pp["c2b"], m_pad=_MP2)              # (B*40,128)
    flat = c2.reshape(B, _MP2, 128)[:, :_M2, :64].reshape(B, _M2 * 64)   # (B,2304)
    logits = fc_fused(flat, pp["w1"], pp["b1"], pp["w2"], pp["b2"])      # (B,128)
    return logits[:, :10]


# ----------------------- Parameter init / packing ---------------------------

def init_params(key):
    ks = jax.random.split(key, 8)

    def u(k, shape, fan_in):
        bound = 1.0 / jnp.sqrt(fan_in)
        return jax.random.uniform(k, shape, jnp.float32, -bound, bound)

    return {
        "conv1_w": u(ks[0], (32, 3, 3, 3), 3 * 3 * 3),
        "conv1_b": u(ks[1], (32,), 3 * 3 * 3),
        "conv2_w": u(ks[2], (64, 32, 3, 3), 32 * 3 * 3),
        "conv2_b": u(ks[3], (64,), 32 * 3 * 3),
        "fc1_w":   u(ks[4], (128, 64 * 6 * 6), 64 * 6 * 6),
        "fc1_b":   u(ks[5], (128,), 64 * 6 * 6),
        "fc2_w":   u(ks[6], (10, 128), 128),
        "fc2_b":   u(ks[7], (10,), 128),
    }


def pack_params(params):
    """One-time packing: conv weights as (9*Cin, 128) bf16 (row = tap*Cin + c,
    Cout zero-padded to 128 lanes), biases as (1,128) f32, fc1 rows permuted to
    the (h, w, c) activation flatten order, fc2 padded to 128 output lanes."""
    def conv_pack(w):
        cout = w.shape[0]
        wm = jnp.transpose(w, (2, 3, 1, 0)).reshape(-1, cout)   # (9*Cin, Cout)
        return jnp.pad(wm, ((0, 0), (0, 128 - cout))).astype(jnp.bfloat16)

    def bias_pack(b):
        return jnp.pad(b, (0, 128 - b.shape[0])).reshape(1, 128).astype(jnp.float32)

    w1 = params["fc1_w"].reshape(128, 64, 6, 6)          # [n, c, h, w]
    w1 = jnp.transpose(w1, (2, 3, 1, 0))                 # [h, w, c, n]
    w1 = w1.reshape(6 * 6 * 64, 128).astype(jnp.bfloat16)
    w2 = jnp.pad(params["fc2_w"].T, ((0, 0), (0, 118))).astype(jnp.bfloat16)

    return {
        "c1w": conv_pack(params["conv1_w"]),              # (27, 128)
        "c1b": bias_pack(params["conv1_b"]),
        "c2w": conv_pack(params["conv2_w"]),              # (288, 128)
        "c2b": bias_pack(params["conv2_b"]),
        "w1": w1,                                         # (2304, 128)
        "b1": params["fc1_b"].reshape(1, 128).astype(jnp.float32),
        "w2": w2,                                         # (128, 128)
        "b2": bias_pack(params["fc2_b"]),
    }


# --------------------------- Plain-JAX reference ----------------------------

def reference_forward(x_nchw, params):
    x = jnp.transpose(x_nchw, (0, 2, 3, 1))

    def conv(x, w, b):
        wh = jnp.transpose(w, (2, 3, 1, 0))              # HWIO
        y = jax.lax.conv_general_dilated(
            x, wh, (1, 1), "VALID",
            dimension_numbers=("NHWC", "HWIO", "NHWC"))
        return jax.nn.relu(y + b)

    def pool(x):
        B, H, W, C = x.shape
        Ho, Wo = H // 2, W // 2
        x = x[:, :Ho * 2, :Wo * 2, :].reshape(B, Ho, 2, Wo, 2, C)
        return x.max(axis=(2, 4))

    x = pool(conv(x, params["conv1_w"], params["conv1_b"]))
    x = pool(conv(x, params["conv2_w"], params["conv2_b"]))
    B = x.shape[0]
    flat = jnp.transpose(x, (0, 3, 1, 2)).reshape(B, -1)   # PyTorch NCHW flatten
    h = jax.nn.relu(flat @ params["fc1_w"].T + params["fc1_b"])
    return h @ params["fc2_w"].T + params["fc2_b"]


# --------------------------------- Main --------------------------------------

if __name__ == "__main__":
    key = jax.random.PRNGKey(0)
    pkey, xkey = jax.random.split(key)
    params = init_params(pkey)
    packed = pack_params(params)

    # Input implied by the module: (B, 3, 32, 32) so that fc1 sees 64*6*6.
    x = jax.random.normal(xkey, (2, 3, 32, 32), dtype=jnp.float32)

    fwd = jax.jit(simple_cnn_forward)
    out = jax.block_until_ready(fwd(x, packed))
    assert out.shape == (2, 10) and out.dtype == jnp.float32

    ref = jax.block_until_ready(jax.jit(reference_forward)(x, params))
    err = float(jnp.max(jnp.abs(out - ref)))
    tol = 2e-2 + 2e-2 * float(jnp.max(jnp.abs(ref)))      # bf16-operand tolerance
    assert err < tol, f"mismatch vs reference: max abs err {err} (tol {tol})"

    print("KERNEL_OK")
</pallas_src>

<mosaic_0001>
module attributes {stable_mosaic.version = 11 : i64} {
  func.func @_conv_pool_kernel(%arg0: i32, %arg1: memref<4x232x27xbf16, #tpu.memory_space<vmem>>, %arg2: memref<27x128xbf16, #tpu.memory_space<vmem>>, %arg3: memref<1x128xf32, #tpu.memory_space<vmem>>, %arg4: memref<232x128xbf16, #tpu.memory_space<vmem>>) attributes {dimension_semantics = [#tpu.dimension_semantics<parallel>], iteration_bounds = array<i64: 2>, scalar_prefetch = 0 : i64, scratch_operands = 0 : i64, tpu.core_type = #tpu.core_type<tc>, window_params = [{transform_indices = @transform_0, window_bounds = array<i64: 4, 232, 27>}, {pipeline_mode = #tpu.pipeline_mode<synchronous>, transform_indices = @transform_1, window_bounds = array<i64: 27, 128>}, {pipeline_mode = #tpu.pipeline_mode<synchronous>, transform_indices = @transform_2, window_bounds = array<i64: 1, 128>}, {transform_indices = @transform_3, window_bounds = array<i64: 232, 128>}]} {
    %c0 = arith.constant 0 : index
    %c0_0 = arith.constant 0 : index
    %0 = vector.load %arg2[%c0, %c0_0] : memref<27x128xbf16, #tpu.memory_space<vmem>>, vector<27x128xbf16>
    %c0_1 = arith.constant 0 : index
    %c0_2 = arith.constant 0 : index
    %c0_3 = arith.constant 0 : index
    %1 = vector.load %arg1[%c0_1, %c0_2, %c0_3] : memref<4x232x27xbf16, #tpu.memory_space<vmem>>, vector<1x232x27xbf16>
    %2 = vector.shape_cast %1 : vector<1x232x27xbf16> to vector<232x27xbf16>
    %cst = arith.constant dense<0.000000e+00> : vector<232x128xf32>
    %3 = tpu.matmul %2, %0, %cst {dimension_numbers = #tpu.dot_dimension_numbers<[1], [0], [0], [1], [0, 0, 1, 1], [], []>} : vector<232x27xbf16>, vector<27x128xbf16>, vector<232x128xf32> -> vector<232x128xf32>
    %c1 = arith.constant 1 : index
    %c0_4 = arith.constant 0 : index
    %c0_5 = arith.constant 0 : index
    %4 = vector.load %arg1[%c1, %c0_4, %c0_5] : memref<4x232x27xbf16, #tpu.memory_space<vmem>>, vector<1x232x27xbf16>
    %5 = vector.shape_cast %4 : vector<1x232x27xbf16> to vector<232x27xbf16>
    %cst_6 = arith.constant dense<0.000000e+00> : vector<232x128xf32>
    %6 = tpu.matmul %5, %0, %cst_6 {dimension_numbers = #tpu.dot_dimension_numbers<[1], [0], [0], [1], [0, 0, 1, 1], [], []>} : vector<232x27xbf16>, vector<27x128xbf16>, vector<232x128xf32> -> vector<232x128xf32>
    %7 = arith.maximumf %3, %6 : vector<232x128xf32>
    %c2 = arith.constant 2 : index
    %c0_7 = arith.constant 0 : index
    %c0_8 = arith.constant 0 : index
    %8 = vector.load %arg1[%c2, %c0_7, %c0_8] : memref<4x232x27xbf16, #tpu.memory_space<vmem>>, vector<1x232x27xbf16>
    %9 = vector.shape_cast %8 : vector<1x232x27xbf16> to vector<232x27xbf16>
    %cst_9 = arith.constant dense<0.000000e+00> : vector<232x128xf32>
    %10 = tpu.matmul %9, %0, %cst_9 {dimension_numbers = #tpu.dot_dimension_numbers<[1], [0], [0], [1], [0, 0, 1, 1], [], []>} : vector<232x27xbf16>, vector<27x128xbf16>, vector<232x128xf32> -> vector<232x128xf32>
    %11 = arith.maximumf %7, %10 : vector<232x128xf32>
    %c3 = arith.constant 3 : index
    %c0_10 = arith.constant 0 : index
    %c0_11 = arith.constant 0 : index
    %12 = vector.load %arg1[%c3, %c0_10, %c0_11] : memref<4x232x27xbf16, #tpu.memory_space<vmem>>, vector<1x232x27xbf16>
    %13 = vector.shape_cast %12 : vector<1x232x27xbf16> to vector<232x27xbf16>
    %cst_12 = arith.constant dense<0.000000e+00> : vector<232x128xf32>
    %14 = tpu.matmul %13, %0, %cst_12 {dimension_numbers = #tpu.dot_dimension_numbers<[1], [0], [0], [1], [0, 0, 1, 1], [], []>} : vector<232x27xbf16>, vector<27x128xbf16>, vector<232x128xf32> -> vector<232x128xf32>
    %15 = arith.maximumf %11, %14 : vector<232x128xf32>
    %c0_13 = arith.constant 0 : index
    %c0_14 = arith.constant 0 : index
    %16 = vector.load %arg3[%c0_13, %c0_14] : memref<1x128xf32, #tpu.memory_space<vmem>>, vector<1x128xf32>
    %17 = vector.broadcast %16 : vector<1x128xf32> to vector<232x128xf32>
    %18 = arith.addf %15, %17 : vector<232x128xf32>
    %cst_15 = arith.constant 0.000000e+00 : f32
    %19 = vector.broadcast %cst_15 : f32 to vector<232x128xf32>
    %20 = arith.maximumf %18, %19 : vector<232x128xf32>
    %21 = arith.truncf %20 : vector<232x128xf32> to vector<232x128xbf16>
    %c0_16 = arith.constant 0 : index
    %c0_17 = arith.constant 0 : index
    %22 = vector.load %arg4[%c0_16, %c0_17] : memref<232x128xbf16, #tpu.memory_space<vmem>>, vector<232x128xbf16>
    tpu.vector_store %arg4[%c0_16, %c0_17], %21 {strides = array<i32>} : memref<232x128xbf16, #tpu.memory_space<vmem>>, vector<232x128xbf16>,
    return
  }
  func.func @transform_0(%arg0: i32) -> (i32, i32, i32) {
    %c0_i32 = arith.constant 0 : i32
    %c0_i32_0 = arith.constant 0 : i32
    %c0_i32_1 = arith.constant 0 : i32
    return %c0_i32, %arg0, %c0_i32_0 : i32, i32, i32
  }
  func.func @transform_1(%arg0: i32) -> (i32, i32) {
    %c0_i32 = arith.constant 0 : i32
    %c0_i32_0 = arith.constant 0 : i32
    %c0_i32_1 = arith.constant 0 : i32
    return %c0_i32, %c0_i32_0 : i32, i32
  }
  func.func @transform_2(%arg0: i32) -> (i32, i32) {
    %c0_i32 = arith.constant 0 : i32
    %c0_i32_0 = arith.constant 0 : i32
    %c0_i32_1 = arith.constant 0 : i32
    return %c0_i32, %c0_i32_0 : i32, i32
  }
  func.func @transform_3(%arg0: i32) -> (i32, i32) {
    %c0_i32 = arith.constant 0 : i32
    %c0_i32_0 = arith.constant 0 : i32
    return %arg0, %c0_i32 : i32, i32
  }
}

module attributes {stable_mosaic.version = 11 : i64} {
  func.func @_conv_pool_kernel(%arg0: i32, %arg1: memref<4x40x288xbf16, #tpu.memory_space<vmem>>, %arg2: memref<288x128xbf16, #tpu.memory_space<vmem>>, %arg3: memref<1x128xf32, #tpu.memory_space<vmem>>, %arg4: memref<40x128xbf16, #tpu.memory_space<vmem>>) attributes {dimension_semantics = [#tpu.dimension_semantics<parallel>], iteration_bounds = array<i64: 2>, scalar_prefetch = 0 : i64, scratch_operands = 0 : i64, tpu.core_type = #tpu.core_type<tc>, window_params = [{transform_indices = @transform_0, window_bounds = array<i64: 4, 40, 288>}, {pipeline_mode = #tpu.pipeline_mode<synchronous>, transform_indices = @transform_1, window_bounds = array<i64: 288, 128>}, {pipeline_mode = #tpu.pipeline_mode<synchronous>, transform_indices = @transform_2, window_bounds = array<i64: 1, 128>}, {transform_indices = @transform_3, window_bounds = array<i64: 40, 128>}]} {
    %c0 = arith.constant 0 : index
    %c0_0 = arith.constant 0 : index
    %0 = vector.load %arg2[%c0, %c0_0] : memref<288x128xbf16, #tpu.memory_space<vmem>>, vector<288x128xbf16>
    %c0_1 = arith.constant 0 : index
    %c0_2 = arith.constant 0 : index
    %c0_3 = arith.constant 0 : index
    %1 = vector.load %arg1[%c0_1, %c0_2, %c0_3] : memref<4x40x288xbf16, #tpu.memory_space<vmem>>, vector<1x40x288xbf16>
    %2 = vector.shape_cast %1 : vector<1x40x288xbf16> to vector<40x288xbf16>
    %3 = vector.extract_strided_slice %2 {offsets = [0, 0], sizes = [40, 256], strides = [1, 1]} : vector<40x288xbf16> to vector<40x256xbf16>
    %4 = vector.extract_strided_slice %0 {offsets = [0, 0], sizes = [256, 128], strides = [1, 1]} : vector<288x128xbf16> to vector<256x128xbf16>
    %cst = arith.constant dense<0.000000e+00> : vector<40x128xf32>
    %5 = tpu.matmul %3, %4, %cst {dimension_numbers = #tpu.dot_dimension_numbers<[1], [0], [0], [1], [0, 0, 1, 1], [], []>} : vector<40x256xbf16>, vector<256x128xbf16>, vector<40x128xf32> -> vector<40x128xf32>
    %6 = vector.extract_strided_slice %2 {offsets = [0, 256], sizes = [40, 32], strides = [1, 1]} : vector<40x288xbf16> to vector<40x32xbf16>
    %7 = vector.extract_strided_slice %0 {offsets = [256, 0], sizes = [32, 128], strides = [1, 1]} : vector<288x128xbf16> to vector<32x128xbf16>
    %cst_4 = arith.constant dense<0.000000e+00> : vector<40x128xf32>
    %8 = tpu.matmul %6, %7, %cst_4 {dimension_numbers = #tpu.dot_dimension_numbers<[1], [0], [0], [1], [0, 0, 1, 1], [], []>} : vector<40x32xbf16>, vector<32x128xbf16>, vector<40x128xf32> -> vector<40x128xf32>
    %9 = arith.addf %5, %8 : vector<40x128xf32>
    %c1 = arith.constant 1 : index
    %c0_5 = arith.constant 0 : index
    %c0_6 = arith.constant 0 : index
    %10 = vector.load %arg1[%c1, %c0_5, %c0_6] : memref<4x40x288xbf16, #tpu.memory_space<vmem>>, vector<1x40x288xbf16>
    %11 = vector.shape_cast %10 : vector<1x40x288xbf16> to vector<40x288xbf16>
    %12 = vector.extract_strided_slice %11 {offsets = [0, 0], sizes = [40, 256], strides = [1, 1]} : vector<40x288xbf16> to vector<40x256xbf16>
    %13 = vector.extract_strided_slice %0 {offsets = [0, 0], sizes = [256, 128], strides = [1, 1]} : vector<288x128xbf16> to vector<256x128xbf16>
    %cst_7 = arith.constant dense<0.000000e+00> : vector<40x128xf32>
    %14 = tpu.matmul %12, %13, %cst_7 {dimension_numbers = #tpu.dot_dimension_numbers<[1], [0], [0], [1], [0, 0, 1, 1], [], []>} : vector<40x256xbf16>, vector<256x128xbf16>, vector<40x128xf32> -> vector<40x128xf32>
    %15 = vector.extract_strided_slice %11 {offsets = [0, 256], sizes = [40, 32], strides = [1, 1]} : vector<40x288xbf16> to vector<40x32xbf16>
    %16 = vector.extract_strided_slice %0 {offsets = [256, 0], sizes = [32, 128], strides = [1, 1]} : vector<288x128xbf16> to vector<32x128xbf16>
    %cst_8 = arith.constant dense<0.000000e+00> : vector<40x128xf32>
    %17 = tpu.matmul %15, %16, %cst_8 {dimension_numbers = #tpu.dot_dimension_numbers<[1], [0], [0], [1], [0, 0, 1, 1], [], []>} : vector<40x32xbf16>, vector<32x128xbf16>, vector<40x128xf32> -> vector<40x128xf32>
    %18 = arith.addf %14, %17 : vector<40x128xf32>
    %19 = arith.maximumf %9, %18 : vector<40x128xf32>
    %c2 = arith.constant 2 : index
    %c0_9 = arith.constant 0 : index
    %c0_10 = arith.constant 0 : index
    %20 = vector.load %arg1[%c2, %c0_9, %c0_10] : memref<4x40x288xbf16, #tpu.memory_space<vmem>>, vector<1x40x288xbf16>
    %21 = vector.shape_cast %20 : vector<1x40x288xbf16> to vector<40x288xbf16>
    %22 = vector.extract_strided_slice %21 {offsets = [0, 0], sizes = [40, 256], strides = [1, 1]} : vector<40x288xbf16> to vector<40x256xbf16>
    %23 = vector.extract_strided_slice %0 {offsets = [0, 0], sizes = [256, 128], strides = [1, 1]} : vector<288x128xbf16> to vector<256x128xbf16>
    %cst_11 = arith.constant dense<0.000000e+00> : vector<40x128xf32>
    %24 = tpu.matmul %22, %23, %cst_11 {dimension_numbers = #tpu.dot_dimension_numbers<[1], [0], [0], [1], [0, 0, 1, 1], [], []>} : vector<40x256xbf16>, vector<256x128xbf16>, vector<40x128xf32> -> vector<40x128xf32>
    %25 = vector.extract_strided_slice %21 {offsets = [0, 256], sizes = [40, 32], strides = [1, 1]} : vector<40x288xbf16> to vector<40x32xbf16>
    %26 = vector.extract_strided_slice %0 {offsets = [256, 0], sizes = [32, 128], strides = [1, 1]} : vector<288x128xbf16> to vector<32x128xbf16>
    %cst_12 = arith.constant dense<0.000000e+00> : vector<40x128xf32>
    %27 = tpu.matmul %25, %26, %cst_12 {dimension_numbers = #tpu.dot_dimension_numbers<[1], [0], [0], [1], [0, 0, 1, 1], [], []>} : vector<40x32xbf16>, vector<32x128xbf16>, vector<40x128xf32> -> vector<40x128xf32>
    %28 = arith.addf %24, %27 : vector<40x128xf32>
    %29 = arith.maximumf %19, %28 : vector<40x128xf32>
    %c3 = arith.constant 3 : index
    %c0_13 = arith.constant 0 : index
    %c0_14 = arith.constant 0 : index
    %30 = vector.load %arg1[%c3, %c0_13, %c0_14] : memref<4x40x288xbf16, #tpu.memory_space<vmem>>, vector<1x40x288xbf16>
    %31 = vector.shape_cast %30 : vector<1x40x288xbf16> to vector<40x288xbf16>
    %32 = vector.extract_strided_slice %31 {offsets = [0, 0], sizes = [40, 256], strides = [1, 1]} : vector<40x288xbf16> to vector<40x256xbf16>
    %33 = vector.extract_strided_slice %0 {offsets = [0, 0], sizes = [256, 128], strides = [1, 1]} : vector<288x128xbf16> to vector<256x128xbf16>
    %cst_15 = arith.constant dense<0.000000e+00> : vector<40x128xf32>
    %34 = tpu.matmul %32, %33, %cst_15 {dimension_numbers = #tpu.dot_dimension_numbers<[1], [0], [0], [1], [0, 0, 1, 1], [], []>} : vector<40x256xbf16>, vector<256x128xbf16>, vector<40x128xf32> -> vector<40x128xf32>
    %35 = vector.extract_strided_slice %31 {offsets = [0, 256], sizes = [40, 32], strides = [1, 1]} : vector<40x288xbf16> to vector<40x32xbf16>
    %36 = vector.extract_strided_slice %0 {offsets = [256, 0], sizes = [32, 128], strides = [1, 1]} : vector<288x128xbf16> to vector<32x128xbf16>
    %cst_16 = arith.constant dense<0.000000e+00> : vector<40x128xf32>
    %37 = tpu.matmul %35, %36, %cst_16 {dimension_numbers = #tpu.dot_dimension_numbers<[1], [0], [0], [1], [0, 0, 1, 1], [], []>} : vector<40x32xbf16>, vector<32x128xbf16>, vector<40x128xf32> -> vector<40x128xf32>
    %38 = arith.addf %34, %37 : vector<40x128xf32>
    %39 = arith.maximumf %29, %38 : vector<40x128xf32>
    %c0_17 = arith.constant 0 : index
    %c0_18 = arith.constant 0 : index
    %40 = vector.load %arg3[%c0_17, %c0_18] : memref<1x128xf32, #tpu.memory_space<vmem>>, vector<1x128xf32>
    %41 = vector.broadcast %40 : vector<1x128xf32> to vector<40x128xf32>
    %42 = arith.addf %39, %41 : vector<40x128xf32>
    %cst_19 = arith.constant 0.000000e+00 : f32
    %43 = vector.broadcast %cst_19 : f32 to vector<40x128xf32>
    %44 = arith.maximumf %42, %43 : vector<40x128xf32>
    %45 = arith.truncf %44 : vector<40x128xf32> to vector<40x128xbf16>
    %c0_20 = arith.constant 0 : index
    %c0_21 = arith.constant 0 : index
    %46 = vector.load %arg4[%c0_20, %c0_21] : memref<40x128xbf16, #tpu.memory_space<vmem>>, vector<40x128xbf16>
    tpu.vector_store %arg4[%c0_20, %c0_21], %45 {strides = array<i32>} : memref<40x128xbf16, #tpu.memory_space<vmem>>, vector<40x128xbf16>,
    return
  }
  func.func @transform_0(%arg0: i32) -> (i32, i32, i32) {
    %c0_i32 = arith.constant 0 : i32
    %c0_i32_0 = arith.constant 0 : i32
    %c0_i32_1 = arith.constant 0 : i32
    return %c0_i32, %arg0, %c0_i32_0 : i32, i32, i32
  }
  func.func @transform_1(%arg0: i32) -> (i32, i32) {
    %c0_i32 = arith.constant 0 : i32
    %c0_i32_0 = arith.constant 0 : i32
    %c0_i32_1 = arith.constant 0 : i32
    return %c0_i32, %c0_i32_0 : i32, i32
  }
  func.func @transform_2(%arg0: i32) -> (i32, i32) {
    %c0_i32 = arith.constant 0 : i32
    %c0_i32_0 = arith.constant 0 : i32
    %c0_i32_1 = arith.constant 0 : i32
    return %c0_i32, %c0_i32_0 : i32, i32
  }
  func.func @transform_3(%arg0: i32) -> (i32, i32) {
    %c0_i32 = arith.constant 0 : i32
    %c0_i32_0 = arith.constant 0 : i32
    return %arg0, %c0_i32 : i32, i32
  }
}

module attributes {stable_mosaic.version = 11 : i64} {
  func.func @_fc_fused_kernel(%arg0: i32, %arg1: memref<2x2304xbf16, #tpu.memory_space<vmem>>, %arg2: memref<2304x128xbf16, #tpu.memory_space<vmem>>, %arg3: memref<1x128xf32, #tpu.memory_space<vmem>>, %arg4: memref<128x128xbf16, #tpu.memory_space<vmem>>, %arg5: memref<1x128xf32, #tpu.memory_space<vmem>>, %arg6: memref<2x128xf32, #tpu.memory_space<vmem>>) attributes {dimension_semantics = [#tpu.dimension_semantics<parallel>], iteration_bounds = array<i64: 1>, scalar_prefetch = 0 : i64, scratch_operands = 0 : i64, tpu.core_type = #tpu.core_type<tc>, window_params = [{transform_indices = @transform_0, window_bounds = array<i64: 2, 2304>}, {pipeline_mode = #tpu.pipeline_mode<synchronous>, transform_indices = @transform_1, window_bounds = array<i64: 2304, 128>}, {pipeline_mode = #tpu.pipeline_mode<synchronous>, transform_indices = @transform_2, window_bounds = array<i64: 1, 128>}, {pipeline_mode = #tpu.pipeline_mode<synchronous>, transform_indices = @transform_3, window_bounds = array<i64: 128, 128>}, {pipeline_mode = #tpu.pipeline_mode<synchronous>, transform_indices = @transform_4, window_bounds = array<i64: 1, 128>}, {transform_indices = @transform_5, window_bounds = array<i64: 2, 128>}]} {
    %c0 = arith.constant 0 : index
    %c0_0 = arith.constant 0 : index
    %0 = vector.load %arg1[%c0, %c0_0] : memref<2x2304xbf16, #tpu.memory_space<vmem>>, vector<2x2304xbf16>
    %c0_1 = arith.constant 0 : index
    %c0_2 = arith.constant 0 : index
    %1 = vector.load %arg2[%c0_1, %c0_2] : memref<2304x128xbf16, #tpu.memory_space<vmem>>, vector<2304x128xbf16>
    %cst = arith.constant dense<0.000000e+00> : vector<2x128xf32>
    %2 = tpu.matmul %0, %1, %cst {dimension_numbers = #tpu.dot_dimension_numbers<[1], [0], [0], [1], [0, 0, 1, 1], [], []>} : vector<2x2304xbf16>, vector<2304x128xbf16>, vector<2x128xf32> -> vector<2x128xf32>
    %c0_3 = arith.constant 0 : index
    %c0_4 = arith.constant 0 : index
    %3 = vector.load %arg3[%c0_3, %c0_4] : memref<1x128xf32, #tpu.memory_space<vmem>>, vector<1x128xf32>
    %4 = vector.broadcast %3 : vector<1x128xf32> to vector<2x128xf32>
    %5 = arith.addf %2, %4 : vector<2x128xf32>
    %cst_5 = arith.constant 0.000000e+00 : f32
    %6 = vector.broadcast %cst_5 : f32 to vector<2x128xf32>
    %7 = arith.maximumf %5, %6 : vector<2x128xf32>
    %8 = arith.truncf %7 : vector<2x128xf32> to vector<2x128xbf16>
    %c0_6 = arith.constant 0 : index
    %c0_7 = arith.constant 0 : index
    %9 = vector.load %arg4[%c0_6, %c0_7] : memref<128x128xbf16, #tpu.memory_space<vmem>>, vector<128x128xbf16>
    %cst_8 = arith.constant dense<0.000000e+00> : vector<2x128xf32>
    %10 = tpu.matmul %8, %9, %cst_8 {dimension_numbers = #tpu.dot_dimension_numbers<[1], [0], [0], [1], [0, 0, 1, 1], [], []>} : vector<2x128xbf16>, vector<128x128xbf16>, vector<2x128xf32> -> vector<2x128xf32>
    %c0_9 = arith.constant 0 : index
    %c0_10 = arith.constant 0 : index
    %11 = vector.load %arg5[%c0_9, %c0_10] : memref<1x128xf32, #tpu.memory_space<vmem>>, vector<1x128xf32>
    %12 = vector.broadcast %11 : vector<1x128xf32> to vector<2x128xf32>
    %13 = arith.addf %10, %12 : vector<2x128xf32>
    %c0_11 = arith.constant 0 : index
    %c0_12 = arith.constant 0 : index
    %14 = vector.load %arg6[%c0_11, %c0_12] : memref<2x128xf32, #tpu.memory_space<vmem>>, vector<2x128xf32>
    tpu.vector_store %arg6[%c0_11, %c0_12], %13 {strides = array<i32>} : memref<2x128xf32, #tpu.memory_space<vmem>>, vector<2x128xf32>,
    return
  }
  func.func @transform_0(%arg0: i32) -> (i32, i32) {
    %c0_i32 = arith.constant 0 : i32
    %c0_i32_0 = arith.constant 0 : i32
    return %arg0, %c0_i32 : i32, i32
  }
  func.func @transform_1(%arg0: i32) -> (i32, i32) {
    %c0_i32 = arith.constant 0 : i32
    %c0_i32_0 = arith.constant 0 : i32
    %c0_i32_1 = arith.constant 0 : i32
    return %c0_i32, %c0_i32_0 : i32, i32
  }
  func.func @transform_2(%arg0: i32) -> (i32, i32) {
    %c0_i32 = arith.constant 0 : i32
    %c0_i32_0 = arith.constant 0 : i32
    %c0_i32_1 = arith.constant 0 : i32
    return %c0_i32, %c0_i32_0 : i32, i32
  }
  func.func @transform_3(%arg0: i32) -> (i32, i32) {
    %c0_i32 = arith.constant 0 : i32
    %c0_i32_0 = arith.constant 0 : i32
    %c0_i32_1 = arith.constant 0 : i32
    return %c0_i32, %c0_i32_0 : i32, i32
  }
  func.func @transform_4(%arg0: i32) -> (i32, i32) {
    %c0_i32 = arith.constant 0 : i32
    %c0_i32_0 = arith.constant 0 : i32
    %c0_i32_1 = arith.constant 0 : i32
    return %c0_i32, %c0_i32_0 : i32, i32
  }
  func.func @transform_5(%arg0: i32) -> (i32, i32) {
    %c0_i32 = arith.constant 0 : i32
    %c0_i32_0 = arith.constant 0 : i32
    return %arg0, %c0_i32 : i32, i32
  }
}

</mosaic_0001>

<llo_original>
// kernel: simple_cnn_forward.3
$region0: #{simple_cnn_forward.3}
  #allocation0 [shape = 'u32[]', space=smem, size = 0x4, offset = 0x4, fixed_abs, tag = 'smem constant byte address 0x4 - core index']
  #allocation1 [shape = 'u32[144,128]{1,0:T(1,128)}', space=vmem, size = 0x12000, scoped, tag = 'internal scratch']
  %s0 = inlined_call_operand.vmem [shape: bf16[4,464,27], index: 0, kind: input, shape index: {}]
  %s1 = inlined_call_operand.vmem [shape: bf16[27,128], index: 1, kind: input, shape index: {}]
  %s2 = inlined_call_operand.vmem [shape: f32[1,128], index: 2, kind: input, shape index: {}]
  %s3 = inlined_call_operand.vmem [shape: bf16[464,128], index: 3, kind: output, shape index: {}]
  %s4 = sld [smem:[#allocation0]]
  $region86: #{simple_cnn_forward.3} parent=0
    _
  %s6 = ssub.s32 1, %s4
  %s7 = scalar_select 0, %s6, %s4
  $region1: #{simple_cnn_forward.3} parent=0
    #allocation2 [shape = 'u8[475136]{0}', space=vmem, size = 0x74000, scoped, tag = 'input window, operand 0']
    loop: start=0, step=1, limit=4
    $region2: #{simple_cnn_forward.3} parent=1 // loop_pre_header
      _
    $region3: #{simple_cnn_forward.3} parent=1 // loop_header
      %s9 = sphi 0, %s13
      %p10 = scmp.ge.s32.totalorder %s9, 4
      %s19 = sphi 0, %s21
      %s22 = sphi 0, %s19
      %s23 = sphi 0, %s22
      %s39 = sphi 0, %s23
      %s43 = sphi 0, %s43
      %s45 = sphi 0, %s43
      %s46 = sphi 0, %s45
      %s60 = sphi 0, %s46
      %s64 = sphi 0, %s64
      %s66 = sphi 0, %s64
      %s67 = sphi 0, %s66
      %s81 = sphi 0, %s67
      %s87 = sphi 0, %s89
      %s90 = sphi 0, %s87
      %s91 = sphi 0, %s90
      %s107 = sphi 0, %s91
    $region4: #{simple_cnn_forward.3} parent=1 // loop_header_branch
      %12 = sbr.rel (%p10) target = $region8
    $region5: #{simple_cnn_forward.3} parent=1 // loop_body
      %s14 = ssub.s32 %s9, 1
      %s15 = ssub.s32 %s9, 2
      %s16 = sadd.s32 %s9, 1
      %s17 = ssub.s32 %s9, %s16
      %p18 = scmp.eq.s32.totalorder %s17, 0
      %s20 = sadd.s32 %s19, 1
      %s21 = scalar_select %p18, %s19, %s20
      %p24 = pneg %p18
      %p25 = scmp.eq.s32.totalorder %s9, 1
      %p26 = por %p24, %p25
      %p27 = scmp.ne.s32.totalorder %s19, %s22
      %p28 = scmp.eq.s32.totalorder %s9, 0
      %p29 = por %p27, %p28
      %p30 = scmp.ne.s32.totalorder %s19, %s22
      %p31 = scmp.eq.s32.totalorder %s14, 1
      %p32 = por %p30, %p31
      %p33 = scmp.ne.s32.totalorder %s22, %s23
      %p34 = scmp.eq.s32.totalorder %s14, 0
      %p35 = por %p33, %p34
      %p36 = scmp.ne.s32.totalorder %s22, %s23
      %p37 = scmp.eq.s32.totalorder %s15, 1
      %p38 = por %p36, %p37
      %p40 = scmp.ne.s32.totalorder %s23, %s39
      %p41 = scmp.eq.s32.totalorder %s15, 0
      %p42 = por %p40, %p41
      %s44 = sadd.s32 %s43, 1
      %p47 = scmp.eq.s32.totalorder %s9, 1
      %p48 = scmp.ne.s32.totalorder %s43, %s45
      %p49 = scmp.eq.s32.totalorder %s9, 0
      %p50 = por %p48, %p49
      %p51 = scmp.ne.s32.totalorder %s43, %s45
      %p52 = scmp.eq.s32.totalorder %s14, 1
      %p53 = por %p51, %p52
      %p54 = scmp.ne.s32.totalorder %s45, %s46
      %p55 = scmp.eq.s32.totalorder %s14, 0
      %p56 = por %p54, %p55
      %p57 = scmp.ne.s32.totalorder %s45, %s46
      %p58 = scmp.eq.s32.totalorder %s15, 1
      %p59 = por %p57, %p58
      %p61 = scmp.ne.s32.totalorder %s46, %s60
      %p62 = scmp.eq.s32.totalorder %s15, 0
      %p63 = por %p61, %p62
      %s65 = sadd.s32 %s64, 1
      %p68 = scmp.eq.s32.totalorder %s9, 1
      %p69 = scmp.ne.s32.totalorder %s64, %s66
      %p70 = scmp.eq.s32.totalorder %s9, 0
      %p71 = por %p69, %p70
      %p72 = scmp.ne.s32.totalorder %s64, %s66
      %p73 = scmp.eq.s32.totalorder %s14, 1
      %p74 = por %p72, %p73
      %p75 = scmp.ne.s32.totalorder %s66, %s67
      %p76 = scmp.eq.s32.totalorder %s14, 0
      %p77 = por %p75, %p76
      %p78 = scmp.ne.s32.totalorder %s66, %s67
      %p79 = scmp.eq.s32.totalorder %s15, 1
      %p80 = por %p78, %p79
      %p82 = scmp.ne.s32.totalorder %s67, %s81
      %p83 = scmp.eq.s32.totalorder %s15, 0
      %p84 = por %p82, %p83
      %s85 = ssub.s32 %s9, %s16
      %p86 = scmp.eq.s32.totalorder %s85, 0
      %s88 = sadd.s32 %s87, 1
      %s89 = scalar_select %p86, %s87, %s88
      %p92 = pneg %p86
      %p93 = scmp.eq.s32.totalorder %s9, 1
      %p94 = por %p92, %p93
      %p95 = scmp.ne.s32.totalorder %s87, %s90
      %p96 = scmp.eq.s32.totalorder %s9, 0
      %p97 = por %p95, %p96
      %p98 = scmp.ne.s32.totalorder %s87, %s90
      %p99 = scmp.eq.s32.totalorder %s14, 1
      %p100 = por %p98, %p99
      %p101 = scmp.ne.s32.totalorder %s90, %s91
      %p102 = scmp.eq.s32.totalorder %s14, 0
      %p103 = por %p101, %p102
      %p104 = scmp.ne.s32.totalorder %s90, %s91
      %p105 = scmp.eq.s32.totalorder %s15, 1
      %p106 = por %p104, %p105
      %p108 = scmp.ne.s32.totalorder %s91, %s107
      %p109 = scmp.eq.s32.totalorder %s15, 0
      %p110 = por %p108, %p109
      %p111 = scmp.le.s32.totalorder 1, %s9
      %p112 = scmp.lt.s32.totalorder %s9, 3
      %p113 = pnand %p111, %p112
      %p114 = pneg %p113
      // Predicated region
      $region9: #{simple_cnn_forward.3} parent=5 // pred_check
        _
      $region10: #{simple_cnn_forward.3} parent=5 // pred_check_branch
        %116 = sbr.rel (%p113) target = $region12
      $region11: #{simple_cnn_forward.3} parent=5 // pred_region
        %s117 = ssub.s32 %s9, 1
        // Predicated region
        $region13: #{simple_cnn_forward.3} parent=11 // pred_check
          %p118 = pneg %p56
        $region14: #{simple_cnn_forward.3} parent=11 // pred_check_branch
          %120 = sbr.rel (%p118) target = $region16
        $region15: #{simple_cnn_forward.3} parent=11 // pred_region
          _
        $region16: #{simple_cnn_forward.3} parent=11 // pred_fallthru
          _
        // Predicated region
        $region17: #{simple_cnn_forward.3} parent=11 // pred_check
          %p121 = pneg %p77
        $region18: #{simple_cnn_forward.3} parent=11 // pred_check_branch
          %123 = sbr.rel (%p121) target = $region20
        $region19: #{simple_cnn_forward.3} parent=11 // pred_region
          _
        $region20: #{simple_cnn_forward.3} parent=11 // pred_fallthru
          _
      $region12: #{simple_cnn_forward.3} parent=5 // pred_fallthru
        _
      %p124 = scmp.lt.s32.totalorder %s9, 2
      // Predicated region
      $region21: #{simple_cnn_forward.3} parent=5 // pred_check
        %p125 = pneg %p124
      $region22: #{simple_cnn_forward.3} parent=5 // pred_check_branch
        %127 = sbr.rel (%p125) target = $region24
      $region23: #{simple_cnn_forward.3} parent=5 // pred_region
        // Predicated region
        $region25: #{simple_cnn_forward.3} parent=23 // pred_check
          %p128 = pneg %p29
        $region26: #{simple_cnn_forward.3} parent=23 // pred_check_branch
          %130 = sbr.rel (%p128) target = $region28
        $region27: #{simple_cnn_forward.3} parent=23 // pred_region
          %s131 = sand.u32 %s19, 1
          %s132 = sand.u32 %s19, 1
          %s133 = smul.addr %s132, 464
          %s134 = scalar_lea.vmem [#allocation2], %s133
          %s135 = smul.u32 29, %s9
          %s136 = smul.addr %s135, 4
          %s137 = scalar_lea.vmem %s0, %s136
          // Predicated region
          $region29: #{simple_cnn_forward.3} parent=27 // pred_check
            _
          $region30: #{simple_cnn_forward.3} parent=27 // pred_check_branch
            %139 = sbr.rel (0) target = $region32
          $region31: #{simple_cnn_forward.3} parent=27 // pred_region
            // Predicated region
            $region33: #{simple_cnn_forward.3} parent=31 // pred_check
              _
            $region34: #{simple_cnn_forward.3} parent=31 // pred_check_branch
              %141 = sbr.rel target = $region36
            $region35: #{simple_cnn_forward.3} parent=31 // pred_region
              // Predicated region
              $region48: #{simple_cnn_forward.3} parent=35 // pred_check
                _
              $region49: #{simple_cnn_forward.3} parent=35 // pred_check_branch
                %386 = sbr.rel (0) target = $region51
              $region50: #{simple_cnn_forward.3} parent=35 // pred_region
                loop: start=0, step=1, limit=1
                $region52: #{simple_cnn_forward.3} parent=50 // loop_pre_header
                  _
                $region53: #{simple_cnn_forward.3} parent=50 // loop_header
                  %s388 = sphi 0, %s392
                  %p389 = scmp.ge.s32.totalorder %s388, 1
                  %s393 = sphi %s137, %s137
                  %s394 = sphi %s134, %s134
                $region54: #{simple_cnn_forward.3} parent=50 // loop_header_branch
                  %391 = sbr.rel (%p389) target = $region58
                $region55: #{simple_cnn_forward.3} parent=50 // loop_body
                  _
                $region56: #{simple_cnn_forward.3} parent=50 // loop_footer
                  %s392 = sadd.s32 1, %s388
                $region57: #{simple_cnn_forward.3} parent=50 // loop_footer_branch
                  %387 = sbr.rel target = $region53
                $region58: #{simple_cnn_forward.3} parent=50 // loop_exit
                  _
                loop: start=0, step=1, limit=1
                $region59: #{simple_cnn_forward.3} parent=50 // loop_pre_header
                  _
                $region60: #{simple_cnn_forward.3} parent=50 // loop_header
                  %s397 = sphi 0, %s401
                  %p398 = scmp.ge.s32.totalorder %s397, 1
                  %s402 = sphi %s137, %s137
                  %s403 = sphi %s134, %s134
                $region61: #{simple_cnn_forward.3} parent=50 // loop_header_branch
                  %400 = sbr.rel (%p398) target = $region65
                $region62: #{simple_cnn_forward.3} parent=50 // loop_body
                  %v404 = vld [vmem:[%s402] sm:$0xf]
                  %405 = vst [vmem:[%s403] sm:$0xf] %v404
                  %v406 = vld [vmem:[%s402 + $0x4] sm:$0xf]
                  %407 = vst [vmem:[%s403 + $0x4] sm:$0xf] %v406
                  %v408 = vld [vmem:[%s402 + $0x8] sm:$0xf]
                  %409 = vst [vmem:[%s403 + $0x8] sm:$0xf] %v408
                  %v410 = vld [vmem:[%s402 + $0xc] sm:$0xf]
                  %411 = vst [vmem:[%s403 + $0xc] sm:$0xf] %v410
                  %v412 = vld [vmem:[%s402 + $0x10] sm:$0xf]
                  %413 = vst [vmem:[%s403 + $0x10] sm:$0xf] %v412
                  %v414 = vld [vmem:[%s402 + $0x14] sm:$0xf]
                  %415 = vst [vmem:[%s403 + $0x14] sm:$0xf] %v414
                  %v416 = vld [vmem:[%s402 + $0x18] sm:$0xf]
                  %417 = vst [vmem:[%s403 + $0x18] sm:$0xf] %v416
                  %v418 = vld [vmem:[%s402 + $0x1c] sm:$0xf]
                  %419 = vst [vmem:[%s403 + $0x1c] sm:$0xf] %v418
                  %v420 = vld [vmem:[%s402 + $0x20] sm:$0xf]
                  %421 = vst [vmem:[%s403 + $0x20] sm:$0xf] %v420
                  %v422 = vld [vmem:[%s402 + $0x24] sm:$0xf]
                  %423 = vst [vmem:[%s403 + $0x24] sm:$0xf] %v422
                  %v424 = vld [vmem:[%s402 + $0x28] sm:$0xf]
                  %425 = vst [vmem:[%s403 + $0x28] sm:$0xf] %v424
                  %v426 = vld [vmem:[%s402 + $0x2c] sm:$0xf]
                  %427 = vst [vmem:[%s403 + $0x2c] sm:$0xf] %v426
                  %v428 = vld [vmem:[%s402 + $0x30] sm:$0xf]
                  %429 = vst [vmem:[%s403 + $0x30] sm:$0xf] %v428
                  %v430 = vld [vmem:[%s402 + $0x34] sm:$0xf]
                  %431 = vst [vmem:[%s403 + $0x34] sm:$0xf] %v430
                  %v432 = vld [vmem:[%s402 + $0x38] sm:$0xf]
                  %433 = vst [vmem:[%s403 + $0x38] sm:$0xf] %v432
                  %v434 = vld [vmem:[%s402 + $0x3c] sm:$0xf]
                  %435 = vst [vmem:[%s403 + $0x3c] sm:$0xf] %v434
                  %v436 = vld [vmem:[%s402 + $0x40] sm:$0xf]
                  %437 = vst [vmem:[%s403 + $0x40] sm:$0xf] %v436
                  %v438 = vld [vmem:[%s402 + $0x44] sm:$0xf]
                  %439 = vst [vmem:[%s403 + $0x44] sm:$0xf] %v438
                  %v440 = vld [vmem:[%s402 + $0x48] sm:$0xf]
                  %441 = vst [vmem:[%s403 + $0x48] sm:$0xf] %v440
                  %v442 = vld [vmem:[%s402 + $0x4c] sm:$0xf]
                  %443 = vst [vmem:[%s403 + $0x4c] sm:$0xf] %v442
                  %v444 = vld [vmem:[%s402 + $0x50] sm:$0xf]
                  %445 = vst [vmem:[%s403 + $0x50] sm:$0xf] %v444
                  %v446 = vld [vmem:[%s402 + $0x54] sm:$0xf]
                  %447 = vst [vmem:[%s403 + $0x54] sm:$0xf] %v446
                  %v448 = vld [vmem:[%s402 + $0x58] sm:$0xf]
                  %449 = vst [vmem:[%s403 + $0x58] sm:$0xf] %v448
                  %v450 = vld [vmem:[%s402 + $0x5c] sm:$0xf]
                  %451 = vst [vmem:[%s403 + $0x5c] sm:$0xf] %v450
                  %v452 = vld [vmem:[%s402 + $0x60] sm:$0xf]
                  %453 = vst [vmem:[%s403 + $0x60] sm:$0xf] %v452
                  %v454 = vld [vmem:[%s402 + $0x64] sm:$0xf]
                  %455 = vst [vmem:[%s403 + $0x64] sm:$0xf] %v454
                  %v456 = vld [vmem:[%s402 + $0x68] sm:$0xf]
                  %457 = vst [vmem:[%s403 + $0x68] sm:$0xf] %v456
                  %v458 = vld [vmem:[%s402 + $0x6c] sm:$0xf]
                  %459 = vst [vmem:[%s403 + $0x6c] sm:$0xf] %v458
                  %v460 = vld [vmem:[%s402 + $0x70] sm:$0xf]
                  %461 = vst [vmem:[%s403 + $0x70] sm:$0xf] %v460
                  %v462 = vld [vmem:[%s402 + $0xe8] sm:$0xf]
                  %463 = vst [vmem:[%s403 + $0x74] sm:$0xf] %v462
                  %v464 = vld [vmem:[%s402 + $0xec] sm:$0xf]
                  %465 = vst [vmem:[%s403 + $0x78] sm:$0xf] %v464
                  %v466 = vld [vmem:[%s402 + $0xf0] sm:$0xf]
                  %467 = vst [vmem:[%s403 + $0x7c] sm:$0xf] %v466
                  %v468 = vld [vmem:[%s402 + $0xf4] sm:$0xf]
                  %469 = vst [vmem:[%s403 + $0x80] sm:$0xf] %v468
                  %v470 = vld [vmem:[%s402 + $0xf8] sm:$0xf]
                  %471 = vst [vmem:[%s403 + $0x84] sm:$0xf] %v470
                  %v472 = vld [vmem:[%s402 + $0xfc] sm:$0xf]
                  %473 = vst [vmem:[%s403 + $0x88] sm:$0xf] %v472
                  %v474 = vld [vmem:[%s402 + $0x100] sm:$0xf]
                  %475 = vst [vmem:[%s403 + $0x8c] sm:$0xf] %v474
                  %v476 = vld [vmem:[%s402 + $0x104] sm:$0xf]
                  %477 = vst [vmem:[%s403 + $0x90] sm:$0xf] %v476
                  %v478 = vld [vmem:[%s402 + $0x108] sm:$0xf]
                  %479 = vst [vmem:[%s403 + $0x94] sm:$0xf] %v478
                  %v480 = vld [vmem:[%s402 + $0x10c] sm:$0xf]
                  %481 = vst [vmem:[%s403 + $0x98] sm:$0xf] %v480
                  %v482 = vld [vmem:[%s402 + $0x110] sm:$0xf]
                  %483 = vst [vmem:[%s403 + $0x9c] sm:$0xf] %v482
                  %v484 = vld [vmem:[%s402 + $0x114] sm:$0xf]
                  %485 = vst [vmem:[%s403 + $0xa0] sm:$0xf] %v484
                  %v486 = vld [vmem:[%s402 + $0x118] sm:$0xf]
                  %487 = vst [vmem:[%s403 + $0xa4] sm:$0xf] %v486
                  %v488 = vld [vmem:[%s402 + $0x11c] sm:$0xf]
                  %489 = vst [vmem:[%s403 + $0xa8] sm:$0xf] %v488
                  %v490 = vld [vmem:[%s402 + $0x120] sm:$0xf]
                  %491 = vst [vmem:[%s403 + $0xac] sm:$0xf] %v490
                  %v492 = vld [vmem:[%s402 + $0x124] sm:$0xf]
                  %493 = vst [vmem:[%s403 + $0xb0] sm:$0xf] %v492
                  %v494 = vld [vmem:[%s402 + $0x128] sm:$0xf]
                  %495 = vst [vmem:[%s403 + $0xb4] sm:$0xf] %v494
                  %v496 = vld [vmem:[%s402 + $0x12c] sm:$0xf]
                  %497 = vst [vmem:[%s403 + $0xb8] sm:$0xf] %v496
                  %v498 = vld [vmem:[%s402 + $0x130] sm:$0xf]
                  %499 = vst [vmem:[%s403 + $0xbc] sm:$0xf] %v498
                  %v500 = vld [vmem:[%s402 + $0x134] sm:$0xf]
                  %501 = vst [vmem:[%s403 + $0xc0] sm:$0xf] %v500
                  %v502 = vld [vmem:[%s402 + $0x138] sm:$0xf]
                  %503 = vst [vmem:[%s403 + $0xc4] sm:$0xf] %v502
                  %v504 = vld [vmem:[%s402 + $0x13c] sm:$0xf]
                  %505 = vst [vmem:[%s403 + $0xc8] sm:$0xf] %v504
                  %v506 = vld [vmem:[%s402 + $0x140] sm:$0xf]
                  %507 = vst [vmem:[%s403 + $0xcc] sm:$0xf] %v506
                  %v508 = vld [vmem:[%s402 + $0x144] sm:$0xf]
                  %509 = vst [vmem:[%s403 + $0xd0] sm:$0xf] %v508
                  %v510 = vld [vmem:[%s402 + $0x148] sm:$0xf]
                  %511 = vst [vmem:[%s403 + $0xd4] sm:$0xf] %v510
                  %v512 = vld [vmem:[%s402 + $0x14c] sm:$0xf]
                  %513 = vst [vmem:[%s403 + $0xd8] sm:$0xf] %v512
                  %v514 = vld [vmem:[%s402 + $0x150] sm:$0xf]
                  %515 = vst [vmem:[%s403 + $0xdc] sm:$0xf] %v514
                  %v516 = vld [vmem:[%s402 + $0x154] sm:$0xf]
                  %517 = vst [vmem:[%s403 + $0xe0] sm:$0xf] %v516
                  %v518 = vld [vmem:[%s402 + $0x158] sm:$0xf]
                  %519 = vst [vmem:[%s403 + $0xe4] sm:$0xf] %v518
                  %v520 = vld [vmem:[%s402 + $0x1d0] sm:$0xf]
                  %521 = vst [vmem:[%s403 + $0xe8] sm:$0xf] %v520
                  %v522 = vld [vmem:[%s402 + $0x1d4] sm:$0xf]
                  %523 = vst [vmem:[%s403 + $0xec] sm:$0xf] %v522
                  %v524 = vld [vmem:[%s402 + $0x1d8] sm:$0xf]
                  %525 = vst [vmem:[%s403 + $0xf0] sm:$0xf] %v524
                  %v526 = vld [vmem:[%s402 + $0x1dc] sm:$0xf]
                  %527 = vst [vmem:[%s403 + $0xf4] sm:$0xf] %v526
                  %v528 = vld [vmem:[%s402 + $0x1e0] sm:$0xf]
                  %529 = vst [vmem:[%s403 + $0xf8] sm:$0xf] %v528
                  %v530 = vld [vmem:[%s402 + $0x1e4] sm:$0xf]
                  %531 = vst [vmem:[%s403 + $0xfc] sm:$0xf] %v530
                  %v532 = vld [vmem:[%s402 + $0x1e8] sm:$0xf]
                  %533 = vst [vmem:[%s403 + $0x100] sm:$0xf] %v532
                  %v534 = vld [vmem:[%s402 + $0x1ec] sm:$0xf]
                  %535 = vst [vmem:[%s403 + $0x104] sm:$0xf] %v534
                  %v536 = vld [vmem:[%s402 + $0x1f0] sm:$0xf]
                  %537 = vst [vmem:[%s403 + $0x108] sm:$0xf] %v536
                  %v538 = vld [vmem:[%s402 + $0x1f4] sm:$0xf]
                  %539 = vst [vmem:[%s403 + $0x10c] sm:$0xf] %v538
                  %v540 = vld [vmem:[%s402 + $0x1f8] sm:$0xf]
                  %541 = vst [vmem:[%s403 + $0x110] sm:$0xf] %v540
                  %v542 = vld [vmem:[%s402 + $0x1fc] sm:$0xf]
                  %543 = vst [vmem:[%s403 + $0x114] sm:$0xf] %v542
                  %v544 = vld [vmem:[%s402 + $0x200] sm:$0xf]
                  %545 = vst [vmem:[%s403 + $0x118] sm:$0xf] %v544
                  %v546 = vld [vmem:[%s402 + $0x204] sm:$0xf]
                  %547 = vst [vmem:[%s403 + $0x11c] sm:$0xf] %v546
                  %v548 = vld [vmem:[%s402 + $0x208] sm:$0xf]
                  %549 = vst [vmem:[%s403 + $0x120] sm:$0xf] %v548
                  %v550 = vld [vmem:[%s402 + $0x20c] sm:$0xf]
                  %551 = vst [vmem:[%s403 + $0x124] sm:$0xf] %v550
                  %v552 = vld [vmem:[%s402 + $0x210] sm:$0xf]
                  %553 = vst [vmem:[%s403 + $0x128] sm:$0xf] %v552
                  %v554 = vld [vmem:[%s402 + $0x214] sm:$0xf]
                  %555 = vst [vmem:[%s403 + $0x12c] sm:$0xf] %v554
                  %v556 = vld [vmem:[%s402 + $0x218] sm:$0xf]
                  %557 = vst [vmem:[%s403 + $0x130] sm:$0xf] %v556
                  %v558 = vld [vmem:[%s402 + $0x21c] sm:$0xf]
                  %559 = vst [vmem:[%s403 + $0x134] sm:$0xf] %v558
                  %v560 = vld [vmem:[%s402 + $0x220] sm:$0xf]
                  %561 = vst [vmem:[%s403 + $0x138] sm:$0xf] %v560
                  %v562 = vld [vmem:[%s402 + $0x224] sm:$0xf]
                  %563 = vst [vmem:[%s403 + $0x13c] sm:$0xf] %v562
                  %v564 = vld [vmem:[%s402 + $0x228] sm:$0xf]
                  %565 = vst [vmem:[%s403 + $0x140] sm:$0xf] %v564
                  %v566 = vld [vmem:[%s402 + $0x22c] sm:$0xf]
                  %567 = vst [vmem:[%s403 + $0x144] sm:$0xf] %v566
                  %v568 = vld [vmem:[%s402 + $0x230] sm:$0xf]
                  %569 = vst [vmem:[%s403 + $0x148] sm:$0xf] %v568
                  %v570 = vld [vmem:[%s402 + $0x234] sm:$0xf]
                  %571 = vst [vmem:[%s403 + $0x14c] sm:$0xf] %v570
                  %v572 = vld [vmem:[%s402 + $0x238] sm:$0xf]
                  %573 = vst [vmem:[%s403 + $0x150] sm:$0xf] %v572
                  %v574 = vld [vmem:[%s402 + $0x23c] sm:$0xf]
                  %575 = vst [vmem:[%s403 + $0x154] sm:$0xf] %v574
                  %v576 = vld [vmem:[%s402 + $0x240] sm:$0xf]
                  %577 = vst [vmem:[%s403 + $0x158] sm:$0xf] %v576
                  %v578 = vld [vmem:[%s402 + $0x2b8] sm:$0xf]
                  %579 = vst [vmem:[%s403 + $0x15c] sm:$0xf] %v578
                  %v580 = vld [vmem:[%s402 + $0x2bc] sm:$0xf]
                  %581 = vst [vmem:[%s403 + $0x160] sm:$0xf] %v580
                  %v582 = vld [vmem:[%s402 + $0x2c0] sm:$0xf]
                  %583 = vst [vmem:[%s403 + $0x164] sm:$0xf] %v582
                  %v584 = vld [vmem:[%s402 + $0x2c4] sm:$0xf]
                  %585 = vst [vmem:[%s403 + $0x168] sm:$0xf] %v584
                  %v586 = vld [vmem:[%s402 + $0x2c8] sm:$0xf]
                  %587 = vst [vmem:[%s403 + $0x16c] sm:$0xf] %v586
                  %v588 = vld [vmem:[%s402 + $0x2cc] sm:$0xf]
                  %589 = vst [vmem:[%s403 + $0x170] sm:$0xf] %v588
                  %v590 = vld [vmem:[%s402 + $0x2d0] sm:$0xf]
                  %591 = vst [vmem:[%s403 + $0x174] sm:$0xf] %v590
                  %v592 = vld [vmem:[%s402 + $0x2d4] sm:$0xf]
                  %593 = vst [vmem:[%s403 + $0x178] sm:$0xf] %v592
                  %v594 = vld [vmem:[%s402 + $0x2d8] sm:$0xf]
                  %595 = vst [vmem:[%s403 + $0x17c] sm:$0xf] %v594
                  %v596 = vld [vmem:[%s402 + $0x2dc] sm:$0xf]
                  %597 = vst [vmem:[%s403 + $0x180] sm:$0xf] %v596
                  %v598 = vld [vmem:[%s402 + $0x2e0] sm:$0xf]
                  %599 = vst [vmem:[%s403 + $0x184] sm:$0xf] %v598
                  %v600 = vld [vmem:[%s402 + $0x2e4] sm:$0xf]
                  %601 = vst [vmem:[%s403 + $0x188] sm:$0xf] %v600
                  %v602 = vld [vmem:[%s402 + $0x2e8] sm:$0xf]
                  %603 = vst [vmem:[%s403 + $0x18c] sm:$0xf] %v602
                  %v604 = vld [vmem:[%s402 + $0x2ec] sm:$0xf]
                  %605 = vst [vmem:[%s403 + $0x190] sm:$0xf] %v604
                  %v606 = vld [vmem:[%s402 + $0x2f0] sm:$0xf]
                  %607 = vst [vmem:[%s403 + $0x194] sm:$0xf] %v606
                  %v608 = vld [vmem:[%s402 + $0x2f4] sm:$0xf]
                  %609 = vst [vmem:[%s403 + $0x198] sm:$0xf] %v608
                  %v610 = vld [vmem:[%s402 + $0x2f8] sm:$0xf]
                  %611 = vst [vmem:[%s403 + $0x19c] sm:$0xf] %v610
                  %v612 = vld [vmem:[%s402 + $0x2fc] sm:$0xf]
                  %613 = vst [vmem:[%s403 + $0x1a0] sm:$0xf] %v612
                  %v614 = vld [vmem:[%s402 + $0x300] sm:$0xf]
                  %615 = vst [vmem:[%s403 + $0x1a4] sm:$0xf] %v614
                  %v616 = vld [vmem:[%s402 + $0x304] sm:$0xf]
                  %617 = vst [vmem:[%s403 + $0x1a8] sm:$0xf] %v616
                  %v618 = vld [vmem:[%s402 + $0x308] sm:$0xf]
                  %619 = vst [vmem:[%s403 + $0x1ac] sm:$0xf] %v618
                  %v620 = vld [vmem:[%s402 + $0x30c] sm:$0xf]
                  %621 = vst [vmem:[%s403 + $0x1b0] sm:$0xf] %v620
                  %v622 = vld [vmem:[%s402 + $0x310] sm:$0xf]
                  %623 = vst [vmem:[%s403 + $0x1b4] sm:$0xf] %v622
                  %v624 = vld [vmem:[%s402 + $0x314] sm:$0xf]
                  %625 = vst [vmem:[%s403 + $0x1b8] sm:$0xf] %v624
                  %v626 = vld [vmem:[%s402 + $0x318] sm:$0xf]
                  %627 = vst [vmem:[%s403 + $0x1bc] sm:$0xf] %v626
                  %v628 = vld [vmem:[%s402 + $0x31c] sm:$0xf]
                  %629 = vst [vmem:[%s403 + $0x1c0] sm:$0xf] %v628
                  %v630 = vld [vmem:[%s402 + $0x320] sm:$0xf]
                  %631 = vst [vmem:[%s403 + $0x1c4] sm:$0xf] %v630
                  %v632 = vld [vmem:[%s402 + $0x324] sm:$0xf]
                  %633 = vst [vmem:[%s403 + $0x1c8] sm:$0xf] %v632
                  %v634 = vld [vmem:[%s402 + $0x328] sm:$0xf]
                  %635 = vst [vmem:[%s403 + $0x1cc] sm:$0xf] %v634
                $region63: #{simple_cnn_forward.3} parent=50 // loop_footer
                  %s401 = sadd.s32 1, %s397
                $region64: #{simple_cnn_forward.3} parent=50 // loop_footer_branch
                  %396 = sbr.rel target = $region60
                $region65: #{simple_cnn_forward.3} parent=50 // loop_exit
                  _
              $region51: #{simple_cnn_forward.3} parent=35 // pred_fallthru
                _
            $region36: #{simple_cnn_forward.3} parent=31 // pred_fallthru
              _
            // Predicated region
            $region37: #{simple_cnn_forward.3} parent=31 // pred_check
              _
            $region38: #{simple_cnn_forward.3} parent=31 // pred_check_branch
              %143 = sbr.rel (0) target = $region40
            $region39: #{simple_cnn_forward.3} parent=31 // pred_region
              loop: start=0, step=1, limit=1
              $region41: #{simple_cnn_forward.3} parent=39 // loop_pre_header
                _
              $region42: #{simple_cnn_forward.3} parent=39 // loop_header
                %s146 = sphi 0, %s150
                %p147 = scmp.ge.s32.totalorder %s146, 1
                %s151 = sphi %s137, %s137
                %s152 = sphi %s134, %s134
              $region43: #{simple_cnn_forward.3} parent=39 // loop_header_branch
                %149 = sbr.rel (%p147) target = $region47
              $region44: #{simple_cnn_forward.3} parent=39 // loop_body
                %v153 = vld [vmem:[%s151] sm:$0xf]
                %154 = vst [vmem:[%s152] sm:$0xf] %v153
                %v155 = vld [vmem:[%s151 + $0x4] sm:$0xf]
                %156 = vst [vmem:[%s152 + $0x4] sm:$0xf] %v155
                %v157 = vld [vmem:[%s151 + $0x8] sm:$0xf]
                %158 = vst [vmem:[%s152 + $0x8] sm:$0xf] %v157
                %v159 = vld [vmem:[%s151 + $0xc] sm:$0xf]
                %160 = vst [vmem:[%s152 + $0xc] sm:$0xf] %v159
                %v161 = vld [vmem:[%s151 + $0x10] sm:$0xf]
                %162 = vst [vmem:[%s152 + $0x10] sm:$0xf] %v161
                %v163 = vld [vmem:[%s151 + $0x14] sm:$0xf]
                %164 = vst [vmem:[%s152 + $0x14] sm:$0xf] %v163
                %v165 = vld [vmem:[%s151 + $0x18] sm:$0xf]
                %166 = vst [vmem:[%s152 + $0x18] sm:$0xf] %v165
                %v167 = vld [vmem:[%s151 + $0x1c] sm:$0xf]
                %168 = vst [vmem:[%s152 + $0x1c] sm:$0xf] %v167
                %v169 = vld [vmem:[%s151 + $0x20] sm:$0xf]
                %170 = vst [vmem:[%s152 + $0x20] sm:$0xf] %v169
                %v171 = vld [vmem:[%s151 + $0x24] sm:$0xf]
                %172 = vst [vmem:[%s152 + $0x24] sm:$0xf] %v171
                %v173 = vld [vmem:[%s151 + $0x28] sm:$0xf]
                %174 = vst [vmem:[%s152 + $0x28] sm:$0xf] %v173
                %v175 = vld [vmem:[%s151 + $0x2c] sm:$0xf]
                %176 = vst [vmem:[%s152 + $0x2c] sm:$0xf] %v175
                %v177 = vld [vmem:[%s151 + $0x30] sm:$0xf]
                %178 = vst [vmem:[%s152 + $0x30] sm:$0xf] %v177
                %v179 = vld [vmem:[%s151 + $0x34] sm:$0xf]
                %180 = vst [vmem:[%s152 + $0x34] sm:$0xf] %v179
                %v181 = vld [vmem:[%s151 + $0x38] sm:$0xf]
                %182 = vst [vmem:[%s152 + $0x38] sm:$0xf] %v181
                %v183 = vld [vmem:[%s151 + $0x3c] sm:$0xf]
                %184 = vst [vmem:[%s152 + $0x3c] sm:$0xf] %v183
                %v185 = vld [vmem:[%s151 + $0x40] sm:$0xf]
                %186 = vst [vmem:[%s152 + $0x40] sm:$0xf] %v185
                %v187 = vld [vmem:[%s151 + $0x44] sm:$0xf]
                %188 = vst [vmem:[%s152 + $0x44] sm:$0xf] %v187
                %v189 = vld [vmem:[%s151 + $0x48] sm:$0xf]
                %190 = vst [vmem:[%s152 + $0x48] sm:$0xf] %v189
                %v191 = vld [vmem:[%s151 + $0x4c] sm:$0xf]
                %192 = vst [vmem:[%s152 + $0x4c] sm:$0xf] %v191
                %v193 = vld [vmem:[%s151 + $0x50] sm:$0xf]
                %194 = vst [vmem:[%s152 + $0x50] sm:$0xf] %v193
                %v195 = vld [vmem:[%s151 + $0x54] sm:$0xf]
                %196 = vst [vmem:[%s152 + $0x54] sm:$0xf] %v195
                %v197 = vld [vmem:[%s151 + $0x58] sm:$0xf]
                %198 = vst [vmem:[%s152 + $0x58] sm:$0xf] %v197
                %v199 = vld [vmem:[%s151 + $0x5c] sm:$0xf]
                %200 = vst [vmem:[%s152 + $0x5c] sm:$0xf] %v199
                %v201 = vld [vmem:[%s151 + $0x60] sm:$0xf]
                %202 = vst [vmem:[%s152 + $0x60] sm:$0xf] %v201
                %v203 = vld [vmem:[%s151 + $0x64] sm:$0xf]
                %204 = vst [vmem:[%s152 + $0x64] sm:$0xf] %v203
                %v205 = vld [vmem:[%s151 + $0x68] sm:$0xf]
                %206 = vst [vmem:[%s152 + $0x68] sm:$0xf] %v205
                %v207 = vld [vmem:[%s151 + $0x6c] sm:$0xf]
                %208 = vst [vmem:[%s152 + $0x6c] sm:$0xf] %v207
                %v209 = vld [vmem:[%s151 + $0x70] sm:$0xf]
                %210 = vst [vmem:[%s152 + $0x70] sm:$0xf] %v209
                %v211 = vld [vmem:[%s151 + $0xe8] sm:$0xf]
                %212 = vst [vmem:[%s152 + $0x74] sm:$0xf] %v211
                %v213 = vld [vmem:[%s151 + $0xec] sm:$0xf]
                %214 = vst [vmem:[%s152 + $0x78] sm:$0xf] %v213
                %v215 = vld [vmem:[%s151 + $0xf0] sm:$0xf]
                %216 = vst [vmem:[%s152 + $0x7c] sm:$0xf] %v215
                %v217 = vld [vmem:[%s151 + $0xf4] sm:$0xf]
                %218 = vst [vmem:[%s152 + $0x80] sm:$0xf] %v217
                %v219 = vld [vmem:[%s151 + $0xf8] sm:$0xf]
                %220 = vst [vmem:[%s152 + $0x84] sm:$0xf] %v219
                %v221 = vld [vmem:[%s151 + $0xfc] sm:$0xf]
                %222 = vst [vmem:[%s152 + $0x88] sm:$0xf] %v221
                %v223 = vld [vmem:[%s151 + $0x100] sm:$0xf]
                %224 = vst [vmem:[%s152 + $0x8c] sm:$0xf] %v223
                %v225 = vld [vmem:[%s151 + $0x104] sm:$0xf]
                %226 = vst [vmem:[%s152 + $0x90] sm:$0xf] %v225
                %v227 = vld [vmem:[%s151 + $0x108] sm:$0xf]
                %228 = vst [vmem:[%s152 + $0x94] sm:$0xf] %v227
                %v229 = vld [vmem:[%s151 + $0x10c] sm:$0xf]
                %230 = vst [vmem:[%s152 + $0x98] sm:$0xf] %v229
                %v231 = vld [vmem:[%s151 + $0x110] sm:$0xf]
                %232 = vst [vmem:[%s152 + $0x9c] sm:$0xf] %v231
                %v233 = vld [vmem:[%s151 + $0x114] sm:$0xf]
                %234 = vst [vmem:[%s152 + $0xa0] sm:$0xf] %v233
                %v235 = vld [vmem:[%s151 + $0x118] sm:$0xf]
                %236 = vst [vmem:[%s152 + $0xa4] sm:$0xf] %v235
                %v237 = vld [vmem:[%s151 + $0x11c] sm:$0xf]
                %238 = vst [vmem:[%s152 + $0xa8] sm:$0xf] %v237
                %v239 = vld [vmem:[%s151 + $0x120] sm:$0xf]
                %240 = vst [vmem:[%s152 + $0xac] sm:$0xf] %v239
                %v241 = vld [vmem:[%s151 + $0x124] sm:$0xf]
                %242 = vst [vmem:[%s152 + $0xb0] sm:$0xf] %v241
                %v243 = vld [vmem:[%s151 + $0x128] sm:$0xf]
                %244 = vst [vmem:[%s152 + $0xb4] sm:$0xf] %v243
                %v245 = vld [vmem:[%s151 + $0x12c] sm:$0xf]
                %246 = vst [vmem:[%s152 + $0xb8] sm:$0xf] %v245
                %v247 = vld [vmem:[%s151 + $0x130] sm:$0xf]
                %248 = vst [vmem:[%s152 + $0xbc] sm:$0xf] %v247
                %v249 = vld [vmem:[%s151 + $0x134] sm:$0xf]
                %250 = vst [vmem:[%s152 + $0xc0] sm:$0xf] %v249
                %v251 = vld [vmem:[%s151 + $0x138] sm:$0xf]
                %252 = vst [vmem:[%s152 + $0xc4] sm:$0xf] %v251
                %v253 = vld [vmem:[%s151 + $0x13c] sm:$0xf]
                %254 = vst [vmem:[%s152 + $0xc8] sm:$0xf] %v253
                %v255 = vld [vmem:[%s151 + $0x140] sm:$0xf]
                %256 = vst [vmem:[%s152 + $0xcc] sm:$0xf] %v255
                %v257 = vld [vmem:[%s151 + $0x144] sm:$0xf]
                %258 = vst [vmem:[%s152 + $0xd0] sm:$0xf] %v257
                %v259 = vld [vmem:[%s151 + $0x148] sm:$0xf]
                %260 = vst [vmem:[%s152 + $0xd4] sm:$0xf] %v259
                %v261 = vld [vmem:[%s151 + $0x14c] sm:$0xf]
                %262 = vst [vmem:[%s152 + $0xd8] sm:$0xf] %v261
                %v263 = vld [vmem:[%s151 + $0x150] sm:$0xf]
                %264 = vst [vmem:[%s152 + $0xdc] sm:$0xf] %v263
                %v265 = vld [vmem:[%s151 + $0x154] sm:$0xf]
                %266 = vst [vmem:[%s152 + $0xe0] sm:$0xf] %v265
                %v267 = vld [vmem:[%s151 + $0x158] sm:$0xf]
                %268 = vst [vmem:[%s152 + $0xe4] sm:$0xf] %v267
                %v269 = vld [vmem:[%s151 + $0x1d0] sm:$0xf]
                %270 = vst [vmem:[%s152 + $0xe8] sm:$0xf] %v269
                %v271 = vld [vmem:[%s151 + $0x1d4] sm:$0xf]
                %272 = vst [vmem:[%s152 + $0xec] sm:$0xf] %v271
                %v273 = vld [vmem:[%s151 + $0x1d8] sm:$0xf]
                %274 = vst [vmem:[%s152 + $0xf0] sm:$0xf] %v273
                %v275 = vld [vmem:[%s151 + $0x1dc] sm:$0xf]
                %276 = vst [vmem:[%s152 + $0xf4] sm:$0xf] %v275
                %v277 = vld [vmem:[%s151 + $0x1e0] sm:$0xf]
                %278 = vst [vmem:[%s152 + $0xf8] sm:$0xf] %v277
                %v279 = vld [vmem:[%s151 + $0x1e4] sm:$0xf]
                %280 = vst [vmem:[%s152 + $0xfc] sm:$0xf] %v279
                %v281 = vld [vmem:[%s151 + $0x1e8] sm:$0xf]
                %282 = vst [vmem:[%s152 + $0x100] sm:$0xf] %v281
                %v283 = vld [vmem:[%s151 + $0x1ec] sm:$0xf]
                %284 = vst [vmem:[%s152 + $0x104] sm:$0xf] %v283
                %v285 = vld [vmem:[%s151 + $0x1f0] sm:$0xf]
                %286 = vst [vmem:[%s152 + $0x108] sm:$0xf] %v285
                %v287 = vld [vmem:[%s151 + $0x1f4] sm:$0xf]
                %288 = vst [vmem:[%s152 + $0x10c] sm:$0xf] %v287
                %v289 = vld [vmem:[%s151 + $0x1f8] sm:$0xf]
                %290 = vst [vmem:[%s152 + $0x110] sm:$0xf] %v289
                %v291 = vld [vmem:[%s151 + $0x1fc] sm:$0xf]
                %292 = vst [vmem:[%s152 + $0x114] sm:$0xf] %v291
                %v293 = vld [vmem:[%s151 + $0x200] sm:$0xf]
                %294 = vst [vmem:[%s152 + $0x118] sm:$0xf] %v293
                %v295 = vld [vmem:[%s151 + $0x204] sm:$0xf]
                %296 = vst [vmem:[%s152 + $0x11c] sm:$0xf] %v295
                %v297 = vld [vmem:[%s151 + $0x208] sm:$0xf]
                %298 = vst [vmem:[%s152 + $0x120] sm:$0xf] %v297
                %v299 = vld [vmem:[%s151 + $0x20c] sm:$0xf]
                %300 = vst [vmem:[%s152 + $0x124] sm:$0xf] %v299
                %v301 = vld [vmem:[%s151 + $0x210] sm:$0xf]
                %302 = vst [vmem:[%s152 + $0x128] sm:$0xf] %v301
                %v303 = vld [vmem:[%s151 + $0x214] sm:$0xf]
                %304 = vst [vmem:[%s152 + $0x12c] sm:$0xf] %v303
                %v305 = vld [vmem:[%s151 + $0x218] sm:$0xf]
                %306 = vst [vmem:[%s152 + $0x130] sm:$0xf] %v305
                %v307 = vld [vmem:[%s151 + $0x21c] sm:$0xf]
                %308 = vst [vmem:[%s152 + $0x134] sm:$0xf] %v307
                %v309 = vld [vmem:[%s151 + $0x220] sm:$0xf]
                %310 = vst [vmem:[%s152 + $0x138] sm:$0xf] %v309
                %v311 = vld [vmem:[%s151 + $0x224] sm:$0xf]
                %312 = vst [vmem:[%s152 + $0x13c] sm:$0xf] %v311
                %v313 = vld [vmem:[%s151 + $0x228] sm:$0xf]
                %314 = vst [vmem:[%s152 + $0x140] sm:$0xf] %v313
                %v315 = vld [vmem:[%s151 + $0x22c] sm:$0xf]
                %316 = vst [vmem:[%s152 + $0x144] sm:$0xf] %v315
                %v317 = vld [vmem:[%s151 + $0x230] sm:$0xf]
                %318 = vst [vmem:[%s152 + $0x148] sm:$0xf] %v317
                %v319 = vld [vmem:[%s151 + $0x234] sm:$0xf]
                %320 = vst [vmem:[%s152 + $0x14c] sm:$0xf] %v319
                %v321 = vld [vmem:[%s151 + $0x238] sm:$0xf]
                %322 = vst [vmem:[%s152 + $0x150] sm:$0xf] %v321
                %v323 = vld [vmem:[%s151 + $0x23c] sm:$0xf]
                %324 = vst [vmem:[%s152 + $0x154] sm:$0xf] %v323
                %v325 = vld [vmem:[%s151 + $0x240] sm:$0xf]
                %326 = vst [vmem:[%s152 + $0x158] sm:$0xf] %v325
                %v327 = vld [vmem:[%s151 + $0x2b8] sm:$0xf]
                %328 = vst [vmem:[%s152 + $0x15c] sm:$0xf] %v327
                %v329 = vld [vmem:[%s151 + $0x2bc] sm:$0xf]
                %330 = vst [vmem:[%s152 + $0x160] sm:$0xf] %v329
                %v331 = vld [vmem:[%s151 + $0x2c0] sm:$0xf]
                %332 = vst [vmem:[%s152 + $0x164] sm:$0xf] %v331
                %v333 = vld [vmem:[%s151 + $0x2c4] sm:$0xf]
                %334 = vst [vmem:[%s152 + $0x168] sm:$0xf] %v333
                %v335 = vld [vmem:[%s151 + $0x2c8] sm:$0xf]
                %336 = vst [vmem:[%s152 + $0x16c] sm:$0xf] %v335
                %v337 = vld [vmem:[%s151 + $0x2cc] sm:$0xf]
                %338 = vst [vmem:[%s152 + $0x170] sm:$0xf] %v337
                %v339 = vld [vmem:[%s151 + $0x2d0] sm:$0xf]
                %340 = vst [vmem:[%s152 + $0x174] sm:$0xf] %v339
                %v341 = vld [vmem:[%s151 + $0x2d4] sm:$0xf]
                %342 = vst [vmem:[%s152 + $0x178] sm:$0xf] %v341
                %v343 = vld [vmem:[%s151 + $0x2d8] sm:$0xf]
                %344 = vst [vmem:[%s152 + $0x17c] sm:$0xf] %v343
                %v345 = vld [vmem:[%s151 + $0x2dc] sm:$0xf]
                %346 = vst [vmem:[%s152 + $0x180] sm:$0xf] %v345
                %v347 = vld [vmem:[%s151 + $0x2e0] sm:$0xf]
                %348 = vst [vmem:[%s152 + $0x184] sm:$0xf] %v347
                %v349 = vld [vmem:[%s151 + $0x2e4] sm:$0xf]
                %350 = vst [vmem:[%s152 + $0x188] sm:$0xf] %v349
                %v351 = vld [vmem:[%s151 + $0x2e8] sm:$0xf]
                %352 = vst [vmem:[%s152 + $0x18c] sm:$0xf] %v351
                %v353 = vld [vmem:[%s151 + $0x2ec] sm:$0xf]
                %354 = vst [vmem:[%s152 + $0x190] sm:$0xf] %v353
                %v355 = vld [vmem:[%s151 + $0x2f0] sm:$0xf]
                %356 = vst [vmem:[%s152 + $0x194] sm:$0xf] %v355
                %v357 = vld [vmem:[%s151 + $0x2f4] sm:$0xf]
                %358 = vst [vmem:[%s152 + $0x198] sm:$0xf] %v357
                %v359 = vld [vmem:[%s151 + $0x2f8] sm:$0xf]
                %360 = vst [vmem:[%s152 + $0x19c] sm:$0xf] %v359
                %v361 = vld [vmem:[%s151 + $0x2fc] sm:$0xf]
                %362 = vst [vmem:[%s152 + $0x1a0] sm:$0xf] %v361
                %v363 = vld [vmem:[%s151 + $0x300] sm:$0xf]
                %364 = vst [vmem:[%s152 + $0x1a4] sm:$0xf] %v363
                %v365 = vld [vmem:[%s151 + $0x304] sm:$0xf]
                %366 = vst [vmem:[%s152 + $0x1a8] sm:$0xf] %v365
                %v367 = vld [vmem:[%s151 + $0x308] sm:$0xf]
                %368 = vst [vmem:[%s152 + $0x1ac] sm:$0xf] %v367
                %v369 = vld [vmem:[%s151 + $0x30c] sm:$0xf]
                %370 = vst [vmem:[%s152 + $0x1b0] sm:$0xf] %v369
                %v371 = vld [vmem:[%s151 + $0x310] sm:$0xf]
                %372 = vst [vmem:[%s152 + $0x1b4] sm:$0xf] %v371
                %v373 = vld [vmem:[%s151 + $0x314] sm:$0xf]
                %374 = vst [vmem:[%s152 + $0x1b8] sm:$0xf] %v373
                %v375 = vld [vmem:[%s151 + $0x318] sm:$0xf]
                %376 = vst [vmem:[%s152 + $0x1bc] sm:$0xf] %v375
                %v377 = vld [vmem:[%s151 + $0x31c] sm:$0xf]
                %378 = vst [vmem:[%s152 + $0x1c0] sm:$0xf] %v377
                %v379 = vld [vmem:[%s151 + $0x320] sm:$0xf]
                %380 = vst [vmem:[%s152 + $0x1c4] sm:$0xf] %v379
                %v381 = vld [vmem:[%s151 + $0x324] sm:$0xf]
                %382 = vst [vmem:[%s152 + $0x1c8] sm:$0xf] %v381
                %v383 = vld [vmem:[%s151 + $0x328] sm:$0xf]
                %384 = vst [vmem:[%s152 + $0x1cc] sm:$0xf] %v383
              $region45: #{simple_cnn_forward.3} parent=39 // loop_footer
                %s150 = sadd.s32 1, %s146
              $region46: #{simple_cnn_forward.3} parent=39 // loop_footer_branch
                %145 = sbr.rel target = $region42
              $region47: #{simple_cnn_forward.3} parent=39 // loop_exit
                _
            $region40: #{simple_cnn_forward.3} parent=31 // pred_fallthru
              _
          $region32: #{simple_cnn_forward.3} parent=27 // pred_fallthru
            _
          %636 = vnop
        $region28: #{simple_cnn_forward.3} parent=23 // pred_fallthru
          _
      $region24: #{simple_cnn_forward.3} parent=5 // pred_fallthru
        _
      %p637 = scmp.le.s32.totalorder 1, %s9
      %p638 = scmp.lt.s32.totalorder %s9, 3
      %p639 = pnand %p637, %p638
      %p640 = pneg %p639
      // Predicated region
      $region66: #{simple_cnn_forward.3} parent=5 // pred_check
        _
      $region67: #{simple_cnn_forward.3} parent=5 // pred_check_branch
        %642 = sbr.rel (%p639) target = $region69
      $region68: #{simple_cnn_forward.3} parent=5 // pred_region
        %s643 = ssub.s32 %s9, 1
        %s644 = sand.u32 %s22, 1
        %s645 = sand.u32 %s22, 1
        %s646 = smul.addr %s645, 464
        %s647 = scalar_lea.vmem [#allocation2], %s646
        // Predicated region
        $region70: #{simple_cnn_forward.3} parent=68 // pred_check
          %p648 = pneg %p35
        $region71: #{simple_cnn_forward.3} parent=68 // pred_check_branch
          %650 = sbr.rel (%p648) target = $region73
        $region72: #{simple_cnn_forward.3} parent=68 // pred_region
          _
        $region73: #{simple_cnn_forward.3} parent=68 // pred_fallthru
          _
        %s651 = sand.u32 %s22, 1
        %s652 = sand.u32 %s22, 1
        %s653 = smul.addr %s652, 464
        %s654 = scalar_lea.vmem [#allocation2], %s653
        %p655 = pneg %p35
        %p656 = pneg %p32
        %p657 = pneg %p56
        %p658 = pneg %p53
        %p659 = pneg %p77
        %p660 = pneg %p74
        %p661 = pneg %p103
        %p662 = pneg %p100
        %s663 = smul.u32 29, %s14
        %p664 = scmp.lt.s32.totalorder %s663, 57
        %s665 = scalar_select %p664, %s663, 57
        %s666 = smul.addr %s665, 4
        %s667 = scalar_lea.vmem %s3, %s666
        %s668 = smul.u32 29, %s14
        %s669 = smul.u32 29, %s14
        %p670 = scmp.lt.s32.totalorder %s669, 57
        %s671 = scalar_select %p670, %s669, 57
        %s672 = smul.addr %s671, 4
        %s673 = scalar_lea.vmem %s3, %s672
        %s674 = smul.u32 29, %s14
        %v676 = vld [vmem:[%s1] sm:$0xf]
        %v677 = vld [vmem:[%s1 + $0x4] sm:$0xf]
        %v678 = vld [vmem:[%s1 + $0x8] sm:$0xf]
        %v679 = vld [vmem:[%s1 + $0xc] sm:$0x3]
        %v680 = vld [vmem:[%s647] sm:$0xf]
        %v681 = vld [vmem:[%s647 + $0x4] sm:$0xf]
        %v682 = vld [vmem:[%s647 + $0x8] sm:$0xf]
        %v683 = vld [vmem:[%s647 + $0xc] sm:$0xf]
        %v684 = vld [vmem:[%s647 + $0x10] sm:$0xf]
        %v685 = vld [vmem:[%s647 + $0x14] sm:$0xf]
        %v686 = vld [vmem:[%s647 + $0x18] sm:$0xf]
        %v687 = vld [vmem:[%s647 + $0x1c] sm:$0xf]
        %v688 = vld [vmem:[%s647 + $0x20] sm:$0xf]
        %v689 = vld [vmem:[%s647 + $0x24] sm:$0xf]
        %v690 = vld [vmem:[%s647 + $0x28] sm:$0xf]
        %v691 = vld [vmem:[%s647 + $0x2c] sm:$0xf]
        %v692 = vld [vmem:[%s647 + $0x30] sm:$0xf]
        %v693 = vld [vmem:[%s647 + $0x34] sm:$0xf]
        %v694 = vld [vmem:[%s647 + $0x38] sm:$0xf]
        %v695 = vld [vmem:[%s647 + $0x3c] sm:$0xf]
        %v696 = vld [vmem:[%s647 + $0x40] sm:$0xf]
        %v697 = vld [vmem:[%s647 + $0x44] sm:$0xf]
        %v698 = vld [vmem:[%s647 + $0x48] sm:$0xf]
        %v699 = vld [vmem:[%s647 + $0x4c] sm:$0xf]
        %v700 = vld [vmem:[%s647 + $0x50] sm:$0xf]
        %v701 = vld [vmem:[%s647 + $0x54] sm:$0xf]
        %v702 = vld [vmem:[%s647 + $0x58] sm:$0xf]
        %v703 = vld [vmem:[%s647 + $0x5c] sm:$0xf]
        %v704 = vld [vmem:[%s647 + $0x60] sm:$0xf]
        %v705 = vld [vmem:[%s647 + $0x64] sm:$0xf]
        %v706 = vld [vmem:[%s647 + $0x68] sm:$0xf]
        %v707 = vld [vmem:[%s647 + $0x6c] sm:$0xf]
        %v708 = vld [vmem:[%s647 + $0x70] sm:$0xf]
        %v738 = vunpack.c.l.b16 %v680
        %v739 = vunpack.c.l.b16 %v681
        %v740 = vunpack.c.l.b16 %v682
        %v741 = vunpack.c.l.b16 %v683
        %v742 = vunpack.c.l.b16 %v684
        %v743 = vunpack.c.l.b16 %v685
        %v744 = vunpack.c.l.b16 %v686
        %v745 = vunpack.c.l.b16 %v687
        %v746 = vunpack.c.l.b16 %v688
        %v747 = vunpack.c.l.b16 %v689
        %v748 = vunpack.c.l.b16 %v690
        %v749 = vunpack.c.l.b16 %v691
        %v750 = vunpack.c.l.b16 %v692
        %v751 = vunpack.c.l.b16 %v693
        %v752 = vunpack.c.l.b16 %v694
        %v753 = vunpack.c.l.b16 %v695
        %v754 = vunpack.c.l.b16 %v696
        %v755 = vunpack.c.l.b16 %v697
        %v756 = vunpack.c.l.b16 %v698
        %v757 = vunpack.c.l.b16 %v699
        %v758 = vunpack.c.l.b16 %v700
        %v759 = vunpack.c.l.b16 %v701
        %v760 = vunpack.c.l.b16 %v702
        %v761 = vunpack.c.l.b16 %v703
        %v762 = vunpack.c.l.b16 %v704
        %v763 = vunpack.c.l.b16 %v705
        %v764 = vunpack.c.l.b16 %v706
        %v765 = vunpack.c.l.b16 %v707
        %v766 = vunpack.c.l.b16 %v708
        %v767 = vpack.c.b16 %v739, %v738
        %v768 = vpack.c.b16 %v741, %v740
        %v769 = vpack.c.b16 %v743, %v742
        %v770 = vpack.c.b16 %v745, %v744
        %v771 = vpack.c.b16 %v747, %v746
        %v772 = vpack.c.b16 %v749, %v748
        %v773 = vpack.c.b16 %v751, %v750
        %v774 = vpack.c.b16 %v753, %v752
        %v775 = vpack.c.b16 %v755, %v754
        %v776 = vpack.c.b16 %v757, %v756
        %v777 = vpack.c.b16 %v759, %v758
        %v778 = vpack.c.b16 %v761, %v760
        %v779 = vpack.c.b16 %v763, %v762
        %v780 = vpack.c.b16 %v765, %v764
        %v781 = vpack.c.b16 %v766, %v766
        %v786 = vunpack.c.l.b16 %v676
        %v787 = vunpack.c.l.b16 %v677
        %v788 = vunpack.c.l.b16 %v678
        %v789 = vunpack.c.l.b16 %v679
        %v790 = vpack.c.b16 %v787, %v786
        %v791 = vpack.c.b16 %v789, %v788
        %vm793 = vcmask 220160
        %v795 = vsel %vm793, %v767, 0
        %v798 = vsel %vm793, %v768, 0
        %v801 = vsel %vm793, %v769, 0
        %v804 = vsel %vm793, %v770, 0
        %v807 = vsel %vm793, %v771, 0
        %v810 = vsel %vm793, %v772, 0
        %v813 = vsel %vm793, %v773, 0
        %v816 = vsel %vm793, %v774, 0
        %v819 = vsel %vm793, %v775, 0
        %v822 = vsel %vm793, %v776, 0
        %v825 = vsel %vm793, %v777, 0
        %v828 = vsel %vm793, %v778, 0
        %v831 = vsel %vm793, %v779, 0
        %v834 = vsel %vm793, %v780, 0
        %v837 = vsel %vm793, %v781, 0
        %vm839 = vcmask 1044480
        %vm840 = vcmask 1045504
        %v841 = vsel %vm839, 4294967295, 65535
        %v842 = vsel %vm840, %v841, 0
        %v844 = vand.u32 %v791, %v842
        %846 = vmatprep.subr.bf16.mxu0 0
        %847 = vmatpush1.bf16.msra.mxu0 %v790
        %848 = vmatprep.subr.bf16.mxu0 0
        %849 = vmatpush1.bf16.msra.mxu0 %v844
        %850 = vmatprep.subr.bf16.mxu0 0
        %851 = vmatpush1.bf16.msra.mxu0 0
        %852 = vmatprep.subr.bf16.mxu0 0
        %853 = vmatpush1.bf16.msra.mxu0 0
        %854 = vmatprep.subr.bf16.mxu0 0
        %855 = vmatpush1.bf16.msra.mxu0 0
        %856 = vmatprep.subr.bf16.mxu0 0
        %857 = vmatpush1.bf16.msra.mxu0 0
        %858 = vmatprep.subr.bf16.mxu0 0
        %859 = vmatpush1.bf16.msra.mxu0 0
        %860 = vmatprep.subr.bf16.mxu0 0
        %861 = vmatpush1.bf16.msra.mxu0 0
        %862 = vmatprep.subr.bf16.mxu0 0
        %863 = vmatpush1.bf16.msra.mxu0 0
        %864 = vmatprep.subr.bf16.mxu0 0
        %865 = vmatpush1.bf16.msra.mxu0 0
        %866 = vmatprep.subr.bf16.mxu0 0
        %867 = vmatpush1.bf16.msra.mxu0 0
        %868 = vmatprep.subr.bf16.mxu0 0
        %869 = vmatpush1.bf16.msra.mxu0 0
        %870 = vmatprep.subr.bf16.mxu0 0
        %871 = vmatpush1.bf16.msra.mxu0 0
        %872 = vmatprep.subr.bf16.mxu0 0
        %873 = vmatpush1.bf16.msra.mxu0 0
        %874 = vmatprep.subr.bf16.mxu0 0
        %875 = vmatpush1.bf16.msra.mxu0 0
        %876 = vmatprep.subr.bf16.mxu0 0
        %877 = vmatpush1.bf16.msra.mxu0 0
        %878 = vmatprep.mubr.bf16.mxu0 0
        %879 = vmatmul.mubr.bf16.gmra.mrb[0].mxu0 %v795
        %v880 = vpop.f32.mrb[0].mxu0
        %v881 = vadd.f32 0.0, %v880
        %v882 = vpop.f32.mrb[0].mxu0
        %v883 = vpop.f32.mrb[0].mxu0
        %v884 = vadd.f32 0.0, %v883
        %v885 = vpop.f32.mrb[0].mxu0
        %886 = vmatprep.mubr.bf16.mxu0 0
        %887 = vmatmul.mubr.bf16.gmra.mrb[0].mxu0 %v798
        %v888 = vpop.f32.mrb[0].mxu0
        %v889 = vadd.f32 0.0, %v888
        %v890 = vpop.f32.mrb[0].mxu0
        %v891 = vpop.f32.mrb[0].mxu0
        %v892 = vadd.f32 0.0, %v891
        %v893 = vpop.f32.mrb[0].mxu0
        %894 = vmatprep.mubr.bf16.mxu0 0
        %895 = vmatmul.mubr.bf16.gmra.mrb[0].mxu0 %v801
        %v896 = vpop.f32.mrb[0].mxu0
        %v897 = vadd.f32 0.0, %v896
        %v898 = vpop.f32.mrb[0].mxu0
        %v899 = vpop.f32.mrb[0].mxu0
        %v900 = vadd.f32 0.0, %v899
        %v901 = vpop.f32.mrb[0].mxu0
        %902 = vmatprep.mubr.bf16.mxu0 0
        %903 = vmatmul.mubr.bf16.gmra.mrb[0].mxu0 %v804
        %v904 = vpop.f32.mrb[0].mxu0
        %v905 = vadd.f32 0.0, %v904
        %v906 = vpop.f32.mrb[0].mxu0
        %v907 = vpop.f32.mrb[0].mxu0
        %v908 = vadd.f32 0.0, %v907
        %v909 = vpop.f32.mrb[0].mxu0
        %910 = vmatprep.mubr.bf16.mxu0 0
        %911 = vmatmul.mubr.bf16.gmra.mrb[0].mxu0 %v807
        %v912 = vpop.f32.mrb[0].mxu0
        %v913 = vadd.f32 0.0, %v912
        %v914 = vpop.f32.mrb[0].mxu0
        %v915 = vpop.f32.mrb[0].mxu0
        %v916 = vadd.f32 0.0, %v915
        %v917 = vpop.f32.mrb[0].mxu0
        %918 = vmatprep.mubr.bf16.mxu0 0
        %919 = vmatmul.mubr.bf16.gmra.mrb[0].mxu0 %v810
        %v920 = vpop.f32.mrb[0].mxu0
        %v921 = vadd.f32 0.0, %v920
        %v922 = vpop.f32.mrb[0].mxu0
        %v923 = vpop.f32.mrb[0].mxu0
        %v924 = vadd.f32 0.0, %v923
        %v925 = vpop.f32.mrb[0].mxu0
        %926 = vmatprep.mubr.bf16.mxu0 0
        %927 = vmatmul.mubr.bf16.gmra.mrb[0].mxu0 %v813
        %v928 = vpop.f32.mrb[0].mxu0
        %v929 = vadd.f32 0.0, %v928
        %v930 = vpop.f32.mrb[0].mxu0
        %v931 = vpop.f32.mrb[0].mxu0
        %v932 = vadd.f32 0.0, %v931
        %v933 = vpop.f32.mrb[0].mxu0
        %934 = vmatprep.mubr.bf16.mxu0 0
        %935 = vmatmul.mubr.bf16.gmra.mrb[0].mxu0 %v816
        %v936 = vpop.f32.mrb[0].mxu0
        %v937 = vadd.f32 0.0, %v936
        %v938 = vpop.f32.mrb[0].mxu0
        %v939 = vpop.f32.mrb[0].mxu0
        %v940 = vadd.f32 0.0, %v939
        %v941 = vpop.f32.mrb[0].mxu0
        %942 = vmatprep.mubr.bf16.mxu0 0
        %943 = vmatmul.mubr.bf16.gmra.mrb[0].mxu0 %v819
        %v944 = vpop.f32.mrb[0].mxu0
        %v945 = vadd.f32 0.0, %v944
        %v946 = vpop.f32.mrb[0].mxu0
        %v947 = vpop.f32.mrb[0].mxu0
        %v948 = vadd.f32 0.0, %v947
        %v949 = vpop.f32.mrb[0].mxu0
        %950 = vmatprep.mubr.bf16.mxu0 0
        %951 = vmatmul.mubr.bf16.gmra.mrb[0].mxu0 %v822
        %v952 = vpop.f32.mrb[0].mxu0
        %v953 = vadd.f32 0.0, %v952
        %v954 = vpop.f32.mrb[0].mxu0
        %v955 = vpop.f32.mrb[0].mxu0
        %v956 = vadd.f32 0.0, %v955
        %v957 = vpop.f32.mrb[0].mxu0
        %958 = vmatprep.mubr.bf16.mxu0 0
        %959 = vmatmul.mubr.bf16.gmra.mrb[0].mxu0 %v825
        %v960 = vpop.f32.mrb[0].mxu0
        %v961 = vadd.f32 0.0, %v960
        %v962 = vpop.f32.mrb[0].mxu0
        %v963 = vpop.f32.mrb[0].mxu0
        %v964 = vadd.f32 0.0, %v963
        %v965 = vpop.f32.mrb[0].mxu0
        %966 = vmatprep.mubr.bf16.mxu0 0
        %967 = vmatmul.mubr.bf16.gmra.mrb[0].mxu0 %v828
        %v968 = vpop.f32.mrb[0].mxu0
        %v969 = vadd.f32 0.0, %v968
        %v970 = vpop.f32.mrb[0].mxu0
        %v971 = vpop.f32.mrb[0].mxu0
        %v972 = vadd.f32 0.0, %v971
        %v973 = vpop.f32.mrb[0].mxu0
        %974 = vmatprep.mubr.bf16.mxu0 0
        %975 = vmatmul.mubr.bf16.gmra.mrb[0].mxu0 %v831
        %v976 = vpop.f32.mrb[0].mxu0
        %v977 = vadd.f32 0.0, %v976
        %v978 = vpop.f32.mrb[0].mxu0
        %v979 = vpop.f32.mrb[0].mxu0
        %v980 = vadd.f32 0.0, %v979
        %v981 = vpop.f32.mrb[0].mxu0
        %982 = vmatprep.mubr.bf16.mxu0 0
        %983 = vmatmul.mubr.bf16.gmra.mrb[0].mxu0 %v834
        %v984 = vpop.f32.mrb[0].mxu0
        %v985 = vadd.f32 0.0, %v984
        %v986 = vpop.f32.mrb[0].mxu0
        %v987 = vpop.f32.mrb[0].mxu0
        %v988 = vadd.f32 0.0, %v987
        %v989 = vpop.f32.mrb[0].mxu0
        %990 = vmatprep.mubr.bf16.mxu0 0
        %991 = vmatmul.mubr.bf16.gmra.mrb[0].mxu0 %v837
        %v992 = vpop.f32.mrb[0].mxu0
        %v993 = vadd.f32 0.0, %v992
        %v994 = vpop.f32.mrb[0].mxu0
        %v995 = vpop.f32.mrb[0].mxu0
        %v996 = vpop.f32.mrb[0].mxu0
        %997 = vdwg.mxu0
        %s998 = scalar_lea.vmem %s647, 116 [#allocation2]
        %v999 = vld [vmem:[%s998] sm:$0xf]
        %v1000 = vld [vmem:[%s998 + $0x4] sm:$0xf]
        %v1001 = vld [vmem:[%s998 + $0x8] sm:$0xf]
        %v1002 = vld [vmem:[%s998 + $0xc] sm:$0xf]
        %v1003 = vld [vmem:[%s998 + $0x10] sm:$0xf]
        %v1004 = vld [vmem:[%s998 + $0x14] sm:$0xf]
        %v1005 = vld [vmem:[%s998 + $0x18] sm:$0xf]
        %v1006 = vld [vmem:[%s998 + $0x1c] sm:$0xf]
        %v1007 = vld [vmem:[%s998 + $0x20] sm:$0xf]
        %v1008 = vld [vmem:[%s998 + $0x24] sm:$0xf]
        %v1009 = vld [vmem:[%s998 + $0x28] sm:$0xf]
        %v1010 = vld [vmem:[%s998 + $0x2c] sm:$0xf]
        %v1011 = vld [vmem:[%s998 + $0x30] sm:$0xf]
        %v1012 = vld [vmem:[%s998 + $0x34] sm:$0xf]
        %v1013 = vld [vmem:[%s998 + $0x38] sm:$0xf]
        %v1014 = vld [vmem:[%s998 + $0x3c] sm:$0xf]
        %v1015 = vld [vmem:[%s998 + $0x40] sm:$0xf]
        %v1016 = vld [vmem:[%s998 + $0x44] sm:$0xf]
        %v1017 = vld [vmem:[%s998 + $0x48] sm:$0xf]
        %v1018 = vld [vmem:[%s998 + $0x4c] sm:$0xf]
        %v1019 = vld [vmem:[%s998 + $0x50] sm:$0xf]
        %v1020 = vld [vmem:[%s998 + $0x54] sm:$0xf]
        %v1021 = vld [vmem:[%s998 + $0x58] sm:$0xf]
        %v1022 = vld [vmem:[%s998 + $0x5c] sm:$0xf]
        %v1023 = vld [vmem:[%s998 + $0x60] sm:$0xf]
        %v1024 = vld [vmem:[%s998 + $0x64] sm:$0xf]
        %v1025 = vld [vmem:[%s998 + $0x68] sm:$0xf]
        %v1026 = vld [vmem:[%s998 + $0x6c] sm:$0xf]
        %v1027 = vld [vmem:[%s998 + $0x70] sm:$0xf]
        %v1057 = vunpack.c.l.b16 %v999
        %v1058 = vunpack.c.l.b16 %v1000
        %v1059 = vunpack.c.l.b16 %v1001
        %v1060 = vunpack.c.l.b16 %v1002
        %v1061 = vunpack.c.l.b16 %v1003
        %v1062 = vunpack.c.l.b16 %v1004
        %v1063 = vunpack.c.l.b16 %v1005
        %v1064 = vunpack.c.l.b16 %v1006
        %v1065 = vunpack.c.l.b16 %v1007
        %v1066 = vunpack.c.l.b16 %v1008
        %v1067 = vunpack.c.l.b16 %v1009
        %v1068 = vunpack.c.l.b16 %v1010
        %v1069 = vunpack.c.l.b16 %v1011
        %v1070 = vunpack.c.l.b16 %v1012
        %v1071 = vunpack.c.l.b16 %v1013
        %v1072 = vunpack.c.l.b16 %v1014
        %v1073 = vunpack.c.l.b16 %v1015
        %v1074 = vunpack.c.l.b16 %v1016
        %v1075 = vunpack.c.l.b16 %v1017
        %v1076 = vunpack.c.l.b16 %v1018
        %v1077 = vunpack.c.l.b16 %v1019
        %v1078 = vunpack.c.l.b16 %v1020
        %v1079 = vunpack.c.l.b16 %v1021
        %v1080 = vunpack.c.l.b16 %v1022
        %v1081 = vunpack.c.l.b16 %v1023
        %v1082 = vunpack.c.l.b16 %v1024
        %v1083 = vunpack.c.l.b16 %v1025
        %v1084 = vunpack.c.l.b16 %v1026
        %v1085 = vunpack.c.l.b16 %v1027
        %v1086 = vpack.c.b16 %v1058, %v1057
        %v1087 = vpack.c.b16 %v1060, %v1059
        %v1088 = vpack.c.b16 %v1062, %v1061
        %v1089 = vpack.c.b16 %v1064, %v1063
        %v1090 = vpack.c.b16 %v1066, %v1065
        %v1091 = vpack.c.b16 %v1068, %v1067
        %v1092 = vpack.c.b16 %v1070, %v1069
        %v1093 = vpack.c.b16 %v1072, %v1071
        %v1094 = vpack.c.b16 %v1074, %v1073
        %v1095 = vpack.c.b16 %v1076, %v1075
        %v1096 = vpack.c.b16 %v1078, %v1077
        %v1097 = vpack.c.b16 %v1080, %v1079
        %v1098 = vpack.c.b16 %v1082, %v1081
        %v1099 = vpack.c.b16 %v1084, %v1083
        %v1100 = vpack.c.b16 %v1085, %v1085
        %v1102 = vsel %vm793, %v1086, 0
        %v1105 = vsel %vm793, %v1087, 0
        %v1108 = vsel %vm793, %v1088, 0
        %v1111 = vsel %vm793, %v1089, 0
        %v1114 = vsel %vm793, %v1090, 0
        %v1117 = vsel %vm793, %v1091, 0
        %v1120 = vsel %vm793, %v1092, 0
        %v1123 = vsel %vm793, %v1093, 0
        %v1126 = vsel %vm793, %v1094, 0
        %v1129 = vsel %vm793, %v1095, 0
        %v1132 = vsel %vm793, %v1096, 0
        %v1135 = vsel %vm793, %v1097, 0
        %v1138 = vsel %vm793, %v1098, 0
        %v1141 = vsel %vm793, %v1099, 0
        %v1144 = vsel %vm793, %v1100, 0
        %1146 = vmatprep.subr.bf16.mxu0 0
        %1147 = vmatpush1.bf16.msra.mxu0 %v790
        %1148 = vmatprep.subr.bf16.mxu0 0
        %1149 = vmatpush1.bf16.msra.mxu0 %v844
        %1150 = vmatprep.subr.bf16.mxu0 0
        %1151 = vmatpush1.bf16.msra.mxu0 0
        %1152 = vmatprep.subr.bf16.mxu0 0
        %1153 = vmatpush1.bf16.msra.mxu0 0
        %1154 = vmatprep.subr.bf16.mxu0 0
        %1155 = vmatpush1.bf16.msra.mxu0 0
        %1156 = vmatprep.subr.bf16.mxu0 0
        %1157 = vmatpush1.bf16.msra.mxu0 0
        %1158 = vmatprep.subr.bf16.mxu0 0
        %1159 = vmatpush1.bf16.msra.mxu0 0
        %1160 = vmatprep.subr.bf16.mxu0 0
        %1161 = vmatpush1.bf16.msra.mxu0 0
        %1162 = vmatprep.subr.bf16.mxu0 0
        %1163 = vmatpush1.bf16.msra.mxu0 0
        %1164 = vmatprep.subr.bf16.mxu0 0
        %1165 = vmatpush1.bf16.msra.mxu0 0
        %1166 = vmatprep.subr.bf16.mxu0 0
        %1167 = vmatpush1.bf16.msra.mxu0 0
        %1168 = vmatprep.subr.bf16.mxu0 0
        %1169 = vmatpush1.bf16.msra.mxu0 0
        %1170 = vmatprep.subr.bf16.mxu0 0
        %1171 = vmatpush1.bf16.msra.mxu0 0
        %1172 = vmatprep.subr.bf16.mxu0 0
        %1173 = vmatpush1.bf16.msra.mxu0 0
        %1174 = vmatprep.subr.bf16.mxu0 0
        %1175 = vmatpush1.bf16.msra.mxu0 0
        %1176 = vmatprep.subr.bf16.mxu0 0
        %1177 = vmatpush1.bf16.msra.mxu0 0
        %1178 = vmatprep.mubr.bf16.mxu0 0
        %1179 = vmatmul.mubr.bf16.gmra.mrb[0].mxu0 %v1102
        %v1180 = vpop.f32.mrb[0].mxu0
        %v1181 = vadd.f32 0.0, %v1180
        %v1182 = vpop.f32.mrb[0].mxu0
        %v1183 = vpop.f32.mrb[0].mxu0
        %v1184 = vadd.f32 0.0, %v1183
        %v1185 = vpop.f32.mrb[0].mxu0
        %1186 = vmatprep.mubr.bf16.mxu0 0
        %1187 = vmatmul.mubr.bf16.gmra.mrb[0].mxu0 %v1105
        %v1188 = vpop.f32.mrb[0].mxu0
        %v1189 = vadd.f32 0.0, %v1188
        %v1190 = vpop.f32.mrb[0].mxu0
        %v1191 = vpop.f32.mrb[0].mxu0
        %v1192 = vadd.f32 0.0, %v1191
        %v1193 = vpop.f32.mrb[0].mxu0
        %1194 = vmatprep.mubr.bf16.mxu0 0
        %1195 = vmatmul.mubr.bf16.gmra.mrb[0].mxu0 %v1108
        %v1196 = vpop.f32.mrb[0].mxu0
        %v1197 = vadd.f32 0.0, %v1196
        %v1198 = vpop.f32.mrb[0].mxu0
        %v1199 = vpop.f32.mrb[0].mxu0
        %v1200 = vadd.f32 0.0, %v1199
        %v1201 = vpop.f32.mrb[0].mxu0
        %1202 = vmatprep.mubr.bf16.mxu0 0
        %1203 = vmatmul.mubr.bf16.gmra.mrb[0].mxu0 %v1111
        %v1204 = vpop.f32.mrb[0].mxu0
        %v1205 = vadd.f32 0.0, %v1204
        %v1206 = vpop.f32.mrb[0].mxu0
        %v1207 = vpop.f32.mrb[0].mxu0
        %v1208 = vadd.f32 0.0, %v1207
        %v1209 = vpop.f32.mrb[0].mxu0
        %1210 = vmatprep.mubr.bf16.mxu0 0
        %1211 = vmatmul.mubr.bf16.gmra.mrb[0].mxu0 %v1114
        %v1212 = vpop.f32.mrb[0].mxu0
        %v1213 = vadd.f32 0.0, %v1212
        %v1214 = vpop.f32.mrb[0].mxu0
        %v1215 = vpop.f32.mrb[0].mxu0
        %v1216 = vadd.f32 0.0, %v1215
        %v1217 = vpop.f32.mrb[0].mxu0
        %1218 = vmatprep.mubr.bf16.mxu0 0
        %1219 = vmatmul.mubr.bf16.gmra.mrb[0].mxu0 %v1117
        %v1220 = vpop.f32.mrb[0].mxu0
        %v1221 = vadd.f32 0.0, %v1220
        %v1222 = vpop.f32.mrb[0].mxu0
        %v1223 = vpop.f32.mrb[0].mxu0
        %v1224 = vadd.f32 0.0, %v1223
        %v1225 = vpop.f32.mrb[0].mxu0
        %1226 = vmatprep.mubr.bf16.mxu0 0
        %1227 = vmatmul.mubr.bf16.gmra.mrb[0].mxu0 %v1120
        %v1228 = vpop.f32.mrb[0].mxu0
        %v1229 = vadd.f32 0.0, %v1228
        %v1230 = vpop.f32.mrb[0].mxu0
        %v1231 = vpop.f32.mrb[0].mxu0
        %v1232 = vadd.f32 0.0, %v1231
        %v1233 = vpop.f32.mrb[0].mxu0
        %1234 = vmatprep.mubr.bf16.mxu0 0
        %1235 = vmatmul.mubr.bf16.gmra.mrb[0].mxu0 %v1123
        %v1236 = vpop.f32.mrb[0].mxu0
        %v1237 = vadd.f32 0.0, %v1236
        %v1238 = vpop.f32.mrb[0].mxu0
        %v1239 = vpop.f32.mrb[0].mxu0
        %v1240 = vadd.f32 0.0, %v1239
        %v1241 = vpop.f32.mrb[0].mxu0
        %1242 = vmatprep.mubr.bf16.mxu0 0
        %1243 = vmatmul.mubr.bf16.gmra.mrb[0].mxu0 %v1126
        %v1244 = vpop.f32.mrb[0].mxu0
        %v1245 = vadd.f32 0.0, %v1244
        %v1246 = vpop.f32.mrb[0].mxu0
        %v1247 = vpop.f32.mrb[0].mxu0
        %v1248 = vadd.f32 0.0, %v1247
        %v1249 = vpop.f32.mrb[0].mxu0
        %1250 = vmatprep.mubr.bf16.mxu0 0
        %1251 = vmatmul.mubr.bf16.gmra.mrb[0].mxu0 %v1129
        %v1252 = vpop.f32.mrb[0].mxu0
        %v1253 = vadd.f32 0.0, %v1252
        %v1254 = vpop.f32.mrb[0].mxu0
        %v1255 = vpop.f32.mrb[0].mxu0
        %v1256 = vadd.f32 0.0, %v1255
        %v1257 = vpop.f32.mrb[0].mxu0
        %1258 = vmatprep.mubr.bf16.mxu0 0
        %1259 = vmatmul.mubr.bf16.gmra.mrb[0].mxu0 %v1132
        %v1260 = vpop.f32.mrb[0].mxu0
        %v1261 = vadd.f32 0.0, %v1260
        %v1262 = vpop.f32.mrb[0].mxu0
        %v1263 = vpop.f32.mrb[0].mxu0
        %v1264 = vadd.f32 0.0, %v1263
        %v1265 = vpop.f32.mrb[0].mxu0
        %1266 = vmatprep.mubr.bf16.mxu0 0
        %1267 = vmatmul.mubr.bf16.gmra.mrb[0].mxu0 %v1135
        %v1268 = vpop.f32.mrb[0].mxu0
        %v1269 = vadd.f32 0.0, %v1268
        %v1270 = vpop.f32.mrb[0].mxu0
        %v1271 = vpop.f32.mrb[0].mxu0
        %v1272 = vadd.f32 0.0, %v1271
        %v1273 = vpop.f32.mrb[0].mxu0
        %1274 = vmatprep.mubr.bf16.mxu0 0
        %1275 = vmatmul.mubr.bf16.gmra.mrb[0].mxu0 %v1138
        %v1276 = vpop.f32.mrb[0].mxu0
        %v1277 = vadd.f32 0.0, %v1276
        %v1278 = vpop.f32.mrb[0].mxu0
        %v1279 = vpop.f32.mrb[0].mxu0
        %v1280 = vadd.f32 0.0, %v1279
        %v1281 = vpop.f32.mrb[0].mxu0
        %1282 = vmatprep.mubr.bf16.mxu0 0
        %1283 = vmatmul.mubr.bf16.gmra.mrb[0].mxu0 %v1141
        %v1284 = vpop.f32.mrb[0].mxu0
        %v1285 = vadd.f32 0.0, %v1284
        %v1286 = vpop.f32.mrb[0].mxu0
        %v1287 = vpop.f32.mrb[0].mxu0
        %v1288 = vadd.f32 0.0, %v1287
        %v1289 = vpop.f32.mrb[0].mxu0
        %1290 = vmatprep.mubr.bf16.mxu0 0
        %1291 = vmatmul.mubr.bf16.gmra.mrb[0].mxu0 %v1144
        %v1292 = vpop.f32.mrb[0].mxu0
        %v1293 = vadd.f32 0.0, %v1292
        %v1294 = vpop.f32.mrb[0].mxu0
        %v1295 = vpop.f32.mrb[0].mxu0
        %v1296 = vpop.f32.mrb[0].mxu0
        %1297 = vdwg.mxu0
        %v1298 = vmax.f32 %v881, %v1181
        %v1299 = vmax.f32 %v884, %v1184
        %v1300 = vmax.f32 %v889, %v1189
        %v1301 = vmax.f32 %v892, %v1192
        %v1302 = vmax.f32 %v897, %v1197
        %v1303 = vmax.f32 %v900, %v1200
        %v1304 = vmax.f32 %v905, %v1205
        %v1305 = vmax.f32 %v908, %v1208
        %v1306 = vmax.f32 %v913, %v1213
        %v1307 = vmax.f32 %v916, %v1216
        %v1308 = vmax.f32 %v921, %v1221
        %v1309 = vmax.f32 %v924, %v1224
        %v1310 = vmax.f32 %v929, %v1229
        %v1311 = vmax.f32 %v932, %v1232
        %v1312 = vmax.f32 %v937, %v1237
        %v1313 = vmax.f32 %v940, %v1240
        %v1314 = vmax.f32 %v945, %v1245
        %v1315 = vmax.f32 %v948, %v1248
        %v1316 = vmax.f32 %v953, %v1253
        %v1317 = vmax.f32 %v956, %v1256
        %v1318 = vmax.f32 %v961, %v1261
        %v1319 = vmax.f32 %v964, %v1264
        %v1320 = vmax.f32 %v969, %v1269
        %v1321 = vmax.f32 %v972, %v1272
        %v1322 = vmax.f32 %v977, %v1277
        %v1323 = vmax.f32 %v980, %v1280
        %v1324 = vmax.f32 %v985, %v1285
        %v1325 = vmax.f32 %v988, %v1288
        %v1326 = vmax.f32 %v993, %v1293
        %s1327 = scalar_lea.vmem %s647, 232 [#allocation2]
        %v1328 = vld [vmem:[%s1327] sm:$0xf]
        %v1329 = vld [vmem:[%s1327 + $0x4] sm:$0xf]
        %v1330 = vld [vmem:[%s1327 + $0x8] sm:$0xf]
        %v1331 = vld [vmem:[%s1327 + $0xc] sm:$0xf]
        %v1332 = vld [vmem:[%s1327 + $0x10] sm:$0xf]
        %v1333 = vld [vmem:[%s1327 + $0x14] sm:$0xf]
        %v1334 = vld [vmem:[%s1327 + $0x18] sm:$0xf]
        %v1335 = vld [vmem:[%s1327 + $0x1c] sm:$0xf]
        %v1336 = vld [vmem:[%s1327 + $0x20] sm:$0xf]
        %v1337 = vld [vmem:[%s1327 + $0x24] sm:$0xf]
        %v1338 = vld [vmem:[%s1327 + $0x28] sm:$0xf]
        %v1339 = vld [vmem:[%s1327 + $0x2c] sm:$0xf]
        %v1340 = vld [vmem:[%s1327 + $0x30] sm:$0xf]
        %v1341 = vld [vmem:[%s1327 + $0x34] sm:$0xf]
        %v1342 = vld [vmem:[%s1327 + $0x38] sm:$0xf]
        %v1343 = vld [vmem:[%s1327 + $0x3c] sm:$0xf]
        %v1344 = vld [vmem:[%s1327 + $0x40] sm:$0xf]
        %v1345 = vld [vmem:[%s1327 + $0x44] sm:$0xf]
        %v1346 = vld [vmem:[%s1327 + $0x48] sm:$0xf]
        %v1347 = vld [vmem:[%s1327 + $0x4c] sm:$0xf]
        %v1348 = vld [vmem:[%s1327 + $0x50] sm:$0xf]
        %v1349 = vld [vmem:[%s1327 + $0x54] sm:$0xf]
        %v1350 = vld [vmem:[%s1327 + $0x58] sm:$0xf]
        %v1351 = vld [vmem:[%s1327 + $0x5c] sm:$0xf]
        %v1352 = vld [vmem:[%s1327 + $0x60] sm:$0xf]
        %v1353 = vld [vmem:[%s1327 + $0x64] sm:$0xf]
        %v1354 = vld [vmem:[%s1327 + $0x68] sm:$0xf]
        %v1355 = vld [vmem:[%s1327 + $0x6c] sm:$0xf]
        %v1356 = vld [vmem:[%s1327 + $0x70] sm:$0xf]
        %v1386 = vunpack.c.l.b16 %v1328
        %v1387 = vunpack.c.l.b16 %v1329
        %v1388 = vunpack.c.l.b16 %v1330
        %v1389 = vunpack.c.l.b16 %v1331
        %v1390 = vunpack.c.l.b16 %v1332
        %v1391 = vunpack.c.l.b16 %v1333
        %v1392 = vunpack.c.l.b16 %v1334
        %v1393 = vunpack.c.l.b16 %v1335
        %v1394 = vunpack.c.l.b16 %v1336
        %v1395 = vunpack.c.l.b16 %v1337
        %v1396 = vunpack.c.l.b16 %v1338
        %v1397 = vunpack.c.l.b16 %v1339
        %v1398 = vunpack.c.l.b16 %v1340
        %v1399 = vunpack.c.l.b16 %v1341
        %v1400 = vunpack.c.l.b16 %v1342
        %v1401 = vunpack.c.l.b16 %v1343
        %v1402 = vunpack.c.l.b16 %v1344
        %v1403 = vunpack.c.l.b16 %v1345
        %v1404 = vunpack.c.l.b16 %v1346
        %v1405 = vunpack.c.l.b16 %v1347
        %v1406 = vunpack.c.l.b16 %v1348
        %v1407 = vunpack.c.l.b16 %v1349
        %v1408 = vunpack.c.l.b16 %v1350
        %v1409 = vunpack.c.l.b16 %v1351
        %v1410 = vunpack.c.l.b16 %v1352
        %v1411 = vunpack.c.l.b16 %v1353
        %v1412 = vunpack.c.l.b16 %v1354
        %v1413 = vunpack.c.l.b16 %v1355
        %v1414 = vunpack.c.l.b16 %v1356
        %v1415 = vpack.c.b16 %v1387, %v1386
        %v1416 = vpack.c.b16 %v1389, %v1388
        %v1417 = vpack.c.b16 %v1391, %v1390
        %v1418 = vpack.c.b16 %v1393, %v1392
        %v1419 = vpack.c.b16 %v1395, %v1394
        %v1420 = vpack.c.b16 %v1397, %v1396
        %v1421 = vpack.c.b16 %v1399, %v1398
        %v1422 = vpack.c.b16 %v1401, %v1400
        %v1423 = vpack.c.b16 %v1403, %v1402
        %v1424 = vpack.c.b16 %v1405, %v1404
        %v1425 = vpack.c.b16 %v1407, %v1406
        %v1426 = vpack.c.b16 %v1409, %v1408
        %v1427 = vpack.c.b16 %v1411, %v1410
        %v1428 = vpack.c.b16 %v1413, %v1412
        %v1429 = vpack.c.b16 %v1414, %v1414
        %v1431 = vsel %vm793, %v1415, 0
        %v1434 = vsel %vm793, %v1416, 0
        %v1437 = vsel %vm793, %v1417, 0
        %v1440 = vsel %vm793, %v1418, 0
        %v1443 = vsel %vm793, %v1419, 0
        %v1446 = vsel %vm793, %v1420, 0
        %v1449 = vsel %vm793, %v1421, 0
        %v1452 = vsel %vm793, %v1422, 0
        %v1455 = vsel %vm793, %v1423, 0
        %v1458 = vsel %vm793, %v1424, 0
        %v1461 = vsel %vm793, %v1425, 0
        %v1464 = vsel %vm793, %v1426, 0
        %v1467 = vsel %vm793, %v1427, 0
        %v1470 = vsel %vm793, %v1428, 0
        %v1473 = vsel %vm793, %v1429, 0
        %1475 = vmatprep.subr.bf16.mxu0 0
        %1476 = vmatpush1.bf16.msra.mxu0 %v790
        %1477 = vmatprep.subr.bf16.mxu0 0
        %1478 = vmatpush1.bf16.msra.mxu0 %v844
        %1479 = vmatprep.subr.bf16.mxu0 0
        %1480 = vmatpush1.bf16.msra.mxu0 0
        %1481 = vmatprep.subr.bf16.mxu0 0
        %1482 = vmatpush1.bf16.msra.mxu0 0
        %1483 = vmatprep.subr.bf16.mxu0 0
        %1484 = vmatpush1.bf16.msra.mxu0 0
        %1485 = vmatprep.subr.bf16.mxu0 0
        %1486 = vmatpush1.bf16.msra.mxu0 0
        %1487 = vmatprep.subr.bf16.mxu0 0
        %1488 = vmatpush1.bf16.msra.mxu0 0
        %1489 = vmatprep.subr.bf16.mxu0 0
        %1490 = vmatpush1.bf16.msra.mxu0 0
        %1491 = vmatprep.subr.bf16.mxu0 0
        %1492 = vmatpush1.bf16.msra.mxu0 0
        %1493 = vmatprep.subr.bf16.mxu0 0
        %1494 = vmatpush1.bf16.msra.mxu0 0
        %1495 = vmatprep.subr.bf16.mxu0 0
        %1496 = vmatpush1.bf16.msra.mxu0 0
        %1497 = vmatprep.subr.bf16.mxu0 0
        %1498 = vmatpush1.bf16.msra.mxu0 0
        %1499 = vmatprep.subr.bf16.mxu0 0
        %1500 = vmatpush1.bf16.msra.mxu0 0
        %1501 = vmatprep.subr.bf16.mxu0 0
        %1502 = vmatpush1.bf16.msra.mxu0 0
        %1503 = vmatprep.subr.bf16.mxu0 0
        %1504 = vmatpush1.bf16.msra.mxu0 0
        %1505 = vmatprep.subr.bf16.mxu0 0
        %1506 = vmatpush1.bf16.msra.mxu0 0
        %1507 = vmatprep.mubr.bf16.mxu0 0
        %1508 = vmatmul.mubr.bf16.gmra.mrb[0].mxu0 %v1431
        %v1509 = vpop.f32.mrb[0].mxu0
        %v1510 = vadd.f32 0.0, %v1509
        %v1511 = vpop.f32.mrb[0].mxu0
        %v1512 = vpop.f32.mrb[0].mxu0
        %v1513 = vadd.f32 0.0, %v1512
        %v1514 = vpop.f32.mrb[0].mxu0
        %1515 = vmatprep.mubr.bf16.mxu0 0
        %1516 = vmatmul.mubr.bf16.gmra.mrb[0].mxu0 %v1434
        %v1517 = vpop.f32.mrb[0].mxu0
        %v1518 = vadd.f32 0.0, %v1517
        %v1519 = vpop.f32.mrb[0].mxu0
        %v1520 = vpop.f32.mrb[0].mxu0
        %v1521 = vadd.f32 0.0, %v1520
        %v1522 = vpop.f32.mrb[0].mxu0
        %1523 = vmatprep.mubr.bf16.mxu0 0
        %1524 = vmatmul.mubr.bf16.gmra.mrb[0].mxu0 %v1437
        %v1525 = vpop.f32.mrb[0].mxu0
        %v1526 = vadd.f32 0.0, %v1525
        %v1527 = vpop.f32.mrb[0].mxu0
        %v1528 = vpop.f32.mrb[0].mxu0
        %v1529 = vadd.f32 0.0, %v1528
        %v1530 = vpop.f32.mrb[0].mxu0
        %1531 = vmatprep.mubr.bf16.mxu0 0
        %1532 = vmatmul.mubr.bf16.gmra.mrb[0].mxu0 %v1440
        %v1533 = vpop.f32.mrb[0].mxu0
        %v1534 = vadd.f32 0.0, %v1533
        %v1535 = vpop.f32.mrb[0].mxu0
        %v1536 = vpop.f32.mrb[0].mxu0
        %v1537 = vadd.f32 0.0, %v1536
        %v1538 = vpop.f32.mrb[0].mxu0
        %1539 = vmatprep.mubr.bf16.mxu0 0
        %1540 = vmatmul.mubr.bf16.gmra.mrb[0].mxu0 %v1443
        %v1541 = vpop.f32.mrb[0].mxu0
        %v1542 = vadd.f32 0.0, %v1541
        %v1543 = vpop.f32.mrb[0].mxu0
        %v1544 = vpop.f32.mrb[0].mxu0
        %v1545 = vadd.f32 0.0, %v1544
        %v1546 = vpop.f32.mrb[0].mxu0
        %1547 = vmatprep.mubr.bf16.mxu0 0
        %1548 = vmatmul.mubr.bf16.gmra.mrb[0].mxu0 %v1446
        %v1549 = vpop.f32.mrb[0].mxu0
        %v1550 = vadd.f32 0.0, %v1549
        %v1551 = vpop.f32.mrb[0].mxu0
        %v1552 = vpop.f32.mrb[0].mxu0
        %v1553 = vadd.f32 0.0, %v1552
        %v1554 = vpop.f32.mrb[0].mxu0
        %1555 = vmatprep.mubr.bf16.mxu0 0
        %1556 = vmatmul.mubr.bf16.gmra.mrb[0].mxu0 %v1449
        %v1557 = vpop.f32.mrb[0].mxu0
        %v1558 = vadd.f32 0.0, %v1557
        %v1559 = vpop.f32.mrb[0].mxu0
        %v1560 = vpop.f32.mrb[0].mxu0
        %v1561 = vadd.f32 0.0, %v1560
        %v1562 = vpop.f32.mrb[0].mxu0
        %1563 = vmatprep.mubr.bf16.mxu0 0
        %1564 = vmatmul.mubr.bf16.gmra.mrb[0].mxu0 %v1452
        %v1565 = vpop.f32.mrb[0].mxu0
        %v1566 = vadd.f32 0.0, %v1565
        %v1567 = vpop.f32.mrb[0].mxu0
        %v1568 = vpop.f32.mrb[0].mxu0
        %v1569 = vadd.f32 0.0, %v1568
        %v1570 = vpop.f32.mrb[0].mxu0
        %1571 = vmatprep.mubr.bf16.mxu0 0
        %1572 = vmatmul.mubr.bf16.gmra.mrb[0].mxu0 %v1455
        %v1573 = vpop.f32.mrb[0].mxu0
        %v1574 = vadd.f32 0.0, %v1573
        %v1575 = vpop.f32.mrb[0].mxu0
        %v1576 = vpop.f32.mrb[0].mxu0
        %v1577 = vadd.f32 0.0, %v1576
        %v1578 = vpop.f32.mrb[0].mxu0
        %1579 = vmatprep.mubr.bf16.mxu0 0
        %1580 = vmatmul.mubr.bf16.gmra.mrb[0].mxu0 %v1458
        %v1581 = vpop.f32.mrb[0].mxu0
        %v1582 = vadd.f32 0.0, %v1581
        %v1583 = vpop.f32.mrb[0].mxu0
        %v1584 = vpop.f32.mrb[0].mxu0
        %v1585 = vadd.f32 0.0, %v1584
        %v1586 = vpop.f32.mrb[0].mxu0
        %1587 = vmatprep.mubr.bf16.mxu0 0
        %1588 = vmatmul.mubr.bf16.gmra.mrb[0].mxu0 %v1461
        %v1589 = vpop.f32.mrb[0].mxu0
        %v1590 = vadd.f32 0.0, %v1589
        %v1591 = vpop.f32.mrb[0].mxu0
        %v1592 = vpop.f32.mrb[0].mxu0
        %v1593 = vadd.f32 0.0, %v1592
        %v1594 = vpop.f32.mrb[0].mxu0
        %1595 = vmatprep.mubr.bf16.mxu0 0
        %1596 = vmatmul.mubr.bf16.gmra.mrb[0].mxu0 %v1464
        %v1597 = vpop.f32.mrb[0].mxu0
        %v1598 = vadd.f32 0.0, %v1597
        %v1599 = vpop.f32.mrb[0].mxu0
        %v1600 = vpop.f32.mrb[0].mxu0
        %v1601 = vadd.f32 0.0, %v1600
        %v1602 = vpop.f32.mrb[0].mxu0
        %1603 = vmatprep.mubr.bf16.mxu0 0
        %1604 = vmatmul.mubr.bf16.gmra.mrb[0].mxu0 %v1467
        %v1605 = vpop.f32.mrb[0].mxu0
        %v1606 = vadd.f32 0.0, %v1605
        %v1607 = vpop.f32.mrb[0].mxu0
        %v1608 = vpop.f32.mrb[0].mxu0
        %v1609 = vadd.f32 0.0, %v1608
        %v1610 = vpop.f32.mrb[0].mxu0
        %1611 = vmatprep.mubr.bf16.mxu0 0
        %1612 = vmatmul.mubr.bf16.gmra.mrb[0].mxu0 %v1470
        %v1613 = vpop.f32.mrb[0].mxu0
        %v1614 = vadd.f32 0.0, %v1613
        %v1615 = vpop.f32.mrb[0].mxu0
        %v1616 = vpop.f32.mrb[0].mxu0
        %v1617 = vadd.f32 0.0, %v1616
        %v1618 = vpop.f32.mrb[0].mxu0
        %1619 = vmatprep.mubr.bf16.mxu0 0
        %1620 = vmatmul.mubr.bf16.gmra.mrb[0].mxu0 %v1473
        %v1621 = vpop.f32.mrb[0].mxu0
        %v1622 = vadd.f32 0.0, %v1621
        %v1623 = vpop.f32.mrb[0].mxu0
        %v1624 = vpop.f32.mrb[0].mxu0
        %v1625 = vpop.f32.mrb[0].mxu0
        %1626 = vdwg.mxu0
        %v1627 = vmax.f32 %v1298, %v1510
        %v1628 = vmax.f32 %v1299, %v1513
        %v1629 = vmax.f32 %v1300, %v1518
        %v1630 = vmax.f32 %v1301, %v1521
        %v1631 = vmax.f32 %v1302, %v1526
        %v1632 = vmax.f32 %v1303, %v1529
        %v1633 = vmax.f32 %v1304, %v1534
        %v1634 = vmax.f32 %v1305, %v1537
        %v1635 = vmax.f32 %v1306, %v1542
        %v1636 = vmax.f32 %v1307, %v1545
        %v1637 = vmax.f32 %v1308, %v1550
        %v1638 = vmax.f32 %v1309, %v1553
        %v1639 = vmax.f32 %v1310, %v1558
        %v1640 = vmax.f32 %v1311, %v1561
        %v1641 = vmax.f32 %v1312, %v1566
        %v1642 = vmax.f32 %v1313, %v1569
        %v1643 = vmax.f32 %v1314, %v1574
        %v1644 = vmax.f32 %v1315, %v1577
        %v1645 = vmax.f32 %v1316, %v1582
        %v1646 = vmax.f32 %v1317, %v1585
        %v1647 = vmax.f32 %v1318, %v1590
        %v1648 = vmax.f32 %v1319, %v1593
        %v1649 = vmax.f32 %v1320, %v1598
        %v1650 = vmax.f32 %v1321, %v1601
        %v1651 = vmax.f32 %v1322, %v1606
        %v1652 = vmax.f32 %v1323, %v1609
        %v1653 = vmax.f32 %v1324, %v1614
        %v1654 = vmax.f32 %v1325, %v1617
        %v1655 = vmax.f32 %v1326, %v1622
        %s1656 = scalar_lea.vmem %s647, 348 [#allocation2]
        %v1657 = vld [vmem:[%s1656] sm:$0xf]
        %v1658 = vld [vmem:[%s1656 + $0x4] sm:$0xf]
        %v1659 = vld [vmem:[%s1656 + $0x8] sm:$0xf]
        %v1660 = vld [vmem:[%s1656 + $0xc] sm:$0xf]
        %v1661 = vld [vmem:[%s1656 + $0x10] sm:$0xf]
        %v1662 = vld [vmem:[%s1656 + $0x14] sm:$0xf]
        %v1663 = vld [vmem:[%s1656 + $0x18] sm:$0xf]
        %v1664 = vld [vmem:[%s1656 + $0x1c] sm:$0xf]
        %v1665 = vld [vmem:[%s1656 + $0x20] sm:$0xf]
        %v1666 = vld [vmem:[%s1656 + $0x24] sm:$0xf]
        %v1667 = vld [vmem:[%s1656 + $0x28] sm:$0xf]
        %v1668 = vld [vmem:[%s1656 + $0x2c] sm:$0xf]
        %v1669 = vld [vmem:[%s1656 + $0x30] sm:$0xf]
        %v1670 = vld [vmem:[%s1656 + $0x34] sm:$0xf]
        %v1671 = vld [vmem:[%s1656 + $0x38] sm:$0xf]
        %v1672 = vld [vmem:[%s1656 + $0x3c] sm:$0xf]
        %v1673 = vld [vmem:[%s1656 + $0x40] sm:$0xf]
        %v1674 = vld [vmem:[%s1656 + $0x44] sm:$0xf]
        %v1675 = vld [vmem:[%s1656 + $0x48] sm:$0xf]
        %v1676 = vld [vmem:[%s1656 + $0x4c] sm:$0xf]
        %v1677 = vld [vmem:[%s1656 + $0x50] sm:$0xf]
        %v1678 = vld [vmem:[%s1656 + $0x54] sm:$0xf]
        %v1679 = vld [vmem:[%s1656 + $0x58] sm:$0xf]
        %v1680 = vld [vmem:[%s1656 + $0x5c] sm:$0xf]
        %v1681 = vld [vmem:[%s1656 + $0x60] sm:$0xf]
        %v1682 = vld [vmem:[%s1656 + $0x64] sm:$0xf]
        %v1683 = vld [vmem:[%s1656 + $0x68] sm:$0xf]
        %v1684 = vld [vmem:[%s1656 + $0x6c] sm:$0xf]
        %v1685 = vld [vmem:[%s1656 + $0x70] sm:$0xf]
        %v1715 = vunpack.c.l.b16 %v1657
        %v1716 = vunpack.c.l.b16 %v1658
        %v1717 = vunpack.c.l.b16 %v1659
        %v1718 = vunpack.c.l.b16 %v1660
        %v1719 = vunpack.c.l.b16 %v1661
        %v1720 = vunpack.c.l.b16 %v1662
        %v1721 = vunpack.c.l.b16 %v1663
        %v1722 = vunpack.c.l.b16 %v1664
        %v1723 = vunpack.c.l.b16 %v1665
        %v1724 = vunpack.c.l.b16 %v1666
        %v1725 = vunpack.c.l.b16 %v1667
        %v1726 = vunpack.c.l.b16 %v1668
        %v1727 = vunpack.c.l.b16 %v1669
        %v1728 = vunpack.c.l.b16 %v1670
        %v1729 = vunpack.c.l.b16 %v1671
        %v1730 = vunpack.c.l.b16 %v1672
        %v1731 = vunpack.c.l.b16 %v1673
        %v1732 = vunpack.c.l.b16 %v1674
        %v1733 = vunpack.c.l.b16 %v1675
        %v1734 = vunpack.c.l.b16 %v1676
        %v1735 = vunpack.c.l.b16 %v1677
        %v1736 = vunpack.c.l.b16 %v1678
        %v1737 = vunpack.c.l.b16 %v1679
        %v1738 = vunpack.c.l.b16 %v1680
        %v1739 = vunpack.c.l.b16 %v1681
        %v1740 = vunpack.c.l.b16 %v1682
        %v1741 = vunpack.c.l.b16 %v1683
        %v1742 = vunpack.c.l.b16 %v1684
        %v1743 = vunpack.c.l.b16 %v1685
        %v1744 = vpack.c.b16 %v1716, %v1715
        %v1745 = vpack.c.b16 %v1718, %v1717
        %v1746 = vpack.c.b16 %v1720, %v1719
        %v1747 = vpack.c.b16 %v1722, %v1721
        %v1748 = vpack.c.b16 %v1724, %v1723
        %v1749 = vpack.c.b16 %v1726, %v1725
        %v1750 = vpack.c.b16 %v1728, %v1727
        %v1751 = vpack.c.b16 %v1730, %v1729
        %v1752 = vpack.c.b16 %v1732, %v1731
        %v1753 = vpack.c.b16 %v1734, %v1733
        %v1754 = vpack.c.b16 %v1736, %v1735
        %v1755 = vpack.c.b16 %v1738, %v1737
        %v1756 = vpack.c.b16 %v1740, %v1739
        %v1757 = vpack.c.b16 %v1742, %v1741
        %v1758 = vpack.c.b16 %v1743, %v1743
        %v1760 = vsel %vm793, %v1744, 0
        %v1763 = vsel %vm793, %v1745, 0
        %v1766 = vsel %vm793, %v1746, 0
        %v1769 = vsel %vm793, %v1747, 0
        %v1772 = vsel %vm793, %v1748, 0
        %v1775 = vsel %vm793, %v1749, 0
        %v1778 = vsel %vm793, %v1750, 0
        %v1781 = vsel %vm793, %v1751, 0
        %v1784 = vsel %vm793, %v1752, 0
        %v1787 = vsel %vm793, %v1753, 0
        %v1790 = vsel %vm793, %v1754, 0
        %v1793 = vsel %vm793, %v1755, 0
        %v1796 = vsel %vm793, %v1756, 0
        %v1799 = vsel %vm793, %v1757, 0
        %v1802 = vsel %vm793, %v1758, 0
        %1804 = vmatprep.subr.bf16.mxu0 0
        %1805 = vmatpush1.bf16.msra.mxu0 %v790
        %1806 = vmatprep.subr.bf16.mxu0 0
        %1807 = vmatpush1.bf16.msra.mxu0 %v844
        %1808 = vmatprep.subr.bf16.mxu0 0
        %1809 = vmatpush1.bf16.msra.mxu0 0
        %1810 = vmatprep.subr.bf16.mxu0 0
        %1811 = vmatpush1.bf16.msra.mxu0 0
        %1812 = vmatprep.subr.bf16.mxu0 0
        %1813 = vmatpush1.bf16.msra.mxu0 0
        %1814 = vmatprep.subr.bf16.mxu0 0
        %1815 = vmatpush1.bf16.msra.mxu0 0
        %1816 = vmatprep.subr.bf16.mxu0 0
        %1817 = vmatpush1.bf16.msra.mxu0 0
        %1818 = vmatprep.subr.bf16.mxu0 0
        %1819 = vmatpush1.bf16.msra.mxu0 0
        %1820 = vmatprep.subr.bf16.mxu0 0
        %1821 = vmatpush1.bf16.msra.mxu0 0
        %1822 = vmatprep.subr.bf16.mxu0 0
        %1823 = vmatpush1.bf16.msra.mxu0 0
        %1824 = vmatprep.subr.bf16.mxu0 0
        %1825 = vmatpush1.bf16.msra.mxu0 0
        %1826 = vmatprep.subr.bf16.mxu0 0
        %1827 = vmatpush1.bf16.msra.mxu0 0
        %1828 = vmatprep.subr.bf16.mxu0 0
        %1829 = vmatpush1.bf16.msra.mxu0 0
        %1830 = vmatprep.subr.bf16.mxu0 0
        %1831 = vmatpush1.bf16.msra.mxu0 0
        %1832 = vmatprep.subr.bf16.mxu0 0
        %1833 = vmatpush1.bf16.msra.mxu0 0
        %1834 = vmatprep.subr.bf16.mxu0 0
        %1835 = vmatpush1.bf16.msra.mxu0 0
        %1836 = vmatprep.mubr.bf16.mxu0 0
        %1837 = vmatmul.mubr.bf16.gmra.mrb[0].mxu0 %v1760
        %v1838 = vpop.f32.mrb[0].mxu0
        %v1839 = vadd.f32 0.0, %v1838
        %v1840 = vpop.f32.mrb[0].mxu0
        %v1841 = vpop.f32.mrb[0].mxu0
        %v1842 = vadd.f32 0.0, %v1841
        %v1843 = vpop.f32.mrb[0].mxu0
        %1844 = vmatprep.mubr.bf16.mxu0 0
        %1845 = vmatmul.mubr.bf16.gmra.mrb[0].mxu0 %v1763
        %v1846 = vpop.f32.mrb[0].mxu0
        %v1847 = vadd.f32 0.0, %v1846
        %v1848 = vpop.f32.mrb[0].mxu0
        %v1849 = vpop.f32.mrb[0].mxu0
        %v1850 = vadd.f32 0.0, %v1849
        %v1851 = vpop.f32.mrb[0].mxu0
        %1852 = vmatprep.mubr.bf16.mxu0 0
        %1853 = vmatmul.mubr.bf16.gmra.mrb[0].mxu0 %v1766
        %v1854 = vpop.f32.mrb[0].mxu0
        %v1855 = vadd.f32 0.0, %v1854
        %v1856 = vpop.f32.mrb[0].mxu0
        %v1857 = vpop.f32.mrb[0].mxu0
        %v1858 = vadd.f32 0.0, %v1857
        %v1859 = vpop.f32.mrb[0].mxu0
        %1860 = vmatprep.mubr.bf16.mxu0 0
        %1861 = vmatmul.mubr.bf16.gmra.mrb[0].mxu0 %v1769
        %v1862 = vpop.f32.mrb[0].mxu0
        %v1863 = vadd.f32 0.0, %v1862
        %v1864 = vpop.f32.mrb[0].mxu0
        %v1865 = vpop.f32.mrb[0].mxu0
        %v1866 = vadd.f32 0.0, %v1865
        %v1867 = vpop.f32.mrb[0].mxu0
        %1868 = vmatprep.mubr.bf16.mxu0 0
        %1869 = vmatmul.mubr.bf16.gmra.mrb[0].mxu0 %v1772
        %v1870 = vpop.f32.mrb[0].mxu0
        %v1871 = vadd.f32 0.0, %v1870
        %v1872 = vpop.f32.mrb[0].mxu0
        %v1873 = vpop.f32.mrb[0].mxu0
        %v1874 = vadd.f32 0.0, %v1873
        %v1875 = vpop.f32.mrb[0].mxu0
        %1876 = vmatprep.mubr.bf16.mxu0 0
        %1877 = vmatmul.mubr.bf16.gmra.mrb[0].mxu0 %v1775
        %v1878 = vpop.f32.mrb[0].mxu0
        %v1879 = vadd.f32 0.0, %v1878
        %v1880 = vpop.f32.mrb[0].mxu0
        %v1881 = vpop.f32.mrb[0].mxu0
        %v1882 = vadd.f32 0.0, %v1881
        %v1883 = vpop.f32.mrb[0].mxu0
        %1884 = vmatprep.mubr.bf16.mxu0 0
        %1885 = vmatmul.mubr.bf16.gmra.mrb[0].mxu0 %v1778
        %v1886 = vpop.f32.mrb[0].mxu0
        %v1887 = vadd.f32 0.0, %v1886
        %v1888 = vpop.f32.mrb[0].mxu0
        %v1889 = vpop.f32.mrb[0].mxu0
        %v1890 = vadd.f32 0.0, %v1889
        %v1891 = vpop.f32.mrb[0].mxu0
        %1892 = vmatprep.mubr.bf16.mxu0 0
        %1893 = vmatmul.mubr.bf16.gmra.mrb[0].mxu0 %v1781
        %v1894 = vpop.f32.mrb[0].mxu0
        %v1895 = vadd.f32 0.0, %v1894
        %v1896 = vpop.f32.mrb[0].mxu0
        %v1897 = vpop.f32.mrb[0].mxu0
        %v1898 = vadd.f32 0.0, %v1897
        %v1899 = vpop.f32.mrb[0].mxu0
        %1900 = vmatprep.mubr.bf16.mxu0 0
        %1901 = vmatmul.mubr.bf16.gmra.mrb[0].mxu0 %v1784
        %v1902 = vpop.f32.mrb[0].mxu0
        %v1903 = vadd.f32 0.0, %v1902
        %v1904 = vpop.f32.mrb[0].mxu0
        %v1905 = vpop.f32.mrb[0].mxu0
        %v1906 = vadd.f32 0.0, %v1905
        %v1907 = vpop.f32.mrb[0].mxu0
        %1908 = vmatprep.mubr.bf16.mxu0 0
        %1909 = vmatmul.mubr.bf16.gmra.mrb[0].mxu0 %v1787
        %v1910 = vpop.f32.mrb[0].mxu0
        %v1911 = vadd.f32 0.0, %v1910
        %v1912 = vpop.f32.mrb[0].mxu0
        %v1913 = vpop.f32.mrb[0].mxu0
        %v1914 = vadd.f32 0.0, %v1913
        %v1915 = vpop.f32.mrb[0].mxu0
        %1916 = vmatprep.mubr.bf16.mxu0 0
        %1917 = vmatmul.mubr.bf16.gmra.mrb[0].mxu0 %v1790
        %v1918 = vpop.f32.mrb[0].mxu0
        %v1919 = vadd.f32 0.0, %v1918
        %v1920 = vpop.f32.mrb[0].mxu0
        %v1921 = vpop.f32.mrb[0].mxu0
        %v1922 = vadd.f32 0.0, %v1921
        %v1923 = vpop.f32.mrb[0].mxu0
        %1924 = vmatprep.mubr.bf16.mxu0 0
        %1925 = vmatmul.mubr.bf16.gmra.mrb[0].mxu0 %v1793
        %v1926 = vpop.f32.mrb[0].mxu0
        %v1927 = vadd.f32 0.0, %v1926
        %v1928 = vpop.f32.mrb[0].mxu0
        %v1929 = vpop.f32.mrb[0].mxu0
        %v1930 = vadd.f32 0.0, %v1929
        %v1931 = vpop.f32.mrb[0].mxu0
        %1932 = vmatprep.mubr.bf16.mxu0 0
        %1933 = vmatmul.mubr.bf16.gmra.mrb[0].mxu0 %v1796
        %v1934 = vpop.f32.mrb[0].mxu0
        %v1935 = vadd.f32 0.0, %v1934
        %v1936 = vpop.f32.mrb[0].mxu0
        %v1937 = vpop.f32.mrb[0].mxu0
        %v1938 = vadd.f32 0.0, %v1937
        %v1939 = vpop.f32.mrb[0].mxu0
        %1940 = vmatprep.mubr.bf16.mxu0 0
        %1941 = vmatmul.mubr.bf16.gmra.mrb[0].mxu0 %v1799
        %v1942 = vpop.f32.mrb[0].mxu0
        %v1943 = vadd.f32 0.0, %v1942
        %v1944 = vpop.f32.mrb[0].mxu0
        %v1945 = vpop.f32.mrb[0].mxu0
        %v1946 = vadd.f32 0.0, %v1945
        %v1947 = vpop.f32.mrb[0].mxu0
        %1948 = vmatprep.mubr.bf16.mxu0 0
        %1949 = vmatmul.mubr.bf16.gmra.mrb[0].mxu0 %v1802
        %v1950 = vpop.f32.mrb[0].mxu0
        %v1951 = vadd.f32 0.0, %v1950
        %v1952 = vpop.f32.mrb[0].mxu0
        %v1953 = vpop.f32.mrb[0].mxu0
        %v1954 = vpop.f32.mrb[0].mxu0
        %1955 = vdwg.mxu0
        %v1956 = vmax.f32 %v1627, %v1839
        %v1957 = vmax.f32 %v1628, %v1842
        %v1958 = vmax.f32 %v1629, %v1847
        %v1959 = vmax.f32 %v1630, %v1850
        %v1960 = vmax.f32 %v1631, %v1855
        %v1961 = vmax.f32 %v1632, %v1858
        %v1962 = vmax.f32 %v1633, %v1863
        %v1963 = vmax.f32 %v1634, %v1866
        %v1964 = vmax.f32 %v1635, %v1871
        %v1965 = vmax.f32 %v1636, %v1874
        %v1966 = vmax.f32 %v1637, %v1879
        %v1967 = vmax.f32 %v1638, %v1882
        %v1968 = vmax.f32 %v1639, %v1887
        %v1969 = vmax.f32 %v1640, %v1890
        %v1970 = vmax.f32 %v1641, %v1895
        %v1971 = vmax.f32 %v1642, %v1898
        %v1972 = vmax.f32 %v1643, %v1903
        %v1973 = vmax.f32 %v1644, %v1906
        %v1974 = vmax.f32 %v1645, %v1911
        %v1975 = vmax.f32 %v1646, %v1914
        %v1976 = vmax.f32 %v1647, %v1919
        %v1977 = vmax.f32 %v1648, %v1922
        %v1978 = vmax.f32 %v1649, %v1927
        %v1979 = vmax.f32 %v1650, %v1930
        %v1980 = vmax.f32 %v1651, %v1935
        %v1981 = vmax.f32 %v1652, %v1938
        %v1982 = vmax.f32 %v1653, %v1943
        %v1983 = vmax.f32 %v1654, %v1946
        %v1984 = vmax.f32 %v1655, %v1951
        %v1985 = vld [vmem:[%s2] sm:$0x1]
        %v1987 = vlaneseq
        %v1988 = vshrl.u32 %v1987, 7
        %v1989 = vsub.s32 0, %v1988
        %v1990 = vrot.slane %v1985, %v1989
        %v1992 = vadd.f32 %v1956, %v1990
        %v1993 = vadd.f32 %v1957, %v1990
        %v1994 = vadd.f32 %v1958, %v1990
        %v1995 = vadd.f32 %v1959, %v1990
        %v1996 = vadd.f32 %v1960, %v1990
        %v1997 = vadd.f32 %v1961, %v1990
        %v1998 = vadd.f32 %v1962, %v1990
        %v1999 = vadd.f32 %v1963, %v1990
        %v2000 = vadd.f32 %v1964, %v1990
        %v2001 = vadd.f32 %v1965, %v1990
        %v2002 = vadd.f32 %v1966, %v1990
        %v2003 = vadd.f32 %v1967, %v1990
        %v2004 = vadd.f32 %v1968, %v1990
        %v2005 = vadd.f32 %v1969, %v1990
        %v2006 = vadd.f32 %v1970, %v1990
        %v2007 = vadd.f32 %v1971, %v1990
        %v2008 = vadd.f32 %v1972, %v1990
        %v2009 = vadd.f32 %v1973, %v1990
        %v2010 = vadd.f32 %v1974, %v1990
        %v2011 = vadd.f32 %v1975, %v1990
        %v2012 = vadd.f32 %v1976, %v1990
        %v2013 = vadd.f32 %v1977, %v1990
        %v2014 = vadd.f32 %v1978, %v1990
        %v2015 = vadd.f32 %v1979, %v1990
        %v2016 = vadd.f32 %v1980, %v1990
        %v2017 = vadd.f32 %v1981, %v1990
        %v2018 = vadd.f32 %v1982, %v1990
        %v2019 = vadd.f32 %v1983, %v1990
        %v2020 = vadd.f32 %v1984, %v1990
        %v2021 = vmax.f32 %v1992, 0.0
        %v2022 = vmax.f32 %v1993, 0.0
        %v2023 = vmax.f32 %v1994, 0.0
        %v2024 = vmax.f32 %v1995, 0.0
        %v2025 = vmax.f32 %v1996, 0.0
        %v2026 = vmax.f32 %v1997, 0.0
        %v2027 = vmax.f32 %v1998, 0.0
        %v2028 = vmax.f32 %v1999, 0.0
        %v2029 = vmax.f32 %v2000, 0.0
        %v2030 = vmax.f32 %v2001, 0.0
        %v2031 = vmax.f32 %v2002, 0.0
        %v2032 = vmax.f32 %v2003, 0.0
        %v2033 = vmax.f32 %v2004, 0.0
        %v2034 = vmax.f32 %v2005, 0.0
        %v2035 = vmax.f32 %v2006, 0.0
        %v2036 = vmax.f32 %v2007, 0.0
        %v2037 = vmax.f32 %v2008, 0.0
        %v2038 = vmax.f32 %v2009, 0.0
        %v2039 = vmax.f32 %v2010, 0.0
        %v2040 = vmax.f32 %v2011, 0.0
        %v2041 = vmax.f32 %v2012, 0.0
        %v2042 = vmax.f32 %v2013, 0.0
        %v2043 = vmax.f32 %v2014, 0.0
        %v2044 = vmax.f32 %v2015, 0.0
        %v2045 = vmax.f32 %v2016, 0.0
        %v2046 = vmax.f32 %v2017, 0.0
        %v2047 = vmax.f32 %v2018, 0.0
        %v2048 = vmax.f32 %v2019, 0.0
        %v2049 = vmax.f32 %v2020, 0.0
        %v2050 = vpack.c.bf16 %v2022, %v2021
        %v2051 = vpack.c.bf16 %v2024, %v2023
        %v2052 = vpack.c.bf16 %v2026, %v2025
        %v2053 = vpack.c.bf16 %v2028, %v2027
        %v2054 = vpack.c.bf16 %v2030, %v2029
        %v2055 = vpack.c.bf16 %v2032, %v2031
        %v2056 = vpack.c.bf16 %v2034, %v2033
        %v2057 = vpack.c.bf16 %v2036, %v2035
        %v2058 = vpack.c.bf16 %v2038, %v2037
        %v2059 = vpack.c.bf16 %v2040, %v2039
        %v2060 = vpack.c.bf16 %v2042, %v2041
        %v2061 = vpack.c.bf16 %v2044, %v2043
        %v2062 = vpack.c.bf16 %v2046, %v2045
        %v2063 = vpack.c.bf16 %v2048, %v2047
        %v2064 = vpack.c.bf16 %v2049, %v2049
        %v2080 = vunpack.c.l.b16 %v2050
        %v2081 = vunpack.c.h.b16 %v2050
        %v2082 = vunpack.c.l.b16 %v2051
        %v2083 = vunpack.c.h.b16 %v2051
        %v2084 = vunpack.c.l.b16 %v2052
        %v2085 = vunpack.c.h.b16 %v2052
        %v2086 = vunpack.c.l.b16 %v2053
        %v2087 = vunpack.c.h.b16 %v2053
        %v2088 = vunpack.c.l.b16 %v2054
        %v2089 = vunpack.c.h.b16 %v2054
        %v2090 = vunpack.c.l.b16 %v2055
        %v2091 = vunpack.c.h.b16 %v2055
        %v2092 = vunpack.c.l.b16 %v2056
        %v2093 = vunpack.c.h.b16 %v2056
        %v2094 = vunpack.c.l.b16 %v2057
        %v2095 = vunpack.c.h.b16 %v2057
        %v2096 = vunpack.c.l.b16 %v2058
        %v2097 = vunpack.c.h.b16 %v2058
        %v2098 = vunpack.c.l.b16 %v2059
        %v2099 = vunpack.c.h.b16 %v2059
        %v2100 = vunpack.c.l.b16 %v2060
        %v2101 = vunpack.c.h.b16 %v2060
        %v2102 = vunpack.c.l.b16 %v2061
        %v2103 = vunpack.c.h.b16 %v2061
        %v2104 = vunpack.c.l.b16 %v2062
        %v2105 = vunpack.c.h.b16 %v2062
        %v2106 = vunpack.c.l.b16 %v2063
        %v2107 = vunpack.c.h.b16 %v2063
        %v2108 = vunpack.c.l.b16 %v2064
        %v2109 = vpack.c.b16 %v2080, %v2080
        %v2110 = vpack.c.b16 %v2081, %v2081
        %v2111 = vpack.c.b16 %v2082, %v2082
        %v2112 = vpack.c.b16 %v2083, %v2083
        %v2113 = vpack.c.b16 %v2084, %v2084
        %v2114 = vpack.c.b16 %v2085, %v2085
        %v2115 = vpack.c.b16 %v2086, %v2086
        %v2116 = vpack.c.b16 %v2087, %v2087
        %v2117 = vpack.c.b16 %v2088, %v2088
        %v2118 = vpack.c.b16 %v2089, %v2089
        %v2119 = vpack.c.b16 %v2090, %v2090
        %v2120 = vpack.c.b16 %v2091, %v2091
        %v2121 = vpack.c.b16 %v2092, %v2092
        %v2122 = vpack.c.b16 %v2093, %v2093
        %v2123 = vpack.c.b16 %v2094, %v2094
        %v2124 = vpack.c.b16 %v2095, %v2095
        %v2125 = vpack.c.b16 %v2096, %v2096
        %v2126 = vpack.c.b16 %v2097, %v2097
        %v2127 = vpack.c.b16 %v2098, %v2098
        %v2128 = vpack.c.b16 %v2099, %v2099
        %v2129 = vpack.c.b16 %v2100, %v2100
        %v2130 = vpack.c.b16 %v2101, %v2101
        %v2131 = vpack.c.b16 %v2102, %v2102
        %v2132 = vpack.c.b16 %v2103, %v2103
        %v2133 = vpack.c.b16 %v2104, %v2104
        %v2134 = vpack.c.b16 %v2105, %v2105
        %v2135 = vpack.c.b16 %v2106, %v2106
        %v2136 = vpack.c.b16 %v2107, %v2107
        %v2137 = vpack.c.b16 %v2108, %v2108
        %2167 = vst [vmem:[%s673] sm:$0xf] %v2109
        %2168 = vst [vmem:[%s673 + $0x4] sm:$0xf] %v2110
        %2169 = vst [vmem:[%s673 + $0x8] sm:$0xf] %v2111
        %2170 = vst [vmem:[%s673 + $0xc] sm:$0xf] %v2112
        %2171 = vst [vmem:[%s673 + $0x10] sm:$0xf] %v2113
        %2172 = vst [vmem:[%s673 + $0x14] sm:$0xf] %v2114
        %2173 = vst [vmem:[%s673 + $0x18] sm:$0xf] %v2115
        %2174 = vst [vmem:[%s673 + $0x1c] sm:$0xf] %v2116
        %2175 = vst [vmem:[%s673 + $0x20] sm:$0xf] %v2117
        %2176 = vst [vmem:[%s673 + $0x24] sm:$0xf] %v2118
        %2177 = vst [vmem:[%s673 + $0x28] sm:$0xf] %v2119
        %2178 = vst [vmem:[%s673 + $0x2c] sm:$0xf] %v2120
        %2179 = vst [vmem:[%s673 + $0x30] sm:$0xf] %v2121
        %2180 = vst [vmem:[%s673 + $0x34] sm:$0xf] %v2122
        %2181 = vst [vmem:[%s673 + $0x38] sm:$0xf] %v2123
        %2182 = vst [vmem:[%s673 + $0x3c] sm:$0xf] %v2124
        %2183 = vst [vmem:[%s673 + $0x40] sm:$0xf] %v2125
        %2184 = vst [vmem:[%s673 + $0x44] sm:$0xf] %v2126
        %2185 = vst [vmem:[%s673 + $0x48] sm:$0xf] %v2127
        %2186 = vst [vmem:[%s673 + $0x4c] sm:$0xf] %v2128
        %2187 = vst [vmem:[%s673 + $0x50] sm:$0xf] %v2129
        %2188 = vst [vmem:[%s673 + $0x54] sm:$0xf] %v2130
        %2189 = vst [vmem:[%s673 + $0x58] sm:$0xf] %v2131
        %2190 = vst [vmem:[%s673 + $0x5c] sm:$0xf] %v2132
        %2191 = vst [vmem:[%s673 + $0x60] sm:$0xf] %v2133
        %2192 = vst [vmem:[%s673 + $0x64] sm:$0xf] %v2134
        %2193 = vst [vmem:[%s673 + $0x68] sm:$0xf] %v2135
        %2194 = vst [vmem:[%s673 + $0x6c] sm:$0xf] %v2136
        %2195 = vst [vmem:[%s673 + $0x70] sm:$0xf] %v2137
        %s2196 = smul.u32 29, %s14
        %p2197 = scmp.lt.s32.totalorder %s2196, 57
        %s2198 = scalar_select %p2197, %s2196, 57
        %s2199 = smul.addr %s2198, 4
        %s2200 = scalar_lea.vmem %s3, %s2199
        // Predicated region
        $region74: #{simple_cnn_forward.3} parent=68 // pred_check
          %p2201 = pneg %p100
        $region75: #{simple_cnn_forward.3} parent=68 // pred_check_branch
          %2203 = sbr.rel (%p2201) target = $region77
        $region76: #{simple_cnn_forward.3} parent=68 // pred_region
          %s2204 = smul.u32 29, %s14
        $region77: #{simple_cnn_forward.3} parent=68 // pred_fallthru
          _
      $region69: #{simple_cnn_forward.3} parent=5 // pred_fallthru
        _
      %p2205 = scmp.le.s32.totalorder 2, %s9
      // Predicated region
      $region78: #{simple_cnn_forward.3} parent=5 // pred_check
        %p2206 = pneg %p2205
      $region79: #{simple_cnn_forward.3} parent=5 // pred_check_branch
        %2208 = sbr.rel (%p2206) target = $region81
      $region80: #{simple_cnn_forward.3} parent=5 // pred_region
        %s2209 = ssub.s32 %s9, 2
        // Predicated region
        $region82: #{simple_cnn_forward.3} parent=80 // pred_check
          %p2210 = pneg %p106
        $region83: #{simple_cnn_forward.3} parent=80 // pred_check_branch
          %2212 = sbr.rel (%p2210) target = $region85
        $region84: #{simple_cnn_forward.3} parent=80 // pred_region
          %s2213 = smul.u32 29, %s15
          %p2214 = scmp.lt.s32.totalorder %s2213, 57
          %s2215 = scalar_select %p2214, %s2213, 57
          %s2216 = smul.addr %s2215, 4
          %s2217 = scalar_lea.vmem %s3, %s2216
        $region85: #{simple_cnn_forward.3} parent=80 // pred_fallthru
          _
      $region81: #{simple_cnn_forward.3} parent=5 // pred_fallthru
        _
    $region6: #{simple_cnn_forward.3} parent=1 // loop_footer
      %s13 = sadd.s32 1, %s9
    $region7: #{simple_cnn_forward.3} parent=1 // loop_footer_branch
      %8 = sbr.rel target = $region3
    $region8: #{simple_cnn_forward.3} parent=1 // loop_exit
      _

// kernel: simple_cnn_forward.4
$region0: #{simple_cnn_forward.4}
  #allocation0 [shape = 'u32[]', space=smem, size = 0x4, offset = 0x4, fixed_abs, tag = 'smem constant byte address 0x4 - core index']
  #allocation1 [shape = 'u32[144,128]{1,0:T(1,128)}', space=vmem, size = 0x12000, scoped, tag = 'internal scratch']
  %s0 = inlined_call_operand.vmem [shape: bf16[4,80,288], index: 0, kind: input, shape index: {}]
  %s1 = inlined_call_operand.vmem [shape: bf16[288,128], index: 1, kind: input, shape index: {}]
  %s2 = inlined_call_operand.vmem [shape: f32[1,128], index: 2, kind: input, shape index: {}]
  %s3 = inlined_call_operand.vmem [shape: bf16[80,128], index: 3, kind: output, shape index: {}]
  %s4 = sld [smem:[#allocation0]]
  $region71: #{simple_cnn_forward.4} parent=0
    _
  %s6 = ssub.s32 1, %s4
  %s7 = scalar_select 0, %s6, %s4
  $region1: #{simple_cnn_forward.4} parent=0
    #allocation2 [shape = 'u8[245760]{0}', space=vmem, size = 0x3c000, scoped, tag = 'input window, operand 0']
    loop: start=0, step=1, limit=4
    $region2: #{simple_cnn_forward.4} parent=1 // loop_pre_header
      _
    $region3: #{simple_cnn_forward.4} parent=1 // loop_header
      %s9 = sphi 0, %s13
      %p10 = scmp.ge.s32.totalorder %s9, 4
      %s19 = sphi 0, %s21
      %s22 = sphi 0, %s19
      %s23 = sphi 0, %s22
      %s39 = sphi 0, %s23
      %s43 = sphi 0, %s43
      %s45 = sphi 0, %s43
      %s46 = sphi 0, %s45
      %s60 = sphi 0, %s46
      %s64 = sphi 0, %s64
      %s66 = sphi 0, %s64
      %s67 = sphi 0, %s66
      %s81 = sphi 0, %s67
      %s87 = sphi 0, %s89
      %s90 = sphi 0, %s87
      %s91 = sphi 0, %s90
      %s107 = sphi 0, %s91
    $region4: #{simple_cnn_forward.4} parent=1 // loop_header_branch
      %12 = sbr.rel (%p10) target = $region8
    $region5: #{simple_cnn_forward.4} parent=1 // loop_body
      %s14 = ssub.s32 %s9, 1
      %s15 = ssub.s32 %s9, 2
      %s16 = sadd.s32 %s9, 1
      %s17 = ssub.s32 %s9, %s16
      %p18 = scmp.eq.s32.totalorder %s17, 0
      %s20 = sadd.s32 %s19, 1
      %s21 = scalar_select %p18, %s19, %s20
      %p24 = pneg %p18
      %p25 = scmp.eq.s32.totalorder %s9, 1
      %p26 = por %p24, %p25
      %p27 = scmp.ne.s32.totalorder %s19, %s22
      %p28 = scmp.eq.s32.totalorder %s9, 0
      %p29 = por %p27, %p28
      %p30 = scmp.ne.s32.totalorder %s19, %s22
      %p31 = scmp.eq.s32.totalorder %s14, 1
      %p32 = por %p30, %p31
      %p33 = scmp.ne.s32.totalorder %s22, %s23
      %p34 = scmp.eq.s32.totalorder %s14, 0
      %p35 = por %p33, %p34
      %p36 = scmp.ne.s32.totalorder %s22, %s23
      %p37 = scmp.eq.s32.totalorder %s15, 1
      %p38 = por %p36, %p37
      %p40 = scmp.ne.s32.totalorder %s23, %s39
      %p41 = scmp.eq.s32.totalorder %s15, 0
      %p42 = por %p40, %p41
      %s44 = sadd.s32 %s43, 1
      %p47 = scmp.eq.s32.totalorder %s9, 1
      %p48 = scmp.ne.s32.totalorder %s43, %s45
      %p49 = scmp.eq.s32.totalorder %s9, 0
      %p50 = por %p48, %p49
      %p51 = scmp.ne.s32.totalorder %s43, %s45
      %p52 = scmp.eq.s32.totalorder %s14, 1
      %p53 = por %p51, %p52
      %p54 = scmp.ne.s32.totalorder %s45, %s46
      %p55 = scmp.eq.s32.totalorder %s14, 0
      %p56 = por %p54, %p55
      %p57 = scmp.ne.s32.totalorder %s45, %s46
      %p58 = scmp.eq.s32.totalorder %s15, 1
      %p59 = por %p57, %p58
      %p61 = scmp.ne.s32.totalorder %s46, %s60
      %p62 = scmp.eq.s32.totalorder %s15, 0
      %p63 = por %p61, %p62
      %s65 = sadd.s32 %s64, 1
      %p68 = scmp.eq.s32.totalorder %s9, 1
      %p69 = scmp.ne.s32.totalorder %s64, %s66
      %p70 = scmp.eq.s32.totalorder %s9, 0
      %p71 = por %p69, %p70
      %p72 = scmp.ne.s32.totalorder %s64, %s66
      %p73 = scmp.eq.s32.totalorder %s14, 1
      %p74 = por %p72, %p73
      %p75 = scmp.ne.s32.totalorder %s66, %s67
      %p76 = scmp.eq.s32.totalorder %s14, 0
      %p77 = por %p75, %p76
      %p78 = scmp.ne.s32.totalorder %s66, %s67
      %p79 = scmp.eq.s32.totalorder %s15, 1
      %p80 = por %p78, %p79
      %p82 = scmp.ne.s32.totalorder %s67, %s81
      %p83 = scmp.eq.s32.totalorder %s15, 0
      %p84 = por %p82, %p83
      %s85 = ssub.s32 %s9, %s16
      %p86 = scmp.eq.s32.totalorder %s85, 0
      %s88 = sadd.s32 %s87, 1
      %s89 = scalar_select %p86, %s87, %s88
      %p92 = pneg %p86
      %p93 = scmp.eq.s32.totalorder %s9, 1
      %p94 = por %p92, %p93
      %p95 = scmp.ne.s32.totalorder %s87, %s90
      %p96 = scmp.eq.s32.totalorder %s9, 0
      %p97 = por %p95, %p96
      %p98 = scmp.ne.s32.totalorder %s87, %s90
      %p99 = scmp.eq.s32.totalorder %s14, 1
      %p100 = por %p98, %p99
      %p101 = scmp.ne.s32.totalorder %s90, %s91
      %p102 = scmp.eq.s32.totalorder %s14, 0
      %p103 = por %p101, %p102
      %p104 = scmp.ne.s32.totalorder %s90, %s91
      %p105 = scmp.eq.s32.totalorder %s15, 1
      %p106 = por %p104, %p105
      %p108 = scmp.ne.s32.totalorder %s91, %s107
      %p109 = scmp.eq.s32.totalorder %s15, 0
      %p110 = por %p108, %p109
      %p111 = scmp.le.s32.totalorder 1, %s9
      %p112 = scmp.lt.s32.totalorder %s9, 3
      %p113 = pnand %p111, %p112
      %p114 = pneg %p113
      // Predicated region
      $region9: #{simple_cnn_forward.4} parent=5 // pred_check
        _
      $region10: #{simple_cnn_forward.4} parent=5 // pred_check_branch
        %116 = sbr.rel (%p113) target = $region12
      $region11: #{simple_cnn_forward.4} parent=5 // pred_region
        %s117 = ssub.s32 %s9, 1
        // Predicated region
        $region13: #{simple_cnn_forward.4} parent=11 // pred_check
          %p118 = pneg %p56
        $region14: #{simple_cnn_forward.4} parent=11 // pred_check_branch
          %120 = sbr.rel (%p118) target = $region16
        $region15: #{simple_cnn_forward.4} parent=11 // pred_region
          _
        $region16: #{simple_cnn_forward.4} parent=11 // pred_fallthru
          _
        // Predicated region
        $region17: #{simple_cnn_forward.4} parent=11 // pred_check
          %p121 = pneg %p77
        $region18: #{simple_cnn_forward.4} parent=11 // pred_check_branch
          %123 = sbr.rel (%p121) target = $region20
        $region19: #{simple_cnn_forward.4} parent=11 // pred_region
          _
        $region20: #{simple_cnn_forward.4} parent=11 // pred_fallthru
          _
      $region12: #{simple_cnn_forward.4} parent=5 // pred_fallthru
        _
      %p124 = scmp.lt.s32.totalorder %s9, 2
      // Predicated region
      $region21: #{simple_cnn_forward.4} parent=5 // pred_check
        %p125 = pneg %p124
      $region22: #{simple_cnn_forward.4} parent=5 // pred_check_branch
        %127 = sbr.rel (%p125) target = $region24
      $region23: #{simple_cnn_forward.4} parent=5 // pred_region
        // Predicated region
        $region25: #{simple_cnn_forward.4} parent=23 // pred_check
          %p128 = pneg %p29
        $region26: #{simple_cnn_forward.4} parent=23 // pred_check_branch
          %130 = sbr.rel (%p128) target = $region28
        $region27: #{simple_cnn_forward.4} parent=23 // pred_region
          %s131 = sand.u32 %s19, 1
          %s132 = sand.u32 %s19, 1
          %s133 = smul.addr %s132, 240
          %s134 = scalar_lea.vmem [#allocation2], %s133
          %s135 = smul.u32 5, %s9
          %s136 = smul.addr %s135, 3
          %s137 = smul.addr %s136, 4
          %s138 = scalar_lea.vmem %s0, %s137
          // Predicated region
          $region29: #{simple_cnn_forward.4} parent=27 // pred_check
            _
          $region30: #{simple_cnn_forward.4} parent=27 // pred_check_branch
            %140 = sbr.rel (0) target = $region32
          $region31: #{simple_cnn_forward.4} parent=27 // pred_region
            // Predicated region
            $region33: #{simple_cnn_forward.4} parent=31 // pred_check
              _
            $region34: #{simple_cnn_forward.4} parent=31 // pred_check_branch
              %142 = sbr.rel (0) target = $region36
            $region35: #{simple_cnn_forward.4} parent=31 // pred_region
              %s143 = scalar_lea.vmem %s138, 8
              %s144 = scalar_lea.vmem %s134, 8 [#allocation2]
              loop: start=0, step=1, limit=1
              $region37: #{simple_cnn_forward.4} parent=35 // loop_pre_header
                _
              $region38: #{simple_cnn_forward.4} parent=35 // loop_header
                %s146 = sphi 0, %s150
                %p147 = scmp.ge.s32.totalorder %s146, 1
                %s151 = sphi %s138, %s138
                %s152 = sphi %s134, %s134
              $region39: #{simple_cnn_forward.4} parent=35 // loop_header_branch
                %149 = sbr.rel (%p147) target = $region43
              $region40: #{simple_cnn_forward.4} parent=35 // loop_body
                %v153 = vld [vmem:[%s151] sm:$0xff]
                %154 = vst [vmem:[%s152] sm:$0xff] %v153
                %v155 = vld [vmem:[%s151 + $0xc] sm:$0xff]
                %156 = vst [vmem:[%s152 + $0xc] sm:$0xff] %v155
                %v157 = vld [vmem:[%s151 + $0x18] sm:$0xff]
                %158 = vst [vmem:[%s152 + $0x18] sm:$0xff] %v157
                %v159 = vld [vmem:[%s151 + $0x24] sm:$0xff]
                %160 = vst [vmem:[%s152 + $0x24] sm:$0xff] %v159
                %v161 = vld [vmem:[%s151 + $0x30] sm:$0xff]
                %162 = vst [vmem:[%s152 + $0x30] sm:$0xff] %v161
                %v163 = vld [vmem:[%s151 + $0x78] sm:$0xff]
                %164 = vst [vmem:[%s152 + $0x3c] sm:$0xff] %v163
                %v165 = vld [vmem:[%s151 + $0x84] sm:$0xff]
                %166 = vst [vmem:[%s152 + $0x48] sm:$0xff] %v165
                %v167 = vld [vmem:[%s151 + $0x90] sm:$0xff]
                %168 = vst [vmem:[%s152 + $0x54] sm:$0xff] %v167
                %v169 = vld [vmem:[%s151 + $0x9c] sm:$0xff]
                %170 = vst [vmem:[%s152 + $0x60] sm:$0xff] %v169
                %v171 = vld [vmem:[%s151 + $0xa8] sm:$0xff]
                %172 = vst [vmem:[%s152 + $0x6c] sm:$0xff] %v171
                %v173 = vld [vmem:[%s151 + $0xf0] sm:$0xff]
                %174 = vst [vmem:[%s152 + $0x78] sm:$0xff] %v173
                %v175 = vld [vmem:[%s151 + $0xfc] sm:$0xff]
                %176 = vst [vmem:[%s152 + $0x84] sm:$0xff] %v175
                %v177 = vld [vmem:[%s151 + $0x108] sm:$0xff]
                %178 = vst [vmem:[%s152 + $0x90] sm:$0xff] %v177
                %v179 = vld [vmem:[%s151 + $0x114] sm:$0xff]
                %180 = vst [vmem:[%s152 + $0x9c] sm:$0xff] %v179
                %v181 = vld [vmem:[%s151 + $0x120] sm:$0xff]
                %182 = vst [vmem:[%s152 + $0xa8] sm:$0xff] %v181
                %v183 = vld [vmem:[%s151 + $0x168] sm:$0xff]
                %184 = vst [vmem:[%s152 + $0xb4] sm:$0xff] %v183
                %v185 = vld [vmem:[%s151 + $0x174] sm:$0xff]
                %186 = vst [vmem:[%s152 + $0xc0] sm:$0xff] %v185
                %v187 = vld [vmem:[%s151 + $0x180] sm:$0xff]
                %188 = vst [vmem:[%s152 + $0xcc] sm:$0xff] %v187
                %v189 = vld [vmem:[%s151 + $0x18c] sm:$0xff]
                %190 = vst [vmem:[%s152 + $0xd8] sm:$0xff] %v189
                %v191 = vld [vmem:[%s151 + $0x198] sm:$0xff]
                %192 = vst [vmem:[%s152 + $0xe4] sm:$0xff] %v191
              $region41: #{simple_cnn_forward.4} parent=35 // loop_footer
                %s150 = sadd.s32 1, %s146
              $region42: #{simple_cnn_forward.4} parent=35 // loop_footer_branch
                %145 = sbr.rel target = $region38
              $region43: #{simple_cnn_forward.4} parent=35 // loop_exit
                _
              loop: start=0, step=1, limit=1
              $region44: #{simple_cnn_forward.4} parent=35 // loop_pre_header
                _
              $region45: #{simple_cnn_forward.4} parent=35 // loop_header
                %s195 = sphi 0, %s199
                %p196 = scmp.ge.s32.totalorder %s195, 1
                %s200 = sphi %s143, %s143
                %s201 = sphi %s144, %s144
              $region46: #{simple_cnn_forward.4} parent=35 // loop_header_branch
                %198 = sbr.rel (%p196) target = $region50
              $region47: #{simple_cnn_forward.4} parent=35 // loop_body
                %v202 = vld [vmem:[%s200] sm:$0xf]
                %203 = vst [vmem:[%s201] sm:$0xf] %v202
                %v204 = vld [vmem:[%s200 + $0xc] sm:$0xf]
                %205 = vst [vmem:[%s201 + $0xc] sm:$0xf] %v204
                %v206 = vld [vmem:[%s200 + $0x18] sm:$0xf]
                %207 = vst [vmem:[%s201 + $0x18] sm:$0xf] %v206
                %v208 = vld [vmem:[%s200 + $0x24] sm:$0xf]
                %209 = vst [vmem:[%s201 + $0x24] sm:$0xf] %v208
                %v210 = vld [vmem:[%s200 + $0x30] sm:$0xf]
                %211 = vst [vmem:[%s201 + $0x30] sm:$0xf] %v210
                %v212 = vld [vmem:[%s200 + $0x78] sm:$0xf]
                %213 = vst [vmem:[%s201 + $0x3c] sm:$0xf] %v212
                %v214 = vld [vmem:[%s200 + $0x84] sm:$0xf]
                %215 = vst [vmem:[%s201 + $0x48] sm:$0xf] %v214
                %v216 = vld [vmem:[%s200 + $0x90] sm:$0xf]
                %217 = vst [vmem:[%s201 + $0x54] sm:$0xf] %v216
                %v218 = vld [vmem:[%s200 + $0x9c] sm:$0xf]
                %219 = vst [vmem:[%s201 + $0x60] sm:$0xf] %v218
                %v220 = vld [vmem:[%s200 + $0xa8] sm:$0xf]
                %221 = vst [vmem:[%s201 + $0x6c] sm:$0xf] %v220
                %v222 = vld [vmem:[%s200 + $0xf0] sm:$0xf]
                %223 = vst [vmem:[%s201 + $0x78] sm:$0xf] %v222
                %v224 = vld [vmem:[%s200 + $0xfc] sm:$0xf]
                %225 = vst [vmem:[%s201 + $0x84] sm:$0xf] %v224
                %v226 = vld [vmem:[%s200 + $0x108] sm:$0xf]
                %227 = vst [vmem:[%s201 + $0x90] sm:$0xf] %v226
                %v228 = vld [vmem:[%s200 + $0x114] sm:$0xf]
                %229 = vst [vmem:[%s201 + $0x9c] sm:$0xf] %v228
                %v230 = vld [vmem:[%s200 + $0x120] sm:$0xf]
                %231 = vst [vmem:[%s201 + $0xa8] sm:$0xf] %v230
                %v232 = vld [vmem:[%s200 + $0x168] sm:$0xf]
                %233 = vst [vmem:[%s201 + $0xb4] sm:$0xf] %v232
                %v234 = vld [vmem:[%s200 + $0x174] sm:$0xf]
                %235 = vst [vmem:[%s201 + $0xc0] sm:$0xf] %v234
                %v236 = vld [vmem:[%s200 + $0x180] sm:$0xf]
                %237 = vst [vmem:[%s201 + $0xcc] sm:$0xf] %v236
                %v238 = vld [vmem:[%s200 + $0x18c] sm:$0xf]
                %239 = vst [vmem:[%s201 + $0xd8] sm:$0xf] %v238
                %v240 = vld [vmem:[%s200 + $0x198] sm:$0xf]
                %241 = vst [vmem:[%s201 + $0xe4] sm:$0xf] %v240
              $region48: #{simple_cnn_forward.4} parent=35 // loop_footer
                %s199 = sadd.s32 1, %s195
              $region49: #{simple_cnn_forward.4} parent=35 // loop_footer_branch
                %194 = sbr.rel target = $region45
              $region50: #{simple_cnn_forward.4} parent=35 // loop_exit
                _
            $region36: #{simple_cnn_forward.4} parent=31 // pred_fallthru
              _
          $region32: #{simple_cnn_forward.4} parent=27 // pred_fallthru
            _
          %242 = vnop
        $region28: #{simple_cnn_forward.4} parent=23 // pred_fallthru
          _
      $region24: #{simple_cnn_forward.4} parent=5 // pred_fallthru
        _
      %p243 = scmp.le.s32.totalorder 1, %s9
      %p244 = scmp.lt.s32.totalorder %s9, 3
      %p245 = pnand %p243, %p244
      %p246 = pneg %p245
      // Predicated region
      $region51: #{simple_cnn_forward.4} parent=5 // pred_check
        _
      $region52: #{simple_cnn_forward.4} parent=5 // pred_check_branch
        %248 = sbr.rel (%p245) target = $region54
      $region53: #{simple_cnn_forward.4} parent=5 // pred_region
        %s249 = ssub.s32 %s9, 1
        %s250 = sand.u32 %s22, 1
        %s251 = sand.u32 %s22, 1
        %s252 = smul.addr %s251, 240
        %s253 = scalar_lea.vmem [#allocation2], %s252
        // Predicated region
        $region55: #{simple_cnn_forward.4} parent=53 // pred_check
          %p254 = pneg %p35
        $region56: #{simple_cnn_forward.4} parent=53 // pred_check_branch
          %256 = sbr.rel (%p254) target = $region58
        $region57: #{simple_cnn_forward.4} parent=53 // pred_region
          _
        $region58: #{simple_cnn_forward.4} parent=53 // pred_fallthru
          _
        %s257 = sand.u32 %s22, 1
        %s258 = sand.u32 %s22, 1
        %s259 = smul.addr %s258, 240
        %s260 = scalar_lea.vmem [#allocation2], %s259
        %p261 = pneg %p35
        %p262 = pneg %p32
        %p263 = pneg %p56
        %p264 = pneg %p53
        %p265 = pneg %p77
        %p266 = pneg %p74
        %p267 = pneg %p103
        %p268 = pneg %p100
        %s269 = smul.u32 5, %s14
        %p270 = scmp.lt.s32.totalorder %s269, 9
        %s271 = scalar_select %p270, %s269, 9
        %s272 = smul.addr %s271, 4
        %s273 = scalar_lea.vmem %s3, %s272
        %s274 = smul.u32 5, %s14
        %s275 = smul.u32 5, %s14
        %p276 = scmp.lt.s32.totalorder %s275, 9
        %s277 = scalar_select %p276, %s275, 9
        %s278 = smul.addr %s277, 4
        %s279 = scalar_lea.vmem %s3, %s278
        %s280 = smul.u32 5, %s14
        %v282 = vld [vmem:[%s1] sm:$0xf]
        %v283 = vld [vmem:[%s1 + $0x4] sm:$0xf]
        %v284 = vld [vmem:[%s1 + $0x8] sm:$0xf]
        %v285 = vld [vmem:[%s1 + $0xc] sm:$0xf]
        %v286 = vld [vmem:[%s1 + $0x10] sm:$0xf]
        %v287 = vld [vmem:[%s1 + $0x14] sm:$0xf]
        %v288 = vld [vmem:[%s1 + $0x18] sm:$0xf]
        %v289 = vld [vmem:[%s1 + $0x1c] sm:$0xf]
        %v290 = vld [vmem:[%s1 + $0x20] sm:$0xf]
        %v291 = vld [vmem:[%s1 + $0x24] sm:$0xf]
        %v292 = vld [vmem:[%s1 + $0x28] sm:$0xf]
        %v293 = vld [vmem:[%s1 + $0x2c] sm:$0xf]
        %v294 = vld [vmem:[%s1 + $0x30] sm:$0xf]
        %v295 = vld [vmem:[%s1 + $0x34] sm:$0xf]
        %v296 = vld [vmem:[%s1 + $0x38] sm:$0xf]
        %v297 = vld [vmem:[%s1 + $0x3c] sm:$0xf]
        %v298 = vld [vmem:[%s1 + $0x40] sm:$0xf]
        %v299 = vld [vmem:[%s1 + $0x44] sm:$0xf]
        %v300 = vld [vmem:[%s1 + $0x48] sm:$0xf]
        %v301 = vld [vmem:[%s1 + $0x4c] sm:$0xf]
        %v302 = vld [vmem:[%s1 + $0x50] sm:$0xf]
        %v303 = vld [vmem:[%s1 + $0x54] sm:$0xf]
        %v304 = vld [vmem:[%s1 + $0x58] sm:$0xf]
        %v305 = vld [vmem:[%s1 + $0x5c] sm:$0xf]
        %v306 = vld [vmem:[%s1 + $0x60] sm:$0xf]
        %v307 = vld [vmem:[%s1 + $0x64] sm:$0xf]
        %v308 = vld [vmem:[%s1 + $0x68] sm:$0xf]
        %v309 = vld [vmem:[%s1 + $0x6c] sm:$0xf]
        %v310 = vld [vmem:[%s1 + $0x70] sm:$0xf]
        %v311 = vld [vmem:[%s1 + $0x74] sm:$0xf]
        %v312 = vld [vmem:[%s1 + $0x78] sm:$0xf]
        %v313 = vld [vmem:[%s1 + $0x7c] sm:$0xf]
        %v314 = vld [vmem:[%s1 + $0x80] sm:$0xf]
        %v315 = vld [vmem:[%s1 + $0x84] sm:$0xf]
        %v316 = vld [vmem:[%s1 + $0x88] sm:$0xf]
        %v317 = vld [vmem:[%s1 + $0x8c] sm:$0xf]
        %v318 = vld [vmem:[%s253] sm:$0xff]
        %v319 = vld [vmem:[%s253 + $0x8] sm:$0xf]
        %v320 = vld [vmem:[%s253 + $0xc] sm:$0xff]
        %v321 = vld [vmem:[%s253 + $0x14] sm:$0xf]
        %v322 = vld [vmem:[%s253 + $0x18] sm:$0xff]
        %v323 = vld [vmem:[%s253 + $0x20] sm:$0xf]
        %v324 = vld [vmem:[%s253 + $0x24] sm:$0xff]
        %v325 = vld [vmem:[%s253 + $0x2c] sm:$0xf]
        %v326 = vld [vmem:[%s253 + $0x30] sm:$0xff]
        %v327 = vld [vmem:[%s253 + $0x38] sm:$0xf]
        %v333 = vunpack.c.l.b16 %v319
        %v334 = vunpack.c.l.b16 %v321
        %v335 = vunpack.c.l.b16 %v323
        %v336 = vunpack.c.l.b16 %v325
        %v337 = vunpack.c.l.b16 %v327
        %v338 = vpack.c.b16 %v334, %v333
        %v339 = vpack.c.b16 %v336, %v335
        %v340 = vpack.c.b16 %v337, %v337
        %v345 = vunpack.c.l.b16 %v314
        %v346 = vunpack.c.l.b16 %v315
        %v347 = vunpack.c.l.b16 %v316
        %v348 = vunpack.c.l.b16 %v317
        %v349 = vpack.c.b16 %v346, %v345
        %v350 = vpack.c.b16 %v348, %v347
        %vm353 = vcmask 261120
        %v355 = vsel %vm353, %v338, 0
        %v358 = vsel %vm353, %v339, 0
        %v361 = vsel %vm353, %v340, 0
        %363 = vmatprep.subr.bf16.mxu0 0
        %364 = vmatpush1.bf16.msra.mxu0 %v349
        %365 = vmatprep.subr.bf16.mxu0 0
        %366 = vmatpush1.bf16.msra.mxu0 %v350
        %367 = vmatprep.subr.bf16.mxu0 0
        %368 = vmatpush1.bf16.msra.mxu0 0
        %369 = vmatprep.subr.bf16.mxu0 0
        %370 = vmatpush1.bf16.msra.mxu0 0
        %371 = vmatprep.subr.bf16.mxu0 0
        %372 = vmatpush1.bf16.msra.mxu0 0
        %373 = vmatprep.subr.bf16.mxu0 0
        %374 = vmatpush1.bf16.msra.mxu0 0
        %375 = vmatprep.subr.bf16.mxu0 0
        %376 = vmatpush1.bf16.msra.mxu0 0
        %377 = vmatprep.subr.bf16.mxu0 0
        %378 = vmatpush1.bf16.msra.mxu0 0
        %379 = vmatprep.subr.bf16.mxu0 0
        %380 = vmatpush1.bf16.msra.mxu0 0
        %381 = vmatprep.subr.bf16.mxu0 0
        %382 = vmatpush1.bf16.msra.mxu0 0
        %383 = vmatprep.subr.bf16.mxu0 0
        %384 = vmatpush1.bf16.msra.mxu0 0
        %385 = vmatprep.subr.bf16.mxu0 0
        %386 = vmatpush1.bf16.msra.mxu0 0
        %387 = vmatprep.subr.bf16.mxu0 0
        %388 = vmatpush1.bf16.msra.mxu0 0
        %389 = vmatprep.subr.bf16.mxu0 0
        %390 = vmatpush1.bf16.msra.mxu0 0
        %391 = vmatprep.subr.bf16.mxu0 0
        %392 = vmatpush1.bf16.msra.mxu0 0
        %393 = vmatprep.subr.bf16.mxu0 0
        %394 = vmatpush1.bf16.msra.mxu0 0
        %395 = vmatprep.mubr.bf16.mxu0 0
        %396 = vmatmul.mubr.bf16.gmra.mrb[0].mxu0 %v355
        %v397 = vpop.f32.mrb[0].mxu0
        %v398 = vadd.f32 0.0, %v397
        %v399 = vpop.f32.mrb[0].mxu0
        %v400 = vpop.f32.mrb[0].mxu0
        %v401 = vadd.f32 0.0, %v400
        %v402 = vpop.f32.mrb[0].mxu0
        %403 = vmatprep.mubr.bf16.mxu0 0
        %404 = vmatmul.mubr.bf16.gmra.mrb[0].mxu0 %v358
        %v405 = vpop.f32.mrb[0].mxu0
        %v406 = vadd.f32 0.0, %v405
        %v407 = vpop.f32.mrb[0].mxu0
        %v408 = vpop.f32.mrb[0].mxu0
        %v409 = vadd.f32 0.0, %v408
        %v410 = vpop.f32.mrb[0].mxu0
        %411 = vmatprep.mubr.bf16.mxu0 0
        %412 = vmatmul.mubr.bf16.gmra.mrb[0].mxu0 %v361
        %v413 = vpop.f32.mrb[0].mxu0
        %v414 = vadd.f32 0.0, %v413
        %v415 = vpop.f32.mrb[0].mxu0
        %v416 = vpop.f32.mrb[0].mxu0
        %v417 = vpop.f32.mrb[0].mxu0
        %418 = vdwg.mxu0
        %v424 = vunpack.c.l.b16 %v318
        %v425 = vunpack.c.h.b16 %v318
        %v426 = vunpack.c.l.b16 %v320
        %v427 = vunpack.c.h.b16 %v320
        %v428 = vunpack.c.l.b16 %v322
        %v429 = vunpack.c.h.b16 %v322
        %v430 = vunpack.c.l.b16 %v324
        %v431 = vunpack.c.h.b16 %v324
        %v432 = vunpack.c.l.b16 %v326
        %v433 = vunpack.c.h.b16 %v326
        %v434 = vpack.c.b16 %v426, %v424
        %v435 = vpack.c.b16 %v427, %v425
        %v436 = vpack.c.b16 %v430, %v428
        %v437 = vpack.c.b16 %v431, %v429
        %v438 = vpack.c.b16 %v432, %v432
        %v439 = vpack.c.b16 %v433, %v433
        %v478 = vunpack.c.l.b16 %v282
        %v479 = vunpack.c.l.b16 %v283
        %v480 = vunpack.c.l.b16 %v284
        %v481 = vunpack.c.l.b16 %v285
        %v482 = vunpack.c.l.b16 %v286
        %v483 = vunpack.c.l.b16 %v287
        %v484 = vunpack.c.l.b16 %v288
        %v485 = vunpack.c.l.b16 %v289
        %v486 = vunpack.c.l.b16 %v290
        %v487 = vunpack.c.l.b16 %v291
        %v488 = vunpack.c.l.b16 %v292
        %v489 = vunpack.c.l.b16 %v293
        %v490 = vunpack.c.l.b16 %v294
        %v491 = vunpack.c.l.b16 %v295
        %v492 = vunpack.c.l.b16 %v296
        %v493 = vunpack.c.l.b16 %v297
        %v494 = vunpack.c.l.b16 %v298
        %v495 = vunpack.c.l.b16 %v299
        %v496 = vunpack.c.l.b16 %v300
        %v497 = vunpack.c.l.b16 %v301
        %v498 = vunpack.c.l.b16 %v302
        %v499 = vunpack.c.l.b16 %v303
        %v500 = vunpack.c.l.b16 %v304
        %v501 = vunpack.c.l.b16 %v305
        %v502 = vunpack.c.l.b16 %v306
        %v503 = vunpack.c.l.b16 %v307
        %v504 = vunpack.c.l.b16 %v308
        %v505 = vunpack.c.l.b16 %v309
        %v506 = vunpack.c.l.b16 %v310
        %v507 = vunpack.c.l.b16 %v311
        %v508 = vunpack.c.l.b16 %v312
        %v509 = vunpack.c.l.b16 %v313
        %v510 = vpack.c.b16 %v479, %v478
        %v511 = vpack.c.b16 %v481, %v480
        %v512 = vpack.c.b16 %v483, %v482
        %v513 = vpack.c.b16 %v485, %v484
        %v514 = vpack.c.b16 %v487, %v486
        %v515 = vpack.c.b16 %v489, %v488
        %v516 = vpack.c.b16 %v491, %v490
        %v517 = vpack.c.b16 %v493, %v492
        %v518 = vpack.c.b16 %v495, %v494
        %v519 = vpack.c.b16 %v497, %v496
        %v520 = vpack.c.b16 %v499, %v498
        %v521 = vpack.c.b16 %v501, %v500
        %v522 = vpack.c.b16 %v503, %v502
        %v523 = vpack.c.b16 %v505, %v504
        %v524 = vpack.c.b16 %v507, %v506
        %v525 = vpack.c.b16 %v509, %v508
        %542 = vmatprep.subr.bf16.mxu0 0
        %543 = vmatpush1.bf16.msra.mxu0 %v510
        %544 = vmatprep.subr.bf16.mxu0 0
        %545 = vmatpush1.bf16.msra.mxu0 %v511
        %546 = vmatprep.subr.bf16.mxu0 0
        %547 = vmatpush1.bf16.msra.mxu0 %v512
        %548 = vmatprep.subr.bf16.mxu0 0
        %549 = vmatpush1.bf16.msra.mxu0 %v513
        %550 = vmatprep.subr.bf16.mxu0 0
        %551 = vmatpush1.bf16.msra.mxu0 %v514
        %552 = vmatprep.subr.bf16.mxu0 0
        %553 = vmatpush1.bf16.msra.mxu0 %v515
        %554 = vmatprep.subr.bf16.mxu0 0
        %555 = vmatpush1.bf16.msra.mxu0 %v516
        %556 = vmatprep.subr.bf16.mxu0 0
        %557 = vmatpush1.bf16.msra.mxu0 %v517
        %558 = vmatprep.subr.bf16.mxu0 0
        %559 = vmatpush1.bf16.msra.mxu0 %v518
        %560 = vmatprep.subr.bf16.mxu0 0
        %561 = vmatpush1.bf16.msra.mxu0 %v519
        %562 = vmatprep.subr.bf16.mxu0 0
        %563 = vmatpush1.bf16.msra.mxu0 %v520
        %564 = vmatprep.subr.bf16.mxu0 0
        %565 = vmatpush1.bf16.msra.mxu0 %v521
        %566 = vmatprep.subr.bf16.mxu0 0
        %567 = vmatpush1.bf16.msra.mxu0 %v522
        %568 = vmatprep.subr.bf16.mxu0 0
        %569 = vmatpush1.bf16.msra.mxu0 %v523
        %570 = vmatprep.subr.bf16.mxu0 0
        %571 = vmatpush1.bf16.msra.mxu0 %v524
        %572 = vmatprep.subr.bf16.mxu0 0
        %573 = vmatpush1.bf16.msra.mxu0 %v525
        %574 = vmatprep.mubr.bf16.mxu0 %v435
        %575 = vmatmul.mubr.bf16.gmra.mrb[0].mxu0 %v434
        %v576 = vpop.f32.mrb[0].mxu0
        %v577 = vadd.f32 %v398, %v576
        %v578 = vpop.f32.mrb[0].mxu0
        %v579 = vpop.f32.mrb[0].mxu0
        %v580 = vadd.f32 %v401, %v579
        %v581 = vpop.f32.mrb[0].mxu0
        %582 = vmatprep.mubr.bf16.mxu0 %v437
        %583 = vmatmul.mubr.bf16.gmra.mrb[0].mxu0 %v436
        %v584 = vpop.f32.mrb[0].mxu0
        %v585 = vadd.f32 %v406, %v584
        %v586 = vpop.f32.mrb[0].mxu0
        %v587 = vpop.f32.mrb[0].mxu0
        %v588 = vadd.f32 %v409, %v587
        %v589 = vpop.f32.mrb[0].mxu0
        %590 = vmatprep.mubr.bf16.mxu0 %v439
        %591 = vmatmul.mubr.bf16.gmra.mrb[0].mxu0 %v438
        %v592 = vpop.f32.mrb[0].mxu0
        %v593 = vadd.f32 %v414, %v592
        %v594 = vpop.f32.mrb[0].mxu0
        %v595 = vpop.f32.mrb[0].mxu0
        %v596 = vpop.f32.mrb[0].mxu0
        %597 = vdwg.mxu0
        %s598 = scalar_lea.vmem %s253, 60 [#allocation2]
        %v599 = vld [vmem:[%s598] sm:$0xff]
        %v600 = vld [vmem:[%s598 + $0x8] sm:$0xf]
        %v601 = vld [vmem:[%s598 + $0xc] sm:$0xff]
        %v602 = vld [vmem:[%s598 + $0x14] sm:$0xf]
        %v603 = vld [vmem:[%s598 + $0x18] sm:$0xff]
        %v604 = vld [vmem:[%s598 + $0x20] sm:$0xf]
        %v605 = vld [vmem:[%s598 + $0x24] sm:$0xff]
        %v606 = vld [vmem:[%s598 + $0x2c] sm:$0xf]
        %v607 = vld [vmem:[%s598 + $0x30] sm:$0xff]
        %v608 = vld [vmem:[%s598 + $0x38] sm:$0xf]
        %v614 = vunpack.c.l.b16 %v600
        %v615 = vunpack.c.l.b16 %v602
        %v616 = vunpack.c.l.b16 %v604
        %v617 = vunpack.c.l.b16 %v606
        %v618 = vunpack.c.l.b16 %v608
        %v619 = vpack.c.b16 %v615, %v614
        %v620 = vpack.c.b16 %v617, %v616
        %v621 = vpack.c.b16 %v618, %v618
        %v623 = vsel %vm353, %v619, 0
        %v626 = vsel %vm353, %v620, 0
        %v629 = vsel %vm353, %v621, 0
        %631 = vmatprep.subr.bf16.mxu0 0
        %632 = vmatpush1.bf16.msra.mxu0 %v349
        %633 = vmatprep.subr.bf16.mxu0 0
        %634 = vmatpush1.bf16.msra.mxu0 %v350
        %635 = vmatprep.subr.bf16.mxu0 0
        %636 = vmatpush1.bf16.msra.mxu0 0
        %637 = vmatprep.subr.bf16.mxu0 0
        %638 = vmatpush1.bf16.msra.mxu0 0
        %639 = vmatprep.subr.bf16.mxu0 0
        %640 = vmatpush1.bf16.msra.mxu0 0
        %641 = vmatprep.subr.bf16.mxu0 0
        %642 = vmatpush1.bf16.msra.mxu0 0
        %643 = vmatprep.subr.bf16.mxu0 0
        %644 = vmatpush1.bf16.msra.mxu0 0
        %645 = vmatprep.subr.bf16.mxu0 0
        %646 = vmatpush1.bf16.msra.mxu0 0
        %647 = vmatprep.subr.bf16.mxu0 0
        %648 = vmatpush1.bf16.msra.mxu0 0
        %649 = vmatprep.subr.bf16.mxu0 0
        %650 = vmatpush1.bf16.msra.mxu0 0
        %651 = vmatprep.subr.bf16.mxu0 0
        %652 = vmatpush1.bf16.msra.mxu0 0
        %653 = vmatprep.subr.bf16.mxu0 0
        %654 = vmatpush1.bf16.msra.mxu0 0
        %655 = vmatprep.subr.bf16.mxu0 0
        %656 = vmatpush1.bf16.msra.mxu0 0
        %657 = vmatprep.subr.bf16.mxu0 0
        %658 = vmatpush1.bf16.msra.mxu0 0
        %659 = vmatprep.subr.bf16.mxu0 0
        %660 = vmatpush1.bf16.msra.mxu0 0
        %661 = vmatprep.subr.bf16.mxu0 0
        %662 = vmatpush1.bf16.msra.mxu0 0
        %663 = vmatprep.mubr.bf16.mxu0 0
        %664 = vmatmul.mubr.bf16.gmra.mrb[0].mxu0 %v623
        %v665 = vpop.f32.mrb[0].mxu0
        %v666 = vadd.f32 0.0, %v665
        %v667 = vpop.f32.mrb[0].mxu0
        %v668 = vpop.f32.mrb[0].mxu0
        %v669 = vadd.f32 0.0, %v668
        %v670 = vpop.f32.mrb[0].mxu0
        %671 = vmatprep.mubr.bf16.mxu0 0
        %672 = vmatmul.mubr.bf16.gmra.mrb[0].mxu0 %v626
        %v673 = vpop.f32.mrb[0].mxu0
        %v674 = vadd.f32 0.0, %v673
        %v675 = vpop.f32.mrb[0].mxu0
        %v676 = vpop.f32.mrb[0].mxu0
        %v677 = vadd.f32 0.0, %v676
        %v678 = vpop.f32.mrb[0].mxu0
        %679 = vmatprep.mubr.bf16.mxu0 0
        %680 = vmatmul.mubr.bf16.gmra.mrb[0].mxu0 %v629
        %v681 = vpop.f32.mrb[0].mxu0
        %v682 = vadd.f32 0.0, %v681
        %v683 = vpop.f32.mrb[0].mxu0
        %v684 = vpop.f32.mrb[0].mxu0
        %v685 = vpop.f32.mrb[0].mxu0
        %686 = vdwg.mxu0
        %v692 = vunpack.c.l.b16 %v599
        %v693 = vunpack.c.h.b16 %v599
        %v694 = vunpack.c.l.b16 %v601
        %v695 = vunpack.c.h.b16 %v601
        %v696 = vunpack.c.l.b16 %v603
        %v697 = vunpack.c.h.b16 %v603
        %v698 = vunpack.c.l.b16 %v605
        %v699 = vunpack.c.h.b16 %v605
        %v700 = vunpack.c.l.b16 %v607
        %v701 = vunpack.c.h.b16 %v607
        %v702 = vpack.c.b16 %v694, %v692
        %v703 = vpack.c.b16 %v695, %v693
        %v704 = vpack.c.b16 %v698, %v696
        %v705 = vpack.c.b16 %v699, %v697
        %v706 = vpack.c.b16 %v700, %v700
        %v707 = vpack.c.b16 %v701, %v701
        %714 = vmatprep.subr.bf16.mxu0 0
        %715 = vmatpush1.bf16.msra.mxu0 %v510
        %716 = vmatprep.subr.bf16.mxu0 0
        %717 = vmatpush1.bf16.msra.mxu0 %v511
        %718 = vmatprep.subr.bf16.mxu0 0
        %719 = vmatpush1.bf16.msra.mxu0 %v512
        %720 = vmatprep.subr.bf16.mxu0 0
        %721 = vmatpush1.bf16.msra.mxu0 %v513
        %722 = vmatprep.subr.bf16.mxu0 0
        %723 = vmatpush1.bf16.msra.mxu0 %v514
        %724 = vmatprep.subr.bf16.mxu0 0
        %725 = vmatpush1.bf16.msra.mxu0 %v515
        %726 = vmatprep.subr.bf16.mxu0 0
        %727 = vmatpush1.bf16.msra.mxu0 %v516
        %728 = vmatprep.subr.bf16.mxu0 0
        %729 = vmatpush1.bf16.msra.mxu0 %v517
        %730 = vmatprep.subr.bf16.mxu0 0
        %731 = vmatpush1.bf16.msra.mxu0 %v518
        %732 = vmatprep.subr.bf16.mxu0 0
        %733 = vmatpush1.bf16.msra.mxu0 %v519
        %734 = vmatprep.subr.bf16.mxu0 0
        %735 = vmatpush1.bf16.msra.mxu0 %v520
        %736 = vmatprep.subr.bf16.mxu0 0
        %737 = vmatpush1.bf16.msra.mxu0 %v521
        %738 = vmatprep.subr.bf16.mxu0 0
        %739 = vmatpush1.bf16.msra.mxu0 %v522
        %740 = vmatprep.subr.bf16.mxu0 0
        %741 = vmatpush1.bf16.msra.mxu0 %v523
        %742 = vmatprep.subr.bf16.mxu0 0
        %743 = vmatpush1.bf16.msra.mxu0 %v524
        %744 = vmatprep.subr.bf16.mxu0 0
        %745 = vmatpush1.bf16.msra.mxu0 %v525
        %746 = vmatprep.mubr.bf16.mxu0 %v703
        %747 = vmatmul.mubr.bf16.gmra.mrb[0].mxu0 %v702
        %v748 = vpop.f32.mrb[0].mxu0
        %v749 = vadd.f32 %v666, %v748
        %v750 = vpop.f32.mrb[0].mxu0
        %v751 = vpop.f32.mrb[0].mxu0
        %v752 = vadd.f32 %v669, %v751
        %v753 = vpop.f32.mrb[0].mxu0
        %754 = vmatprep.mubr.bf16.mxu0 %v705
        %755 = vmatmul.mubr.bf16.gmra.mrb[0].mxu0 %v704
        %v756 = vpop.f32.mrb[0].mxu0
        %v757 = vadd.f32 %v674, %v756
        %v758 = vpop.f32.mrb[0].mxu0
        %v759 = vpop.f32.mrb[0].mxu0
        %v760 = vadd.f32 %v677, %v759
        %v761 = vpop.f32.mrb[0].mxu0
        %762 = vmatprep.mubr.bf16.mxu0 %v707
        %763 = vmatmul.mubr.bf16.gmra.mrb[0].mxu0 %v706
        %v764 = vpop.f32.mrb[0].mxu0
        %v765 = vadd.f32 %v682, %v764
        %v766 = vpop.f32.mrb[0].mxu0
        %v767 = vpop.f32.mrb[0].mxu0
        %v768 = vpop.f32.mrb[0].mxu0
        %769 = vdwg.mxu0
        %v770 = vmax.f32 %v577, %v749
        %v771 = vmax.f32 %v580, %v752
        %v772 = vmax.f32 %v585, %v757
        %v773 = vmax.f32 %v588, %v760
        %v774 = vmax.f32 %v593, %v765
        %s775 = scalar_lea.vmem %s253, 120 [#allocation2]
        %v776 = vld [vmem:[%s775] sm:$0xff]
        %v777 = vld [vmem:[%s775 + $0x8] sm:$0xf]
        %v778 = vld [vmem:[%s775 + $0xc] sm:$0xff]
        %v779 = vld [vmem:[%s775 + $0x14] sm:$0xf]
        %v780 = vld [vmem:[%s775 + $0x18] sm:$0xff]
        %v781 = vld [vmem:[%s775 + $0x20] sm:$0xf]
        %v782 = vld [vmem:[%s775 + $0x24] sm:$0xff]
        %v783 = vld [vmem:[%s775 + $0x2c] sm:$0xf]
        %v784 = vld [vmem:[%s775 + $0x30] sm:$0xff]
        %v785 = vld [vmem:[%s775 + $0x38] sm:$0xf]
        %v791 = vunpack.c.l.b16 %v777
        %v792 = vunpack.c.l.b16 %v779
        %v793 = vunpack.c.l.b16 %v781
        %v794 = vunpack.c.l.b16 %v783
        %v795 = vunpack.c.l.b16 %v785
        %v796 = vpack.c.b16 %v792, %v791
        %v797 = vpack.c.b16 %v794, %v793
        %v798 = vpack.c.b16 %v795, %v795
        %v800 = vsel %vm353, %v796, 0
        %v803 = vsel %vm353, %v797, 0
        %v806 = vsel %vm353, %v798, 0
        %808 = vmatprep.subr.bf16.mxu0 0
        %809 = vmatpush1.bf16.msra.mxu0 %v349
        %810 = vmatprep.subr.bf16.mxu0 0
        %811 = vmatpush1.bf16.msra.mxu0 %v350
        %812 = vmatprep.subr.bf16.mxu0 0
        %813 = vmatpush1.bf16.msra.mxu0 0
        %814 = vmatprep.subr.bf16.mxu0 0
        %815 = vmatpush1.bf16.msra.mxu0 0
        %816 = vmatprep.subr.bf16.mxu0 0
        %817 = vmatpush1.bf16.msra.mxu0 0
        %818 = vmatprep.subr.bf16.mxu0 0
        %819 = vmatpush1.bf16.msra.mxu0 0
        %820 = vmatprep.subr.bf16.mxu0 0
        %821 = vmatpush1.bf16.msra.mxu0 0
        %822 = vmatprep.subr.bf16.mxu0 0
        %823 = vmatpush1.bf16.msra.mxu0 0
        %824 = vmatprep.subr.bf16.mxu0 0
        %825 = vmatpush1.bf16.msra.mxu0 0
        %826 = vmatprep.subr.bf16.mxu0 0
        %827 = vmatpush1.bf16.msra.mxu0 0
        %828 = vmatprep.subr.bf16.mxu0 0
        %829 = vmatpush1.bf16.msra.mxu0 0
        %830 = vmatprep.subr.bf16.mxu0 0
        %831 = vmatpush1.bf16.msra.mxu0 0
        %832 = vmatprep.subr.bf16.mxu0 0
        %833 = vmatpush1.bf16.msra.mxu0 0
        %834 = vmatprep.subr.bf16.mxu0 0
        %835 = vmatpush1.bf16.msra.mxu0 0
        %836 = vmatprep.subr.bf16.mxu0 0
        %837 = vmatpush1.bf16.msra.mxu0 0
        %838 = vmatprep.subr.bf16.mxu0 0
        %839 = vmatpush1.bf16.msra.mxu0 0
        %840 = vmatprep.mubr.bf16.mxu0 0
        %841 = vmatmul.mubr.bf16.gmra.mrb[0].mxu0 %v800
        %v842 = vpop.f32.mrb[0].mxu0
        %v843 = vadd.f32 0.0, %v842
        %v844 = vpop.f32.mrb[0].mxu0
        %v845 = vpop.f32.mrb[0].mxu0
        %v846 = vadd.f32 0.0, %v845
        %v847 = vpop.f32.mrb[0].mxu0
        %848 = vmatprep.mubr.bf16.mxu0 0
        %849 = vmatmul.mubr.bf16.gmra.mrb[0].mxu0 %v803
        %v850 = vpop.f32.mrb[0].mxu0
        %v851 = vadd.f32 0.0, %v850
        %v852 = vpop.f32.mrb[0].mxu0
        %v853 = vpop.f32.mrb[0].mxu0
        %v854 = vadd.f32 0.0, %v853
        %v855 = vpop.f32.mrb[0].mxu0
        %856 = vmatprep.mubr.bf16.mxu0 0
        %857 = vmatmul.mubr.bf16.gmra.mrb[0].mxu0 %v806
        %v858 = vpop.f32.mrb[0].mxu0
        %v859 = vadd.f32 0.0, %v858
        %v860 = vpop.f32.mrb[0].mxu0
        %v861 = vpop.f32.mrb[0].mxu0
        %v862 = vpop.f32.mrb[0].mxu0
        %863 = vdwg.mxu0
        %v869 = vunpack.c.l.b16 %v776
        %v870 = vunpack.c.h.b16 %v776
        %v871 = vunpack.c.l.b16 %v778
        %v872 = vunpack.c.h.b16 %v778
        %v873 = vunpack.c.l.b16 %v780
        %v874 = vunpack.c.h.b16 %v780
        %v875 = vunpack.c.l.b16 %v782
        %v876 = vunpack.c.h.b16 %v782
        %v877 = vunpack.c.l.b16 %v784
        %v878 = vunpack.c.h.b16 %v784
        %v879 = vpack.c.b16 %v871, %v869
        %v880 = vpack.c.b16 %v872, %v870
        %v881 = vpack.c.b16 %v875, %v873
        %v882 = vpack.c.b16 %v876, %v874
        %v883 = vpack.c.b16 %v877, %v877
        %v884 = vpack.c.b16 %v878, %v878
        %891 = vmatprep.subr.bf16.mxu0 0
        %892 = vmatpush1.bf16.msra.mxu0 %v510
        %893 = vmatprep.subr.bf16.mxu0 0
        %894 = vmatpush1.bf16.msra.mxu0 %v511
        %895 = vmatprep.subr.bf16.mxu0 0
        %896 = vmatpush1.bf16.msra.mxu0 %v512
        %897 = vmatprep.subr.bf16.mxu0 0
        %898 = vmatpush1.bf16.msra.mxu0 %v513
        %899 = vmatprep.subr.bf16.mxu0 0
        %900 = vmatpush1.bf16.msra.mxu0 %v514
        %901 = vmatprep.subr.bf16.mxu0 0
        %902 = vmatpush1.bf16.msra.mxu0 %v515
        %903 = vmatprep.subr.bf16.mxu0 0
        %904 = vmatpush1.bf16.msra.mxu0 %v516
        %905 = vmatprep.subr.bf16.mxu0 0
        %906 = vmatpush1.bf16.msra.mxu0 %v517
        %907 = vmatprep.subr.bf16.mxu0 0
        %908 = vmatpush1.bf16.msra.mxu0 %v518
        %909 = vmatprep.subr.bf16.mxu0 0
        %910 = vmatpush1.bf16.msra.mxu0 %v519
        %911 = vmatprep.subr.bf16.mxu0 0
        %912 = vmatpush1.bf16.msra.mxu0 %v520
        %913 = vmatprep.subr.bf16.mxu0 0
        %914 = vmatpush1.bf16.msra.mxu0 %v521
        %915 = vmatprep.subr.bf16.mxu0 0
        %916 = vmatpush1.bf16.msra.mxu0 %v522
        %917 = vmatprep.subr.bf16.mxu0 0
        %918 = vmatpush1.bf16.msra.mxu0 %v523
        %919 = vmatprep.subr.bf16.mxu0 0
        %920 = vmatpush1.bf16.msra.mxu0 %v524
        %921 = vmatprep.subr.bf16.mxu0 0
        %922 = vmatpush1.bf16.msra.mxu0 %v525
        %923 = vmatprep.mubr.bf16.mxu0 %v880
        %924 = vmatmul.mubr.bf16.gmra.mrb[0].mxu0 %v879
        %v925 = vpop.f32.mrb[0].mxu0
        %v926 = vadd.f32 %v843, %v925
        %v927 = vpop.f32.mrb[0].mxu0
        %v928 = vpop.f32.mrb[0].mxu0
        %v929 = vadd.f32 %v846, %v928
        %v930 = vpop.f32.mrb[0].mxu0
        %931 = vmatprep.mubr.bf16.mxu0 %v882
        %932 = vmatmul.mubr.bf16.gmra.mrb[0].mxu0 %v881
        %v933 = vpop.f32.mrb[0].mxu0
        %v934 = vadd.f32 %v851, %v933
        %v935 = vpop.f32.mrb[0].mxu0
        %v936 = vpop.f32.mrb[0].mxu0
        %v937 = vadd.f32 %v854, %v936
        %v938 = vpop.f32.mrb[0].mxu0
        %939 = vmatprep.mubr.bf16.mxu0 %v884
        %940 = vmatmul.mubr.bf16.gmra.mrb[0].mxu0 %v883
        %v941 = vpop.f32.mrb[0].mxu0
        %v942 = vadd.f32 %v859, %v941
        %v943 = vpop.f32.mrb[0].mxu0
        %v944 = vpop.f32.mrb[0].mxu0
        %v945 = vpop.f32.mrb[0].mxu0
        %946 = vdwg.mxu0
        %v947 = vmax.f32 %v770, %v926
        %v948 = vmax.f32 %v771, %v929
        %v949 = vmax.f32 %v772, %v934
        %v950 = vmax.f32 %v773, %v937
        %v951 = vmax.f32 %v774, %v942
        %s952 = scalar_lea.vmem %s253, 180 [#allocation2]
        %v953 = vld [vmem:[%s952] sm:$0xff]
        %v954 = vld [vmem:[%s952 + $0x8] sm:$0xf]
        %v955 = vld [vmem:[%s952 + $0xc] sm:$0xff]
        %v956 = vld [vmem:[%s952 + $0x14] sm:$0xf]
        %v957 = vld [vmem:[%s952 + $0x18] sm:$0xff]
        %v958 = vld [vmem:[%s952 + $0x20] sm:$0xf]
        %v959 = vld [vmem:[%s952 + $0x24] sm:$0xff]
        %v960 = vld [vmem:[%s952 + $0x2c] sm:$0xf]
        %v961 = vld [vmem:[%s952 + $0x30] sm:$0xff]
        %v962 = vld [vmem:[%s952 + $0x38] sm:$0xf]
        %v968 = vunpack.c.l.b16 %v954
        %v969 = vunpack.c.l.b16 %v956
        %v970 = vunpack.c.l.b16 %v958
        %v971 = vunpack.c.l.b16 %v960
        %v972 = vunpack.c.l.b16 %v962
        %v973 = vpack.c.b16 %v969, %v968
        %v974 = vpack.c.b16 %v971, %v970
        %v975 = vpack.c.b16 %v972, %v972
        %v977 = vsel %vm353, %v973, 0
        %v980 = vsel %vm353, %v974, 0
        %v983 = vsel %vm353, %v975, 0
        %985 = vmatprep.subr.bf16.mxu0 0
        %986 = vmatpush1.bf16.msra.mxu0 %v349
        %987 = vmatprep.subr.bf16.mxu0 0
        %988 = vmatpush1.bf16.msra.mxu0 %v350
        %989 = vmatprep.subr.bf16.mxu0 0
        %990 = vmatpush1.bf16.msra.mxu0 0
        %991 = vmatprep.subr.bf16.mxu0 0
        %992 = vmatpush1.bf16.msra.mxu0 0
        %993 = vmatprep.subr.bf16.mxu0 0
        %994 = vmatpush1.bf16.msra.mxu0 0
        %995 = vmatprep.subr.bf16.mxu0 0
        %996 = vmatpush1.bf16.msra.mxu0 0
        %997 = vmatprep.subr.bf16.mxu0 0
        %998 = vmatpush1.bf16.msra.mxu0 0
        %999 = vmatprep.subr.bf16.mxu0 0
        %1000 = vmatpush1.bf16.msra.mxu0 0
        %1001 = vmatprep.subr.bf16.mxu0 0
        %1002 = vmatpush1.bf16.msra.mxu0 0
        %1003 = vmatprep.subr.bf16.mxu0 0
        %1004 = vmatpush1.bf16.msra.mxu0 0
        %1005 = vmatprep.subr.bf16.mxu0 0
        %1006 = vmatpush1.bf16.msra.mxu0 0
        %1007 = vmatprep.subr.bf16.mxu0 0
        %1008 = vmatpush1.bf16.msra.mxu0 0
        %1009 = vmatprep.subr.bf16.mxu0 0
        %1010 = vmatpush1.bf16.msra.mxu0 0
        %1011 = vmatprep.subr.bf16.mxu0 0
        %1012 = vmatpush1.bf16.msra.mxu0 0
        %1013 = vmatprep.subr.bf16.mxu0 0
        %1014 = vmatpush1.bf16.msra.mxu0 0
        %1015 = vmatprep.subr.bf16.mxu0 0
        %1016 = vmatpush1.bf16.msra.mxu0 0
        %1017 = vmatprep.mubr.bf16.mxu0 0
        %1018 = vmatmul.mubr.bf16.gmra.mrb[0].mxu0 %v977
        %v1019 = vpop.f32.mrb[0].mxu0
        %v1020 = vadd.f32 0.0, %v1019
        %v1021 = vpop.f32.mrb[0].mxu0
        %v1022 = vpop.f32.mrb[0].mxu0
        %v1023 = vadd.f32 0.0, %v1022
        %v1024 = vpop.f32.mrb[0].mxu0
        %1025 = vmatprep.mubr.bf16.mxu0 0
        %1026 = vmatmul.mubr.bf16.gmra.mrb[0].mxu0 %v980
        %v1027 = vpop.f32.mrb[0].mxu0
        %v1028 = vadd.f32 0.0, %v1027
        %v1029 = vpop.f32.mrb[0].mxu0
        %v1030 = vpop.f32.mrb[0].mxu0
        %v1031 = vadd.f32 0.0, %v1030
        %v1032 = vpop.f32.mrb[0].mxu0
        %1033 = vmatprep.mubr.bf16.mxu0 0
        %1034 = vmatmul.mubr.bf16.gmra.mrb[0].mxu0 %v983
        %v1035 = vpop.f32.mrb[0].mxu0
        %v1036 = vadd.f32 0.0, %v1035
        %v1037 = vpop.f32.mrb[0].mxu0
        %v1038 = vpop.f32.mrb[0].mxu0
        %v1039 = vpop.f32.mrb[0].mxu0
        %1040 = vdwg.mxu0
        %v1046 = vunpack.c.l.b16 %v953
        %v1047 = vunpack.c.h.b16 %v953
        %v1048 = vunpack.c.l.b16 %v955
        %v1049 = vunpack.c.h.b16 %v955
        %v1050 = vunpack.c.l.b16 %v957
        %v1051 = vunpack.c.h.b16 %v957
        %v1052 = vunpack.c.l.b16 %v959
        %v1053 = vunpack.c.h.b16 %v959
        %v1054 = vunpack.c.l.b16 %v961
        %v1055 = vunpack.c.h.b16 %v961
        %v1056 = vpack.c.b16 %v1048, %v1046
        %v1057 = vpack.c.b16 %v1049, %v1047
        %v1058 = vpack.c.b16 %v1052, %v1050
        %v1059 = vpack.c.b16 %v1053, %v1051
        %v1060 = vpack.c.b16 %v1054, %v1054
        %v1061 = vpack.c.b16 %v1055, %v1055
        %1068 = vmatprep.subr.bf16.mxu0 0
        %1069 = vmatpush1.bf16.msra.mxu0 %v510
        %1070 = vmatprep.subr.bf16.mxu0 0
        %1071 = vmatpush1.bf16.msra.mxu0 %v511
        %1072 = vmatprep.subr.bf16.mxu0 0
        %1073 = vmatpush1.bf16.msra.mxu0 %v512
        %1074 = vmatprep.subr.bf16.mxu0 0
        %1075 = vmatpush1.bf16.msra.mxu0 %v513
        %1076 = vmatprep.subr.bf16.mxu0 0
        %1077 = vmatpush1.bf16.msra.mxu0 %v514
        %1078 = vmatprep.subr.bf16.mxu0 0
        %1079 = vmatpush1.bf16.msra.mxu0 %v515
        %1080 = vmatprep.subr.bf16.mxu0 0
        %1081 = vmatpush1.bf16.msra.mxu0 %v516
        %1082 = vmatprep.subr.bf16.mxu0 0
        %1083 = vmatpush1.bf16.msra.mxu0 %v517
        %1084 = vmatprep.subr.bf16.mxu0 0
        %1085 = vmatpush1.bf16.msra.mxu0 %v518
        %1086 = vmatprep.subr.bf16.mxu0 0
        %1087 = vmatpush1.bf16.msra.mxu0 %v519
        %1088 = vmatprep.subr.bf16.mxu0 0
        %1089 = vmatpush1.bf16.msra.mxu0 %v520
        %1090 = vmatprep.subr.bf16.mxu0 0
        %1091 = vmatpush1.bf16.msra.mxu0 %v521
        %1092 = vmatprep.subr.bf16.mxu0 0
        %1093 = vmatpush1.bf16.msra.mxu0 %v522
        %1094 = vmatprep.subr.bf16.mxu0 0
        %1095 = vmatpush1.bf16.msra.mxu0 %v523
        %1096 = vmatprep.subr.bf16.mxu0 0
        %1097 = vmatpush1.bf16.msra.mxu0 %v524
        %1098 = vmatprep.subr.bf16.mxu0 0
        %1099 = vmatpush1.bf16.msra.mxu0 %v525
        %1100 = vmatprep.mubr.bf16.mxu0 %v1057
        %1101 = vmatmul.mubr.bf16.gmra.mrb[0].mxu0 %v1056
        %v1102 = vpop.f32.mrb[0].mxu0
        %v1103 = vadd.f32 %v1020, %v1102
        %v1104 = vpop.f32.mrb[0].mxu0
        %v1105 = vpop.f32.mrb[0].mxu0
        %v1106 = vadd.f32 %v1023, %v1105
        %v1107 = vpop.f32.mrb[0].mxu0
        %1108 = vmatprep.mubr.bf16.mxu0 %v1059
        %1109 = vmatmul.mubr.bf16.gmra.mrb[0].mxu0 %v1058
        %v1110 = vpop.f32.mrb[0].mxu0
        %v1111 = vadd.f32 %v1028, %v1110
        %v1112 = vpop.f32.mrb[0].mxu0
        %v1113 = vpop.f32.mrb[0].mxu0
        %v1114 = vadd.f32 %v1031, %v1113
        %v1115 = vpop.f32.mrb[0].mxu0
        %1116 = vmatprep.mubr.bf16.mxu0 %v1061
        %1117 = vmatmul.mubr.bf16.gmra.mrb[0].mxu0 %v1060
        %v1118 = vpop.f32.mrb[0].mxu0
        %v1119 = vadd.f32 %v1036, %v1118
        %v1120 = vpop.f32.mrb[0].mxu0
        %v1121 = vpop.f32.mrb[0].mxu0
        %v1122 = vpop.f32.mrb[0].mxu0
        %1123 = vdwg.mxu0
        %v1124 = vmax.f32 %v947, %v1103
        %v1125 = vmax.f32 %v948, %v1106
        %v1126 = vmax.f32 %v949, %v1111
        %v1127 = vmax.f32 %v950, %v1114
        %v1128 = vmax.f32 %v951, %v1119
        %v1129 = vld [vmem:[%s2] sm:$0x1]
        %v1131 = vlaneseq
        %v1132 = vshrl.u32 %v1131, 7
        %v1133 = vsub.s32 0, %v1132
        %v1134 = vrot.slane %v1129, %v1133
        %v1136 = vadd.f32 %v1124, %v1134
        %v1137 = vadd.f32 %v1125, %v1134
        %v1138 = vadd.f32 %v1126, %v1134
        %v1139 = vadd.f32 %v1127, %v1134
        %v1140 = vadd.f32 %v1128, %v1134
        %v1141 = vmax.f32 %v1136, 0.0
        %v1142 = vmax.f32 %v1137, 0.0
        %v1143 = vmax.f32 %v1138, 0.0
        %v1144 = vmax.f32 %v1139, 0.0
        %v1145 = vmax.f32 %v1140, 0.0
        %v1146 = vpack.c.bf16 %v1142, %v1141
        %v1147 = vpack.c.bf16 %v1144, %v1143
        %v1148 = vpack.c.bf16 %v1145, %v1145
        %v1152 = vunpack.c.l.b16 %v1146
        %v1153 = vunpack.c.h.b16 %v1146
        %v1154 = vunpack.c.l.b16 %v1147
        %v1155 = vunpack.c.h.b16 %v1147
        %v1156 = vunpack.c.l.b16 %v1148
        %v1157 = vpack.c.b16 %v1152, %v1152
        %v1158 = vpack.c.b16 %v1153, %v1153
        %v1159 = vpack.c.b16 %v1154, %v1154
        %v1160 = vpack.c.b16 %v1155, %v1155
        %v1161 = vpack.c.b16 %v1156, %v1156
        %1167 = vst [vmem:[%s279] sm:$0xf] %v1157
        %1168 = vst [vmem:[%s279 + $0x4] sm:$0xf] %v1158
        %1169 = vst [vmem:[%s279 + $0x8] sm:$0xf] %v1159
        %1170 = vst [vmem:[%s279 + $0xc] sm:$0xf] %v1160
        %1171 = vst [vmem:[%s279 + $0x10] sm:$0xf] %v1161
        %s1172 = smul.u32 5, %s14
        %p1173 = scmp.lt.s32.totalorder %s1172, 9
        %s1174 = scalar_select %p1173, %s1172, 9
        %s1175 = smul.addr %s1174, 4
        %s1176 = scalar_lea.vmem %s3, %s1175
        // Predicated region
        $region59: #{simple_cnn_forward.4} parent=53 // pred_check
          %p1177 = pneg %p100
        $region60: #{simple_cnn_forward.4} parent=53 // pred_check_branch
          %1179 = sbr.rel (%p1177) target = $region62
        $region61: #{simple_cnn_forward.4} parent=53 // pred_region
          %s1180 = smul.u32 5, %s14
        $region62: #{simple_cnn_forward.4} parent=53 // pred_fallthru
          _
      $region54: #{simple_cnn_forward.4} parent=5 // pred_fallthru
        _
      %p1181 = scmp.le.s32.totalorder 2, %s9
      // Predicated region
      $region63: #{simple_cnn_forward.4} parent=5 // pred_check
        %p1182 = pneg %p1181
      $region64: #{simple_cnn_forward.4} parent=5 // pred_check_branch
        %1184 = sbr.rel (%p1182) target = $region66
      $region65: #{simple_cnn_forward.4} parent=5 // pred_region
        %s1185 = ssub.s32 %s9, 2
        // Predicated region
        $region67: #{simple_cnn_forward.4} parent=65 // pred_check
          %p1186 = pneg %p106
        $region68: #{simple_cnn_forward.4} parent=65 // pred_check_branch
          %1188 = sbr.rel (%p1186) target = $region70
        $region69: #{simple_cnn_forward.4} parent=65 // pred_region
          %s1189 = smul.u32 5, %s15
          %p1190 = scmp.lt.s32.totalorder %s1189, 9
          %s1191 = scalar_select %p1190, %s1189, 9
          %s1192 = smul.addr %s1191, 4
          %s1193 = scalar_lea.vmem %s3, %s1192
        $region70: #{simple_cnn_forward.4} parent=65 // pred_fallthru
          _
      $region66: #{simple_cnn_forward.4} parent=5 // pred_fallthru
        _
    $region6: #{simple_cnn_forward.4} parent=1 // loop_footer
      %s13 = sadd.s32 1, %s9
    $region7: #{simple_cnn_forward.4} parent=1 // loop_footer_branch
      %8 = sbr.rel target = $region3
    $region8: #{simple_cnn_forward.4} parent=1 // loop_exit
      _

// kernel: simple_cnn_forward.5
$region0: #{simple_cnn_forward.5}
  #allocation0 [shape = 'u32[]', space=smem, size = 0x4, offset = 0x4, fixed_abs, tag = 'smem constant byte address 0x4 - core index']
  #allocation1 [shape = 'u32[144,128]{1,0:T(1,128)}', space=vmem, size = 0x12000, scoped, tag = 'internal scratch']
  %s0 = inlined_call_operand.vmem [shape: bf16[2,2304], index: 0, kind: input, shape index: {}]
  %s1 = inlined_call_operand.vmem [shape: bf16[2304,128], index: 1, kind: input, shape index: {}]
  %s2 = inlined_call_operand.vmem [shape: f32[1,128], index: 2, kind: input, shape index: {}]
  %s3 = inlined_call_operand.vmem [shape: bf16[128,128], index: 3, kind: input, shape index: {}]
  %s4 = inlined_call_operand.vmem [shape: f32[1,128], index: 4, kind: input, shape index: {}]
  %s5 = inlined_call_operand.hbm [shape: f32[2,128], index: 5, kind: output, shape index: {}]
  %s6 = sld [smem:[#allocation0]]
  $region30: #{simple_cnn_forward.5} parent=0
    _
  %s8 = ssub.s32 1, %s6
  %s9 = scalar_select 0, %s8, %s6
  $region1: #{simple_cnn_forward.5} parent=0
    #allocation2 [shape = 'u8[1024]{0}', space=vmem, size = 0x400, scoped, tag = 'output window, operand 0, single buffered']
    #allocation3 [shape = 's32[1]{0}', space=sflag, size = 0x4, scoped, tag = 'scoped memory for simple_cnn_forward.5']
    %10 = vsyncpa [#allocation3], 0
    // Predicated region
    $region2: #{simple_cnn_forward.5} parent=1 // pred_check
      _
    $region3: #{simple_cnn_forward.5} parent=1 // pred_check_branch
      %12 = sbr.rel (0) target = $region5
    $region4: #{simple_cnn_forward.5} parent=1 // pred_region
      _
    $region5: #{simple_cnn_forward.5} parent=1 // pred_fallthru
      _
    // Predicated region
    $region6: #{simple_cnn_forward.5} parent=1 // pred_check
      _
    $region7: #{simple_cnn_forward.5} parent=1 // pred_check_branch
      %14 = sbr.rel (0) target = $region9
    $region8: #{simple_cnn_forward.5} parent=1 // pred_region
      _
    $region9: #{simple_cnn_forward.5} parent=1 // pred_fallthru
      _
    // Predicated region
    $region10: #{simple_cnn_forward.5} parent=1 // pred_check
      _
    $region11: #{simple_cnn_forward.5} parent=1 // pred_check_branch
      %16 = sbr.rel (0) target = $region13
    $region12: #{simple_cnn_forward.5} parent=1 // pred_region
      _
    $region13: #{simple_cnn_forward.5} parent=1 // pred_fallthru
      _
    // Predicated region
    $region14: #{simple_cnn_forward.5} parent=1 // pred_check
      _
    $region15: #{simple_cnn_forward.5} parent=1 // pred_check_branch
      %18 = sbr.rel (0) target = $region17
    $region16: #{simple_cnn_forward.5} parent=1 // pred_region
      _
    $region17: #{simple_cnn_forward.5} parent=1 // pred_fallthru
      _
    // Predicated region
    $region18: #{simple_cnn_forward.5} parent=1 // pred_check
      _
    $region19: #{simple_cnn_forward.5} parent=1 // pred_check_branch
      %20 = sbr.rel (0) target = $region21
    $region20: #{simple_cnn_forward.5} parent=1 // pred_region
      _
    $region21: #{simple_cnn_forward.5} parent=1 // pred_fallthru
      _
    %v22 = vld [vmem:[%s0] sm:$0xff]
    %v23 = vld [vmem:[%s0 + $0x8] sm:$0xff]
    %v24 = vld [vmem:[%s0 + $0x10] sm:$0x3]
    %v25 = vld [vmem:[%s1] sm:$0xf]
    %v26 = vld [vmem:[%s1 + $0x4] sm:$0xf]
    %v27 = vld [vmem:[%s1 + $0x8] sm:$0xf]
    %v28 = vld [vmem:[%s1 + $0xc] sm:$0xf]
    %v29 = vld [vmem:[%s1 + $0x10] sm:$0xf]
    %v30 = vld [vmem:[%s1 + $0x14] sm:$0xf]
    %v31 = vld [vmem:[%s1 + $0x18] sm:$0xf]
    %v32 = vld [vmem:[%s1 + $0x1c] sm:$0xf]
    %v33 = vld [vmem:[%s1 + $0x20] sm:$0xf]
    %v34 = vld [vmem:[%s1 + $0x24] sm:$0xf]
    %v35 = vld [vmem:[%s1 + $0x28] sm:$0xf]
    %v36 = vld [vmem:[%s1 + $0x2c] sm:$0xf]
    %v37 = vld [vmem:[%s1 + $0x30] sm:$0xf]
    %v38 = vld [vmem:[%s1 + $0x34] sm:$0xf]
    %v39 = vld [vmem:[%s1 + $0x38] sm:$0xf]
    %v40 = vld [vmem:[%s1 + $0x3c] sm:$0xf]
    %v41 = vld [vmem:[%s1 + $0x40] sm:$0xf]
    %v42 = vld [vmem:[%s1 + $0x44] sm:$0xf]
    %v43 = vld [vmem:[%s1 + $0x48] sm:$0xf]
    %v44 = vld [vmem:[%s1 + $0x4c] sm:$0xf]
    %v45 = vld [vmem:[%s1 + $0x50] sm:$0xf]
    %v46 = vld [vmem:[%s1 + $0x54] sm:$0xf]
    %v47 = vld [vmem:[%s1 + $0x58] sm:$0xf]
    %v48 = vld [vmem:[%s1 + $0x5c] sm:$0xf]
    %v49 = vld [vmem:[%s1 + $0x60] sm:$0xf]
    %v50 = vld [vmem:[%s1 + $0x64] sm:$0xf]
    %v51 = vld [vmem:[%s1 + $0x68] sm:$0xf]
    %v52 = vld [vmem:[%s1 + $0x6c] sm:$0xf]
    %v53 = vld [vmem:[%s1 + $0x70] sm:$0xf]
    %v54 = vld [vmem:[%s1 + $0x74] sm:$0xf]
    %v55 = vld [vmem:[%s1 + $0x78] sm:$0xf]
    %v56 = vld [vmem:[%s1 + $0x7c] sm:$0xf]
    %v57 = vld [vmem:[%s1 + $0x80] sm:$0xf]
    %v58 = vld [vmem:[%s1 + $0x84] sm:$0xf]
    %v59 = vld [vmem:[%s1 + $0x88] sm:$0xf]
    %v60 = vld [vmem:[%s1 + $0x8c] sm:$0xf]
    %v61 = vld [vmem:[%s1 + $0x90] sm:$0xf]
    %v62 = vld [vmem:[%s1 + $0x94] sm:$0xf]
    %v63 = vld [vmem:[%s1 + $0x98] sm:$0xf]
    %v64 = vld [vmem:[%s1 + $0x9c] sm:$0xf]
    %v65 = vld [vmem:[%s1 + $0xa0] sm:$0xf]
    %v66 = vld [vmem:[%s1 + $0xa4] sm:$0xf]
    %v67 = vld [vmem:[%s1 + $0xa8] sm:$0xf]
    %v68 = vld [vmem:[%s1 + $0xac] sm:$0xf]
    %v69 = vld [vmem:[%s1 + $0xb0] sm:$0xf]
    %v70 = vld [vmem:[%s1 + $0xb4] sm:$0xf]
    %v71 = vld [vmem:[%s1 + $0xb8] sm:$0xf]
    %v72 = vld [vmem:[%s1 + $0xbc] sm:$0xf]
    %v73 = vld [vmem:[%s1 + $0xc0] sm:$0xf]
    %v74 = vld [vmem:[%s1 + $0xc4] sm:$0xf]
    %v75 = vld [vmem:[%s1 + $0xc8] sm:$0xf]
    %v76 = vld [vmem:[%s1 + $0xcc] sm:$0xf]
    %v77 = vld [vmem:[%s1 + $0xd0] sm:$0xf]
    %v78 = vld [vmem:[%s1 + $0xd4] sm:$0xf]
    %v79 = vld [vmem:[%s1 + $0xd8] sm:$0xf]
    %v80 = vld [vmem:[%s1 + $0xdc] sm:$0xf]
    %v81 = vld [vmem:[%s1 + $0xe0] sm:$0xf]
    %v82 = vld [vmem:[%s1 + $0xe4] sm:$0xf]
    %v83 = vld [vmem:[%s1 + $0xe8] sm:$0xf]
    %v84 = vld [vmem:[%s1 + $0xec] sm:$0xf]
    %v85 = vld [vmem:[%s1 + $0xf0] sm:$0xf]
    %v86 = vld [vmem:[%s1 + $0xf4] sm:$0xf]
    %v87 = vld [vmem:[%s1 + $0xf8] sm:$0xf]
    %v88 = vld [vmem:[%s1 + $0xfc] sm:$0xf]
    %v89 = vld [vmem:[%s1 + $0x100] sm:$0xf]
    %v90 = vld [vmem:[%s1 + $0x104] sm:$0xf]
    %v91 = vld [vmem:[%s1 + $0x108] sm:$0xf]
    %v92 = vld [vmem:[%s1 + $0x10c] sm:$0xf]
    %v93 = vld [vmem:[%s1 + $0x110] sm:$0xf]
    %v94 = vld [vmem:[%s1 + $0x114] sm:$0xf]
    %v95 = vld [vmem:[%s1 + $0x118] sm:$0xf]
    %v96 = vld [vmem:[%s1 + $0x11c] sm:$0xf]
    %v97 = vld [vmem:[%s1 + $0x120] sm:$0xf]
    %v98 = vld [vmem:[%s1 + $0x124] sm:$0xf]
    %v99 = vld [vmem:[%s1 + $0x128] sm:$0xf]
    %v100 = vld [vmem:[%s1 + $0x12c] sm:$0xf]
    %v101 = vld [vmem:[%s1 + $0x130] sm:$0xf]
    %v102 = vld [vmem:[%s1 + $0x134] sm:$0xf]
    %v103 = vld [vmem:[%s1 + $0x138] sm:$0xf]
    %v104 = vld [vmem:[%s1 + $0x13c] sm:$0xf]
    %v105 = vld [vmem:[%s1 + $0x140] sm:$0xf]
    %v106 = vld [vmem:[%s1 + $0x144] sm:$0xf]
    %v107 = vld [vmem:[%s1 + $0x148] sm:$0xf]
    %v108 = vld [vmem:[%s1 + $0x14c] sm:$0xf]
    %v109 = vld [vmem:[%s1 + $0x150] sm:$0xf]
    %v110 = vld [vmem:[%s1 + $0x154] sm:$0xf]
    %v111 = vld [vmem:[%s1 + $0x158] sm:$0xf]
    %v112 = vld [vmem:[%s1 + $0x15c] sm:$0xf]
    %v113 = vld [vmem:[%s1 + $0x160] sm:$0xf]
    %v114 = vld [vmem:[%s1 + $0x164] sm:$0xf]
    %v115 = vld [vmem:[%s1 + $0x168] sm:$0xf]
    %v116 = vld [vmem:[%s1 + $0x16c] sm:$0xf]
    %v117 = vld [vmem:[%s1 + $0x170] sm:$0xf]
    %v118 = vld [vmem:[%s1 + $0x174] sm:$0xf]
    %v119 = vld [vmem:[%s1 + $0x178] sm:$0xf]
    %v120 = vld [vmem:[%s1 + $0x17c] sm:$0xf]
    %v121 = vld [vmem:[%s1 + $0x180] sm:$0xf]
    %v122 = vld [vmem:[%s1 + $0x184] sm:$0xf]
    %v123 = vld [vmem:[%s1 + $0x188] sm:$0xf]
    %v124 = vld [vmem:[%s1 + $0x18c] sm:$0xf]
    %v125 = vld [vmem:[%s1 + $0x190] sm:$0xf]
    %v126 = vld [vmem:[%s1 + $0x194] sm:$0xf]
    %v127 = vld [vmem:[%s1 + $0x198] sm:$0xf]
    %v128 = vld [vmem:[%s1 + $0x19c] sm:$0xf]
    %v129 = vld [vmem:[%s1 + $0x1a0] sm:$0xf]
    %v130 = vld [vmem:[%s1 + $0x1a4] sm:$0xf]
    %v131 = vld [vmem:[%s1 + $0x1a8] sm:$0xf]
    %v132 = vld [vmem:[%s1 + $0x1ac] sm:$0xf]
    %v133 = vld [vmem:[%s1 + $0x1b0] sm:$0xf]
    %v134 = vld [vmem:[%s1 + $0x1b4] sm:$0xf]
    %v135 = vld [vmem:[%s1 + $0x1b8] sm:$0xf]
    %v136 = vld [vmem:[%s1 + $0x1bc] sm:$0xf]
    %v137 = vld [vmem:[%s1 + $0x1c0] sm:$0xf]
    %v138 = vld [vmem:[%s1 + $0x1c4] sm:$0xf]
    %v139 = vld [vmem:[%s1 + $0x1c8] sm:$0xf]
    %v140 = vld [vmem:[%s1 + $0x1cc] sm:$0xf]
    %v141 = vld [vmem:[%s1 + $0x1d0] sm:$0xf]
    %v142 = vld [vmem:[%s1 + $0x1d4] sm:$0xf]
    %v143 = vld [vmem:[%s1 + $0x1d8] sm:$0xf]
    %v144 = vld [vmem:[%s1 + $0x1dc] sm:$0xf]
    %v145 = vld [vmem:[%s1 + $0x1e0] sm:$0xf]
    %v146 = vld [vmem:[%s1 + $0x1e4] sm:$0xf]
    %v147 = vld [vmem:[%s1 + $0x1e8] sm:$0xf]
    %v148 = vld [vmem:[%s1 + $0x1ec] sm:$0xf]
    %v149 = vld [vmem:[%s1 + $0x1f0] sm:$0xf]
    %v150 = vld [vmem:[%s1 + $0x1f4] sm:$0xf]
    %v151 = vld [vmem:[%s1 + $0x1f8] sm:$0xf]
    %v152 = vld [vmem:[%s1 + $0x1fc] sm:$0xf]
    %v153 = vld [vmem:[%s1 + $0x200] sm:$0xf]
    %v154 = vld [vmem:[%s1 + $0x204] sm:$0xf]
    %v155 = vld [vmem:[%s1 + $0x208] sm:$0xf]
    %v156 = vld [vmem:[%s1 + $0x20c] sm:$0xf]
    %v157 = vld [vmem:[%s1 + $0x210] sm:$0xf]
    %v158 = vld [vmem:[%s1 + $0x214] sm:$0xf]
    %v159 = vld [vmem:[%s1 + $0x218] sm:$0xf]
    %v160 = vld [vmem:[%s1 + $0x21c] sm:$0xf]
    %v161 = vld [vmem:[%s1 + $0x220] sm:$0xf]
    %v162 = vld [vmem:[%s1 + $0x224] sm:$0xf]
    %v163 = vld [vmem:[%s1 + $0x228] sm:$0xf]
    %v164 = vld [vmem:[%s1 + $0x22c] sm:$0xf]
    %v165 = vld [vmem:[%s1 + $0x230] sm:$0xf]
    %v166 = vld [vmem:[%s1 + $0x234] sm:$0xf]
    %v167 = vld [vmem:[%s1 + $0x238] sm:$0xf]
    %v168 = vld [vmem:[%s1 + $0x23c] sm:$0xf]
    %v169 = vld [vmem:[%s1 + $0x240] sm:$0xf]
    %v170 = vld [vmem:[%s1 + $0x244] sm:$0xf]
    %v171 = vld [vmem:[%s1 + $0x248] sm:$0xf]
    %v172 = vld [vmem:[%s1 + $0x24c] sm:$0xf]
    %v173 = vld [vmem:[%s1 + $0x250] sm:$0xf]
    %v174 = vld [vmem:[%s1 + $0x254] sm:$0xf]
    %v175 = vld [vmem:[%s1 + $0x258] sm:$0xf]
    %v176 = vld [vmem:[%s1 + $0x25c] sm:$0xf]
    %v177 = vld [vmem:[%s1 + $0x260] sm:$0xf]
    %v178 = vld [vmem:[%s1 + $0x264] sm:$0xf]
    %v179 = vld [vmem:[%s1 + $0x268] sm:$0xf]
    %v180 = vld [vmem:[%s1 + $0x26c] sm:$0xf]
    %v181 = vld [vmem:[%s1 + $0x270] sm:$0xf]
    %v182 = vld [vmem:[%s1 + $0x274] sm:$0xf]
    %v183 = vld [vmem:[%s1 + $0x278] sm:$0xf]
    %v184 = vld [vmem:[%s1 + $0x27c] sm:$0xf]
    %v185 = vld [vmem:[%s1 + $0x280] sm:$0xf]
    %v186 = vld [vmem:[%s1 + $0x284] sm:$0xf]
    %v187 = vld [vmem:[%s1 + $0x288] sm:$0xf]
    %v188 = vld [vmem:[%s1 + $0x28c] sm:$0xf]
    %v189 = vld [vmem:[%s1 + $0x290] sm:$0xf]
    %v190 = vld [vmem:[%s1 + $0x294] sm:$0xf]
    %v191 = vld [vmem:[%s1 + $0x298] sm:$0xf]
    %v192 = vld [vmem:[%s1 + $0x29c] sm:$0xf]
    %v193 = vld [vmem:[%s1 + $0x2a0] sm:$0xf]
    %v194 = vld [vmem:[%s1 + $0x2a4] sm:$0xf]
    %v195 = vld [vmem:[%s1 + $0x2a8] sm:$0xf]
    %v196 = vld [vmem:[%s1 + $0x2ac] sm:$0xf]
    %v197 = vld [vmem:[%s1 + $0x2b0] sm:$0xf]
    %v198 = vld [vmem:[%s1 + $0x2b4] sm:$0xf]
    %v199 = vld [vmem:[%s1 + $0x2b8] sm:$0xf]
    %v200 = vld [vmem:[%s1 + $0x2bc] sm:$0xf]
    %v201 = vld [vmem:[%s1 + $0x2c0] sm:$0xf]
    %v202 = vld [vmem:[%s1 + $0x2c4] sm:$0xf]
    %v203 = vld [vmem:[%s1 + $0x2c8] sm:$0xf]
    %v204 = vld [vmem:[%s1 + $0x2cc] sm:$0xf]
    %v205 = vld [vmem:[%s1 + $0x2d0] sm:$0xf]
    %v206 = vld [vmem:[%s1 + $0x2d4] sm:$0xf]
    %v207 = vld [vmem:[%s1 + $0x2d8] sm:$0xf]
    %v208 = vld [vmem:[%s1 + $0x2dc] sm:$0xf]
    %v209 = vld [vmem:[%s1 + $0x2e0] sm:$0xf]
    %v210 = vld [vmem:[%s1 + $0x2e4] sm:$0xf]
    %v211 = vld [vmem:[%s1 + $0x2e8] sm:$0xf]
    %v212 = vld [vmem:[%s1 + $0x2ec] sm:$0xf]
    %v213 = vld [vmem:[%s1 + $0x2f0] sm:$0xf]
    %v214 = vld [vmem:[%s1 + $0x2f4] sm:$0xf]
    %v215 = vld [vmem:[%s1 + $0x2f8] sm:$0xf]
    %v216 = vld [vmem:[%s1 + $0x2fc] sm:$0xf]
    %v217 = vld [vmem:[%s1 + $0x300] sm:$0xf]
    %v218 = vld [vmem:[%s1 + $0x304] sm:$0xf]
    %v219 = vld [vmem:[%s1 + $0x308] sm:$0xf]
    %v220 = vld [vmem:[%s1 + $0x30c] sm:$0xf]
    %v221 = vld [vmem:[%s1 + $0x310] sm:$0xf]
    %v222 = vld [vmem:[%s1 + $0x314] sm:$0xf]
    %v223 = vld [vmem:[%s1 + $0x318] sm:$0xf]
    %v224 = vld [vmem:[%s1 + $0x31c] sm:$0xf]
    %v225 = vld [vmem:[%s1 + $0x320] sm:$0xf]
    %v226 = vld [vmem:[%s1 + $0x324] sm:$0xf]
    %v227 = vld [vmem:[%s1 + $0x328] sm:$0xf]
    %v228 = vld [vmem:[%s1 + $0x32c] sm:$0xf]
    %v229 = vld [vmem:[%s1 + $0x330] sm:$0xf]
    %v230 = vld [vmem:[%s1 + $0x334] sm:$0xf]
    %v231 = vld [vmem:[%s1 + $0x338] sm:$0xf]
    %v232 = vld [vmem:[%s1 + $0x33c] sm:$0xf]
    %v233 = vld [vmem:[%s1 + $0x340] sm:$0xf]
    %v234 = vld [vmem:[%s1 + $0x344] sm:$0xf]
    %v235 = vld [vmem:[%s1 + $0x348] sm:$0xf]
    %v236 = vld [vmem:[%s1 + $0x34c] sm:$0xf]
    %v237 = vld [vmem:[%s1 + $0x350] sm:$0xf]
    %v238 = vld [vmem:[%s1 + $0x354] sm:$0xf]
    %v239 = vld [vmem:[%s1 + $0x358] sm:$0xf]
    %v240 = vld [vmem:[%s1 + $0x35c] sm:$0xf]
    %v241 = vld [vmem:[%s1 + $0x360] sm:$0xf]
    %v242 = vld [vmem:[%s1 + $0x364] sm:$0xf]
    %v243 = vld [vmem:[%s1 + $0x368] sm:$0xf]
    %v244 = vld [vmem:[%s1 + $0x36c] sm:$0xf]
    %v245 = vld [vmem:[%s1 + $0x370] sm:$0xf]
    %v246 = vld [vmem:[%s1 + $0x374] sm:$0xf]
    %v247 = vld [vmem:[%s1 + $0x378] sm:$0xf]
    %v248 = vld [vmem:[%s1 + $0x37c] sm:$0xf]
    %v249 = vld [vmem:[%s1 + $0x380] sm:$0xf]
    %v250 = vld [vmem:[%s1 + $0x384] sm:$0xf]
    %v251 = vld [vmem:[%s1 + $0x388] sm:$0xf]
    %v252 = vld [vmem:[%s1 + $0x38c] sm:$0xf]
    %v253 = vld [vmem:[%s1 + $0x390] sm:$0xf]
    %v254 = vld [vmem:[%s1 + $0x394] sm:$0xf]
    %v255 = vld [vmem:[%s1 + $0x398] sm:$0xf]
    %v256 = vld [vmem:[%s1 + $0x39c] sm:$0xf]
    %v257 = vld [vmem:[%s1 + $0x3a0] sm:$0xf]
    %v258 = vld [vmem:[%s1 + $0x3a4] sm:$0xf]
    %v259 = vld [vmem:[%s1 + $0x3a8] sm:$0xf]
    %v260 = vld [vmem:[%s1 + $0x3ac] sm:$0xf]
    %v261 = vld [vmem:[%s1 + $0x3b0] sm:$0xf]
    %v262 = vld [vmem:[%s1 + $0x3b4] sm:$0xf]
    %v263 = vld [vmem:[%s1 + $0x3b8] sm:$0xf]
    %v264 = vld [vmem:[%s1 + $0x3bc] sm:$0xf]
    %v265 = vld [vmem:[%s1 + $0x3c0] sm:$0xf]
    %v266 = vld [vmem:[%s1 + $0x3c4] sm:$0xf]
    %v267 = vld [vmem:[%s1 + $0x3c8] sm:$0xf]
    %v268 = vld [vmem:[%s1 + $0x3cc] sm:$0xf]
    %v269 = vld [vmem:[%s1 + $0x3d0] sm:$0xf]
    %v270 = vld [vmem:[%s1 + $0x3d4] sm:$0xf]
    %v271 = vld [vmem:[%s1 + $0x3d8] sm:$0xf]
    %v272 = vld [vmem:[%s1 + $0x3dc] sm:$0xf]
    %v273 = vld [vmem:[%s1 + $0x3e0] sm:$0xf]
    %v274 = vld [vmem:[%s1 + $0x3e4] sm:$0xf]
    %v275 = vld [vmem:[%s1 + $0x3e8] sm:$0xf]
    %v276 = vld [vmem:[%s1 + $0x3ec] sm:$0xf]
    %v277 = vld [vmem:[%s1 + $0x3f0] sm:$0xf]
    %v278 = vld [vmem:[%s1 + $0x3f4] sm:$0xf]
    %v279 = vld [vmem:[%s1 + $0x3f8] sm:$0xf]
    %v280 = vld [vmem:[%s1 + $0x3fc] sm:$0xf]
    %v281 = vld [vmem:[%s1 + $0x400] sm:$0xf]
    %v282 = vld [vmem:[%s1 + $0x404] sm:$0xf]
    %v283 = vld [vmem:[%s1 + $0x408] sm:$0xf]
    %v284 = vld [vmem:[%s1 + $0x40c] sm:$0xf]
    %v285 = vld [vmem:[%s1 + $0x410] sm:$0xf]
    %v286 = vld [vmem:[%s1 + $0x414] sm:$0xf]
    %v287 = vld [vmem:[%s1 + $0x418] sm:$0xf]
    %v288 = vld [vmem:[%s1 + $0x41c] sm:$0xf]
    %v289 = vld [vmem:[%s1 + $0x420] sm:$0xf]
    %v290 = vld [vmem:[%s1 + $0x424] sm:$0xf]
    %v291 = vld [vmem:[%s1 + $0x428] sm:$0xf]
    %v292 = vld [vmem:[%s1 + $0x42c] sm:$0xf]
    %v293 = vld [vmem:[%s1 + $0x430] sm:$0xf]
    %v294 = vld [vmem:[%s1 + $0x434] sm:$0xf]
    %v295 = vld [vmem:[%s1 + $0x438] sm:$0xf]
    %v296 = vld [vmem:[%s1 + $0x43c] sm:$0xf]
    %v297 = vld [vmem:[%s1 + $0x440] sm:$0xf]
    %v298 = vld [vmem:[%s1 + $0x444] sm:$0xf]
    %v299 = vld [vmem:[%s1 + $0x448] sm:$0xf]
    %v300 = vld [vmem:[%s1 + $0x44c] sm:$0xf]
    %v301 = vld [vmem:[%s1 + $0x450] sm:$0xf]
    %v302 = vld [vmem:[%s1 + $0x454] sm:$0xf]
    %v303 = vld [vmem:[%s1 + $0x458] sm:$0xf]
    %v304 = vld [vmem:[%s1 + $0x45c] sm:$0xf]
    %v305 = vld [vmem:[%s1 + $0x460] sm:$0xf]
    %v306 = vld [vmem:[%s1 + $0x464] sm:$0xf]
    %v307 = vld [vmem:[%s1 + $0x468] sm:$0xf]
    %v308 = vld [vmem:[%s1 + $0x46c] sm:$0xf]
    %v309 = vld [vmem:[%s1 + $0x470] sm:$0xf]
    %v310 = vld [vmem:[%s1 + $0x474] sm:$0xf]
    %v311 = vld [vmem:[%s1 + $0x478] sm:$0xf]
    %v312 = vld [vmem:[%s1 + $0x47c] sm:$0xf]
    %v313 = vld [vmem:[%s2] sm:$0x1]
    %v315 = vlaneseq
    %v316 = vshrl.u32 %v315, 7
    %v317 = vsub.s32 0, %v316
    %v318 = vrot.slane %v313, %v317
    %v323 = vcombine.high %v22, %v22
    %v325 = vunpack.c.l.s4 1966171168
    %v326 = vunpack.c.0.s8 %v325
    %v327 = vlaneseq
    %v328 = vshrl.u32 %v327, 7
    %v329 = vsub.s32 %v326, %v328
    %v330 = vrot.slane %v22, %v329
    %v332 = vunpack.c.l.s4 1966171168
    %v333 = vunpack.c.0.s8 %v332
    %v334 = vlaneseq
    %v335 = vshrl.u32 %v334, 7
    %v336 = vsub.s32 %v333, %v335
    %v337 = vrot.slane %v323, %v336
    %v338 = vcombine.high %v330, %v330
    %v339 = vcombine.high %v337, %v337
    %v341 = vunpack.c.l.s4 1966171168
    %v342 = vunpack.c.0.s8 %v341
    %v343 = vlaneseq
    %v344 = vshrl.u32 %v343, 7
    %v345 = vsub.s32 %v342, %v344
    %v346 = vrot.slane %v330, %v345
    %v348 = vunpack.c.l.s4 1966171168
    %v349 = vunpack.c.0.s8 %v348
    %v350 = vlaneseq
    %v351 = vshrl.u32 %v350, 7
    %v352 = vsub.s32 %v349, %v351
    %v353 = vrot.slane %v337, %v352
    %v355 = vunpack.c.l.s4 1966171168
    %v356 = vunpack.c.0.s8 %v355
    %v357 = vlaneseq
    %v358 = vshrl.u32 %v357, 7
    %v359 = vsub.s32 %v356, %v358
    %v360 = vrot.slane %v338, %v359
    %v362 = vunpack.c.l.s4 1966171168
    %v363 = vunpack.c.0.s8 %v362
    %v364 = vlaneseq
    %v365 = vshrl.u32 %v364, 7
    %v366 = vsub.s32 %v363, %v365
    %v367 = vrot.slane %v339, %v366
    %v368 = vcombine.high %v346, %v346
    %v369 = vcombine.high %v353, %v353
    %v370 = vcombine.high %v360, %v360
    %v371 = vcombine.high %v367, %v367
    %v372 = vcombine.high %v23, %v23
    %v374 = vunpack.c.l.s4 1966171168
    %v375 = vunpack.c.0.s8 %v374
    %v376 = vlaneseq
    %v377 = vshrl.u32 %v376, 7
    %v378 = vsub.s32 %v375, %v377
    %v379 = vrot.slane %v23, %v378
    %v381 = vunpack.c.l.s4 1966171168
    %v382 = vunpack.c.0.s8 %v381
    %v383 = vlaneseq
    %v384 = vshrl.u32 %v383, 7
    %v385 = vsub.s32 %v382, %v384
    %v386 = vrot.slane %v372, %v385
    %v387 = vcombine.high %v379, %v379
    %v388 = vcombine.high %v386, %v386
    %v390 = vunpack.c.l.s4 1966171168
    %v391 = vunpack.c.0.s8 %v390
    %v392 = vlaneseq
    %v393 = vshrl.u32 %v392, 7
    %v394 = vsub.s32 %v391, %v393
    %v395 = vrot.slane %v379, %v394
    %v397 = vunpack.c.l.s4 1966171168
    %v398 = vunpack.c.0.s8 %v397
    %v399 = vlaneseq
    %v400 = vshrl.u32 %v399, 7
    %v401 = vsub.s32 %v398, %v400
    %v402 = vrot.slane %v386, %v401
    %v404 = vunpack.c.l.s4 1966171168
    %v405 = vunpack.c.0.s8 %v404
    %v406 = vlaneseq
    %v407 = vshrl.u32 %v406, 7
    %v408 = vsub.s32 %v405, %v407
    %v409 = vrot.slane %v387, %v408
    %v411 = vunpack.c.l.s4 1966171168
    %v412 = vunpack.c.0.s8 %v411
    %v413 = vlaneseq
    %v414 = vshrl.u32 %v413, 7
    %v415 = vsub.s32 %v412, %v414
    %v416 = vrot.slane %v388, %v415
    %v417 = vcombine.high %v395, %v395
    %v418 = vcombine.high %v402, %v402
    %v419 = vcombine.high %v409, %v409
    %v420 = vcombine.high %v416, %v416
    %v422 = vunpack.c.l.s4 1966171168
    %v423 = vunpack.c.0.s8 %v422
    %v424 = vlaneseq
    %v425 = vshrl.u32 %v424, 7
    %v426 = vsub.s32 %v423, %v425
    %v427 = vrot.slane %v24, %v426
    %v428 = vcombine.high %v427, %v427
    %v430 = vunpack.c.l.s4 1966171168
    %v431 = vunpack.c.0.s8 %v430
    %v432 = vlaneseq
    %v433 = vshrl.u32 %v432, 7
    %v434 = vsub.s32 %v431, %v433
    %v435 = vrot.slane %v427, %v434
    %v437 = vunpack.c.l.s4 1966171168
    %v438 = vunpack.c.0.s8 %v437
    %v439 = vlaneseq
    %v440 = vshrl.u32 %v439, 7
    %v441 = vsub.s32 %v438, %v440
    %v442 = vrot.slane %v428, %v441
    %v749 = vunpack.c.l.b16 %v25
    %v750 = vunpack.c.l.b16 %v26
    %v751 = vunpack.c.l.b16 %v27
    %v752 = vunpack.c.l.b16 %v28
    %v753 = vunpack.c.l.b16 %v29
    %v754 = vunpack.c.l.b16 %v30
    %v755 = vunpack.c.l.b16 %v31
    %v756 = vunpack.c.l.b16 %v32
    %v757 = vunpack.c.l.b16 %v33
    %v758 = vunpack.c.l.b16 %v34
    %v759 = vunpack.c.l.b16 %v35
    %v760 = vunpack.c.l.b16 %v36
    %v761 = vunpack.c.l.b16 %v37
    %v762 = vunpack.c.l.b16 %v38
    %v763 = vunpack.c.l.b16 %v39
    %v764 = vunpack.c.l.b16 %v40
    %v765 = vunpack.c.l.b16 %v41
    %v766 = vunpack.c.l.b16 %v42
    %v767 = vunpack.c.l.b16 %v43
    %v768 = vunpack.c.l.b16 %v44
    %v769 = vunpack.c.l.b16 %v45
    %v770 = vunpack.c.l.b16 %v46
    %v771 = vunpack.c.l.b16 %v47
    %v772 = vunpack.c.l.b16 %v48
    %v773 = vunpack.c.l.b16 %v49
    %v774 = vunpack.c.l.b16 %v50
    %v775 = vunpack.c.l.b16 %v51
    %v776 = vunpack.c.l.b16 %v52
    %v777 = vunpack.c.l.b16 %v53
    %v778 = vunpack.c.l.b16 %v54
    %v779 = vunpack.c.l.b16 %v55
    %v780 = vunpack.c.l.b16 %v56
    %v781 = vunpack.c.l.b16 %v57
    %v782 = vunpack.c.l.b16 %v58
    %v783 = vunpack.c.l.b16 %v59
    %v784 = vunpack.c.l.b16 %v60
    %v785 = vunpack.c.l.b16 %v61
    %v786 = vunpack.c.l.b16 %v62
    %v787 = vunpack.c.l.b16 %v63
    %v788 = vunpack.c.l.b16 %v64
    %v789 = vunpack.c.l.b16 %v65
    %v790 = vunpack.c.l.b16 %v66
    %v791 = vunpack.c.l.b16 %v67
    %v792 = vunpack.c.l.b16 %v68
    %v793 = vunpack.c.l.b16 %v69
    %v794 = vunpack.c.l.b16 %v70
    %v795 = vunpack.c.l.b16 %v71
    %v796 = vunpack.c.l.b16 %v72
    %v797 = vunpack.c.l.b16 %v73
    %v798 = vunpack.c.l.b16 %v74
    %v799 = vunpack.c.l.b16 %v75
    %v800 = vunpack.c.l.b16 %v76
    %v801 = vunpack.c.l.b16 %v77
    %v802 = vunpack.c.l.b16 %v78
    %v803 = vunpack.c.l.b16 %v79
    %v804 = vunpack.c.l.b16 %v80
    %v805 = vunpack.c.l.b16 %v81
    %v806 = vunpack.c.l.b16 %v82
    %v807 = vunpack.c.l.b16 %v83
    %v808 = vunpack.c.l.b16 %v84
    %v809 = vunpack.c.l.b16 %v85
    %v810 = vunpack.c.l.b16 %v86
    %v811 = vunpack.c.l.b16 %v87
    %v812 = vunpack.c.l.b16 %v88
    %v813 = vunpack.c.l.b16 %v89
    %v814 = vunpack.c.l.b16 %v90
    %v815 = vunpack.c.l.b16 %v91
    %v816 = vunpack.c.l.b16 %v92
    %v817 = vunpack.c.l.b16 %v93
    %v818 = vunpack.c.l.b16 %v94
    %v819 = vunpack.c.l.b16 %v95
    %v820 = vunpack.c.l.b16 %v96
    %v821 = vunpack.c.l.b16 %v97
    %v822 = vunpack.c.l.b16 %v98
    %v823 = vunpack.c.l.b16 %v99
    %v824 = vunpack.c.l.b16 %v100
    %v825 = vunpack.c.l.b16 %v101
    %v826 = vunpack.c.l.b16 %v102
    %v827 = vunpack.c.l.b16 %v103
    %v828 = vunpack.c.l.b16 %v104
    %v829 = vunpack.c.l.b16 %v105
    %v830 = vunpack.c.l.b16 %v106
    %v831 = vunpack.c.l.b16 %v107
    %v832 = vunpack.c.l.b16 %v108
    %v833 = vunpack.c.l.b16 %v109
    %v834 = vunpack.c.l.b16 %v110
    %v835 = vunpack.c.l.b16 %v111
    %v836 = vunpack.c.l.b16 %v112
    %v837 = vunpack.c.l.b16 %v113
    %v838 = vunpack.c.l.b16 %v114
    %v839 = vunpack.c.l.b16 %v115
    %v840 = vunpack.c.l.b16 %v116
    %v841 = vunpack.c.l.b16 %v117
    %v842 = vunpack.c.l.b16 %v118
    %v843 = vunpack.c.l.b16 %v119
    %v844 = vunpack.c.l.b16 %v120
    %v845 = vunpack.c.l.b16 %v121
    %v846 = vunpack.c.l.b16 %v122
    %v847 = vunpack.c.l.b16 %v123
    %v848 = vunpack.c.l.b16 %v124
    %v849 = vunpack.c.l.b16 %v125
    %v850 = vunpack.c.l.b16 %v126
    %v851 = vunpack.c.l.b16 %v127
    %v852 = vunpack.c.l.b16 %v128
    %v853 = vunpack.c.l.b16 %v129
    %v854 = vunpack.c.l.b16 %v130
    %v855 = vunpack.c.l.b16 %v131
    %v856 = vunpack.c.l.b16 %v132
    %v857 = vunpack.c.l.b16 %v133
    %v858 = vunpack.c.l.b16 %v134
    %v859 = vunpack.c.l.b16 %v135
    %v860 = vunpack.c.l.b16 %v136
    %v861 = vunpack.c.l.b16 %v137
    %v862 = vunpack.c.l.b16 %v138
    %v863 = vunpack.c.l.b16 %v139
    %v864 = vunpack.c.l.b16 %v140
    %v865 = vunpack.c.l.b16 %v141
    %v866 = vunpack.c.l.b16 %v142
    %v867 = vunpack.c.l.b16 %v143
    %v868 = vunpack.c.l.b16 %v144
    %v869 = vunpack.c.l.b16 %v145
    %v870 = vunpack.c.l.b16 %v146
    %v871 = vunpack.c.l.b16 %v147
    %v872 = vunpack.c.l.b16 %v148
    %v873 = vunpack.c.l.b16 %v149
    %v874 = vunpack.c.l.b16 %v150
    %v875 = vunpack.c.l.b16 %v151
    %v876 = vunpack.c.l.b16 %v152
    %v877 = vunpack.c.l.b16 %v153
    %v878 = vunpack.c.l.b16 %v154
    %v879 = vunpack.c.l.b16 %v155
    %v880 = vunpack.c.l.b16 %v156
    %v881 = vunpack.c.l.b16 %v157
    %v882 = vunpack.c.l.b16 %v158
    %v883 = vunpack.c.l.b16 %v159
    %v884 = vunpack.c.l.b16 %v160
    %v885 = vunpack.c.l.b16 %v161
    %v886 = vunpack.c.l.b16 %v162
    %v887 = vunpack.c.l.b16 %v163
    %v888 = vunpack.c.l.b16 %v164
    %v889 = vunpack.c.l.b16 %v165
    %v890 = vunpack.c.l.b16 %v166
    %v891 = vunpack.c.l.b16 %v167
    %v892 = vunpack.c.l.b16 %v168
    %v893 = vunpack.c.l.b16 %v169
    %v894 = vunpack.c.l.b16 %v170
    %v895 = vunpack.c.l.b16 %v171
    %v896 = vunpack.c.l.b16 %v172
    %v897 = vunpack.c.l.b16 %v173
    %v898 = vunpack.c.l.b16 %v174
    %v899 = vunpack.c.l.b16 %v175
    %v900 = vunpack.c.l.b16 %v176
    %v901 = vunpack.c.l.b16 %v177
    %v902 = vunpack.c.l.b16 %v178
    %v903 = vunpack.c.l.b16 %v179
    %v904 = vunpack.c.l.b16 %v180
    %v905 = vunpack.c.l.b16 %v181
    %v906 = vunpack.c.l.b16 %v182
    %v907 = vunpack.c.l.b16 %v183
    %v908 = vunpack.c.l.b16 %v184
    %v909 = vunpack.c.l.b16 %v185
    %v910 = vunpack.c.l.b16 %v186
    %v911 = vunpack.c.l.b16 %v187
    %v912 = vunpack.c.l.b16 %v188
    %v913 = vunpack.c.l.b16 %v189
    %v914 = vunpack.c.l.b16 %v190
    %v915 = vunpack.c.l.b16 %v191
    %v916 = vunpack.c.l.b16 %v192
    %v917 = vunpack.c.l.b16 %v193
    %v918 = vunpack.c.l.b16 %v194
    %v919 = vunpack.c.l.b16 %v195
    %v920 = vunpack.c.l.b16 %v196
    %v921 = vunpack.c.l.b16 %v197
    %v922 = vunpack.c.l.b16 %v198
    %v923 = vunpack.c.l.b16 %v199
    %v924 = vunpack.c.l.b16 %v200
    %v925 = vunpack.c.l.b16 %v201
    %v926 = vunpack.c.l.b16 %v202
    %v927 = vunpack.c.l.b16 %v203
    %v928 = vunpack.c.l.b16 %v204
    %v929 = vunpack.c.l.b16 %v205
    %v930 = vunpack.c.l.b16 %v206
    %v931 = vunpack.c.l.b16 %v207
    %v932 = vunpack.c.l.b16 %v208
    %v933 = vunpack.c.l.b16 %v209
    %v934 = vunpack.c.l.b16 %v210
    %v935 = vunpack.c.l.b16 %v211
    %v936 = vunpack.c.l.b16 %v212
    %v937 = vunpack.c.l.b16 %v213
    %v938 = vunpack.c.l.b16 %v214
    %v939 = vunpack.c.l.b16 %v215
    %v940 = vunpack.c.l.b16 %v216
    %v941 = vunpack.c.l.b16 %v217
    %v942 = vunpack.c.l.b16 %v218
    %v943 = vunpack.c.l.b16 %v219
    %v944 = vunpack.c.l.b16 %v220
    %v945 = vunpack.c.l.b16 %v221
    %v946 = vunpack.c.l.b16 %v222
    %v947 = vunpack.c.l.b16 %v223
    %v948 = vunpack.c.l.b16 %v224
    %v949 = vunpack.c.l.b16 %v225
    %v950 = vunpack.c.l.b16 %v226
    %v951 = vunpack.c.l.b16 %v227
    %v952 = vunpack.c.l.b16 %v228
    %v953 = vunpack.c.l.b16 %v229
    %v954 = vunpack.c.l.b16 %v230
    %v955 = vunpack.c.l.b16 %v231
    %v956 = vunpack.c.l.b16 %v232
    %v957 = vunpack.c.l.b16 %v233
    %v958 = vunpack.c.l.b16 %v234
    %v959 = vunpack.c.l.b16 %v235
    %v960 = vunpack.c.l.b16 %v236
    %v961 = vunpack.c.l.b16 %v237
    %v962 = vunpack.c.l.b16 %v238
    %v963 = vunpack.c.l.b16 %v239
    %v964 = vunpack.c.l.b16 %v240
    %v965 = vunpack.c.l.b16 %v241
    %v966 = vunpack.c.l.b16 %v242
    %v967 = vunpack.c.l.b16 %v243
    %v968 = vunpack.c.l.b16 %v244
    %v969 = vunpack.c.l.b16 %v245
    %v970 = vunpack.c.l.b16 %v246
    %v971 = vunpack.c.l.b16 %v247
    %v972 = vunpack.c.l.b16 %v248
    %v973 = vunpack.c.l.b16 %v249
    %v974 = vunpack.c.l.b16 %v250
    %v975 = vunpack.c.l.b16 %v251
    %v976 = vunpack.c.l.b16 %v252
    %v977 = vunpack.c.l.b16 %v253
    %v978 = vunpack.c.l.b16 %v254
    %v979 = vunpack.c.l.b16 %v255
    %v980 = vunpack.c.l.b16 %v256
    %v981 = vunpack.c.l.b16 %v257
    %v982 = vunpack.c.l.b16 %v258
    %v983 = vunpack.c.l.b16 %v259
    %v984 = vunpack.c.l.b16 %v260
    %v985 = vunpack.c.l.b16 %v261
    %v986 = vunpack.c.l.b16 %v262
    %v987 = vunpack.c.l.b16 %v263
    %v988 = vunpack.c.l.b16 %v264
    %v989 = vunpack.c.l.b16 %v265
    %v990 = vunpack.c.l.b16 %v266
    %v991 = vunpack.c.l.b16 %v267
    %v992 = vunpack.c.l.b16 %v268
    %v993 = vunpack.c.l.b16 %v269
    %v994 = vunpack.c.l.b16 %v270
    %v995 = vunpack.c.l.b16 %v271
    %v996 = vunpack.c.l.b16 %v272
    %v997 = vunpack.c.l.b16 %v273
    %v998 = vunpack.c.l.b16 %v274
    %v999 = vunpack.c.l.b16 %v275
    %v1000 = vunpack.c.l.b16 %v276
    %v1001 = vunpack.c.l.b16 %v277
    %v1002 = vunpack.c.l.b16 %v278
    %v1003 = vunpack.c.l.b16 %v279
    %v1004 = vunpack.c.l.b16 %v280
    %v1005 = vunpack.c.l.b16 %v281
    %v1006 = vunpack.c.l.b16 %v282
    %v1007 = vunpack.c.l.b16 %v283
    %v1008 = vunpack.c.l.b16 %v284
    %v1009 = vunpack.c.l.b16 %v285
    %v1010 = vunpack.c.l.b16 %v286
    %v1011 = vunpack.c.l.b16 %v287
    %v1012 = vunpack.c.l.b16 %v288
    %v1013 = vunpack.c.l.b16 %v289
    %v1014 = vunpack.c.l.b16 %v290
    %v1015 = vunpack.c.l.b16 %v291
    %v1016 = vunpack.c.l.b16 %v292
    %v1017 = vunpack.c.l.b16 %v293
    %v1018 = vunpack.c.l.b16 %v294
    %v1019 = vunpack.c.l.b16 %v295
    %v1020 = vunpack.c.l.b16 %v296
    %v1021 = vunpack.c.l.b16 %v297
    %v1022 = vunpack.c.l.b16 %v298
    %v1023 = vunpack.c.l.b16 %v299
    %v1024 = vunpack.c.l.b16 %v300
    %v1025 = vunpack.c.l.b16 %v301
    %v1026 = vunpack.c.l.b16 %v302
    %v1027 = vunpack.c.l.b16 %v303
    %v1028 = vunpack.c.l.b16 %v304
    %v1029 = vunpack.c.l.b16 %v305
    %v1030 = vunpack.c.l.b16 %v306
    %v1031 = vunpack.c.l.b16 %v307
    %v1032 = vunpack.c.l.b16 %v308
    %v1033 = vunpack.c.l.b16 %v309
    %v1034 = vunpack.c.l.b16 %v310
    %v1035 = vunpack.c.l.b16 %v311
    %v1036 = vunpack.c.l.b16 %v312
    %v1037 = vpack.c.b16 %v750, %v749
    %v1038 = vpack.c.b16 %v752, %v751
    %v1039 = vpack.c.b16 %v754, %v753
    %v1040 = vpack.c.b16 %v756, %v755
    %v1041 = vpack.c.b16 %v758, %v757
    %v1042 = vpack.c.b16 %v760, %v759
    %v1043 = vpack.c.b16 %v762, %v761
    %v1044 = vpack.c.b16 %v764, %v763
    %v1045 = vpack.c.b16 %v766, %v765
    %v1046 = vpack.c.b16 %v768, %v767
    %v1047 = vpack.c.b16 %v770, %v769
    %v1048 = vpack.c.b16 %v772, %v771
    %v1049 = vpack.c.b16 %v774, %v773
    %v1050 = vpack.c.b16 %v776, %v775
    %v1051 = vpack.c.b16 %v778, %v777
    %v1052 = vpack.c.b16 %v780, %v779
    %v1053 = vpack.c.b16 %v782, %v781
    %v1054 = vpack.c.b16 %v784, %v783
    %v1055 = vpack.c.b16 %v786, %v785
    %v1056 = vpack.c.b16 %v788, %v787
    %v1057 = vpack.c.b16 %v790, %v789
    %v1058 = vpack.c.b16 %v792, %v791
    %v1059 = vpack.c.b16 %v794, %v793
    %v1060 = vpack.c.b16 %v796, %v795
    %v1061 = vpack.c.b16 %v798, %v797
    %v1062 = vpack.c.b16 %v800, %v799
    %v1063 = vpack.c.b16 %v802, %v801
    %v1064 = vpack.c.b16 %v804, %v803
    %v1065 = vpack.c.b16 %v806, %v805
    %v1066 = vpack.c.b16 %v808, %v807
    %v1067 = vpack.c.b16 %v810, %v809
    %v1068 = vpack.c.b16 %v812, %v811
    %v1069 = vpack.c.b16 %v814, %v813
    %v1070 = vpack.c.b16 %v816, %v815
    %v1071 = vpack.c.b16 %v818, %v817
    %v1072 = vpack.c.b16 %v820, %v819
    %v1073 = vpack.c.b16 %v822, %v821
    %v1074 = vpack.c.b16 %v824, %v823
    %v1075 = vpack.c.b16 %v826, %v825
    %v1076 = vpack.c.b16 %v828, %v827
    %v1077 = vpack.c.b16 %v830, %v829
    %v1078 = vpack.c.b16 %v832, %v831
    %v1079 = vpack.c.b16 %v834, %v833
    %v1080 = vpack.c.b16 %v836, %v835
    %v1081 = vpack.c.b16 %v838, %v837
    %v1082 = vpack.c.b16 %v840, %v839
    %v1083 = vpack.c.b16 %v842, %v841
    %v1084 = vpack.c.b16 %v844, %v843
    %v1085 = vpack.c.b16 %v846, %v845
    %v1086 = vpack.c.b16 %v848, %v847
    %v1087 = vpack.c.b16 %v850, %v849
    %v1088 = vpack.c.b16 %v852, %v851
    %v1089 = vpack.c.b16 %v854, %v853
    %v1090 = vpack.c.b16 %v856, %v855
    %v1091 = vpack.c.b16 %v858, %v857
    %v1092 = vpack.c.b16 %v860, %v859
    %v1093 = vpack.c.b16 %v862, %v861
    %v1094 = vpack.c.b16 %v864, %v863
    %v1095 = vpack.c.b16 %v866, %v865
    %v1096 = vpack.c.b16 %v868, %v867
    %v1097 = vpack.c.b16 %v870, %v869
    %v1098 = vpack.c.b16 %v872, %v871
    %v1099 = vpack.c.b16 %v874, %v873
    %v1100 = vpack.c.b16 %v876, %v875
    %v1101 = vpack.c.b16 %v878, %v877
    %v1102 = vpack.c.b16 %v880, %v879
    %v1103 = vpack.c.b16 %v882, %v881
    %v1104 = vpack.c.b16 %v884, %v883
    %v1105 = vpack.c.b16 %v886, %v885
    %v1106 = vpack.c.b16 %v888, %v887
    %v1107 = vpack.c.b16 %v890, %v889
    %v1108 = vpack.c.b16 %v892, %v891
    %v1109 = vpack.c.b16 %v894, %v893
    %v1110 = vpack.c.b16 %v896, %v895
    %v1111 = vpack.c.b16 %v898, %v897
    %v1112 = vpack.c.b16 %v900, %v899
    %v1113 = vpack.c.b16 %v902, %v901
    %v1114 = vpack.c.b16 %v904, %v903
    %v1115 = vpack.c.b16 %v906, %v905
    %v1116 = vpack.c.b16 %v908, %v907
    %v1117 = vpack.c.b16 %v910, %v909
    %v1118 = vpack.c.b16 %v912, %v911
    %v1119 = vpack.c.b16 %v914, %v913
    %v1120 = vpack.c.b16 %v916, %v915
    %v1121 = vpack.c.b16 %v918, %v917
    %v1122 = vpack.c.b16 %v920, %v919
    %v1123 = vpack.c.b16 %v922, %v921
    %v1124 = vpack.c.b16 %v924, %v923
    %v1125 = vpack.c.b16 %v926, %v925
    %v1126 = vpack.c.b16 %v928, %v927
    %v1127 = vpack.c.b16 %v930, %v929
    %v1128 = vpack.c.b16 %v932, %v931
    %v1129 = vpack.c.b16 %v934, %v933
    %v1130 = vpack.c.b16 %v936, %v935
    %v1131 = vpack.c.b16 %v938, %v937
    %v1132 = vpack.c.b16 %v940, %v939
    %v1133 = vpack.c.b16 %v942, %v941
    %v1134 = vpack.c.b16 %v944, %v943
    %v1135 = vpack.c.b16 %v946, %v945
    %v1136 = vpack.c.b16 %v948, %v947
    %v1137 = vpack.c.b16 %v950, %v949
    %v1138 = vpack.c.b16 %v952, %v951
    %v1139 = vpack.c.b16 %v954, %v953
    %v1140 = vpack.c.b16 %v956, %v955
    %v1141 = vpack.c.b16 %v958, %v957
    %v1142 = vpack.c.b16 %v960, %v959
    %v1143 = vpack.c.b16 %v962, %v961
    %v1144 = vpack.c.b16 %v964, %v963
    %v1145 = vpack.c.b16 %v966, %v965
    %v1146 = vpack.c.b16 %v968, %v967
    %v1147 = vpack.c.b16 %v970, %v969
    %v1148 = vpack.c.b16 %v972, %v971
    %v1149 = vpack.c.b16 %v974, %v973
    %v1150 = vpack.c.b16 %v976, %v975
    %v1151 = vpack.c.b16 %v978, %v977
    %v1152 = vpack.c.b16 %v980, %v979
    %v1153 = vpack.c.b16 %v982, %v981
    %v1154 = vpack.c.b16 %v984, %v983
    %v1155 = vpack.c.b16 %v986, %v985
    %v1156 = vpack.c.b16 %v988, %v987
    %v1157 = vpack.c.b16 %v990, %v989
    %v1158 = vpack.c.b16 %v992, %v991
    %v1159 = vpack.c.b16 %v994, %v993
    %v1160 = vpack.c.b16 %v996, %v995
    %v1161 = vpack.c.b16 %v998, %v997
    %v1162 = vpack.c.b16 %v1000, %v999
    %v1163 = vpack.c.b16 %v1002, %v1001
    %v1164 = vpack.c.b16 %v1004, %v1003
    %v1165 = vpack.c.b16 %v1006, %v1005
    %v1166 = vpack.c.b16 %v1008, %v1007
    %v1167 = vpack.c.b16 %v1010, %v1009
    %v1168 = vpack.c.b16 %v1012, %v1011
    %v1169 = vpack.c.b16 %v1014, %v1013
    %v1170 = vpack.c.b16 %v1016, %v1015
    %v1171 = vpack.c.b16 %v1018, %v1017
    %v1172 = vpack.c.b16 %v1020, %v1019
    %v1173 = vpack.c.b16 %v1022, %v1021
    %v1174 = vpack.c.b16 %v1024, %v1023
    %v1175 = vpack.c.b16 %v1026, %v1025
    %v1176 = vpack.c.b16 %v1028, %v1027
    %v1177 = vpack.c.b16 %v1030, %v1029
    %v1178 = vpack.c.b16 %v1032, %v1031
    %v1179 = vpack.c.b16 %v1034, %v1033
    %v1180 = vpack.c.b16 %v1036, %v1035
    %1325 = vmatprep.subr.bf16.mxu0 0
    %1326 = vmatpush1.bf16.msra.mxu0 %v1037
    %1327 = vmatprep.subr.bf16.mxu0 0
    %1328 = vmatpush1.bf16.msra.mxu0 %v1038
    %1329 = vmatprep.subr.bf16.mxu0 0
    %1330 = vmatpush1.bf16.msra.mxu0 %v1039
    %1331 = vmatprep.subr.bf16.mxu0 0
    %1332 = vmatpush1.bf16.msra.mxu0 %v1040
    %1333 = vmatprep.subr.bf16.mxu0 0
    %1334 = vmatpush1.bf16.msra.mxu0 %v1041
    %1335 = vmatprep.subr.bf16.mxu0 0
    %1336 = vmatpush1.bf16.msra.mxu0 %v1042
    %1337 = vmatprep.subr.bf16.mxu0 0
    %1338 = vmatpush1.bf16.msra.mxu0 %v1043
    %1339 = vmatprep.subr.bf16.mxu0 0
    %1340 = vmatpush1.bf16.msra.mxu0 %v1044
    %1341 = vmatprep.subr.bf16.mxu0 0
    %1342 = vmatpush1.bf16.msra.mxu0 %v1045
    %1343 = vmatprep.subr.bf16.mxu0 0
    %1344 = vmatpush1.bf16.msra.mxu0 %v1046
    %1345 = vmatprep.subr.bf16.mxu0 0
    %1346 = vmatpush1.bf16.msra.mxu0 %v1047
    %1347 = vmatprep.subr.bf16.mxu0 0
    %1348 = vmatpush1.bf16.msra.mxu0 %v1048
    %1349 = vmatprep.subr.bf16.mxu0 0
    %1350 = vmatpush1.bf16.msra.mxu0 %v1049
    %1351 = vmatprep.subr.bf16.mxu0 0
    %1352 = vmatpush1.bf16.msra.mxu0 %v1050
    %1353 = vmatprep.subr.bf16.mxu0 0
    %1354 = vmatpush1.bf16.msra.mxu0 %v1051
    %1355 = vmatprep.subr.bf16.mxu0 0
    %1356 = vmatpush1.bf16.msra.mxu0 %v1052
    %1357 = vmatprep.mubr.bf16.mxu0 %v360
    %1358 = vmatmul.mubr.bf16.gmra.mrb[0].mxu0 %v346
    %v1359 = vpop.f32.mrb[0].mxu0
    %v1360 = vadd.f32 %v318, %v1359
    %v1361 = vpop.f32.mrb[0].mxu0
    %v1362 = vpop.f32.mrb[0].mxu0
    %v1363 = vpop.f32.mrb[0].mxu0
    %1364 = vdwg.mxu0
    %1365 = vmatprep.subr.bf16.mxu0 0
    %1366 = vmatpush1.bf16.msra.mxu0 %v1053
    %1367 = vmatprep.subr.bf16.mxu0 0
    %1368 = vmatpush1.bf16.msra.mxu0 %v1054
    %1369 = vmatprep.subr.bf16.mxu0 0
    %1370 = vmatpush1.bf16.msra.mxu0 %v1055
    %1371 = vmatprep.subr.bf16.mxu0 0
    %1372 = vmatpush1.bf16.msra.mxu0 %v1056
    %1373 = vmatprep.subr.bf16.mxu0 0
    %1374 = vmatpush1.bf16.msra.mxu0 %v1057
    %1375 = vmatprep.subr.bf16.mxu0 0
    %1376 = vmatpush1.bf16.msra.mxu0 %v1058
    %1377 = vmatprep.subr.bf16.mxu0 0
    %1378 = vmatpush1.bf16.msra.mxu0 %v1059
    %1379 = vmatprep.subr.bf16.mxu0 0
    %1380 = vmatpush1.bf16.msra.mxu0 %v1060
    %1381 = vmatprep.subr.bf16.mxu0 0
    %1382 = vmatpush1.bf16.msra.mxu0 %v1061
    %1383 = vmatprep.subr.bf16.mxu0 0
    %1384 = vmatpush1.bf16.msra.mxu0 %v1062
    %1385 = vmatprep.subr.bf16.mxu0 0
    %1386 = vmatpush1.bf16.msra.mxu0 %v1063
    %1387 = vmatprep.subr.bf16.mxu0 0
    %1388 = vmatpush1.bf16.msra.mxu0 %v1064
    %1389 = vmatprep.subr.bf16.mxu0 0
    %1390 = vmatpush1.bf16.msra.mxu0 %v1065
    %1391 = vmatprep.subr.bf16.mxu0 0
    %1392 = vmatpush1.bf16.msra.mxu0 %v1066
    %1393 = vmatprep.subr.bf16.mxu0 0
    %1394 = vmatpush1.bf16.msra.mxu0 %v1067
    %1395 = vmatprep.subr.bf16.mxu0 0
    %1396 = vmatpush1.bf16.msra.mxu0 %v1068
    %1397 = vmatprep.mubr.bf16.mxu0 %v370
    %1398 = vmatmul.mubr.bf16.gmra.mrb[0].mxu0 %v368
    %v1399 = vpop.f32.mrb[0].mxu0
    %v1400 = vadd.f32 %v1360, %v1399
    %v1401 = vpop.f32.mrb[0].mxu0
    %v1402 = vpop.f32.mrb[0].mxu0
    %v1403 = vpop.f32.mrb[0].mxu0
    %1404 = vdwg.mxu0
    %1405 = vmatprep.subr.bf16.mxu0 0
    %1406 = vmatpush1.bf16.msra.mxu0 %v1069
    %1407 = vmatprep.subr.bf16.mxu0 0
    %1408 = vmatpush1.bf16.msra.mxu0 %v1070
    %1409 = vmatprep.subr.bf16.mxu0 0
    %1410 = vmatpush1.bf16.msra.mxu0 %v1071
    %1411 = vmatprep.subr.bf16.mxu0 0
    %1412 = vmatpush1.bf16.msra.mxu0 %v1072
    %1413 = vmatprep.subr.bf16.mxu0 0
    %1414 = vmatpush1.bf16.msra.mxu0 %v1073
    %1415 = vmatprep.subr.bf16.mxu0 0
    %1416 = vmatpush1.bf16.msra.mxu0 %v1074
    %1417 = vmatprep.subr.bf16.mxu0 0
    %1418 = vmatpush1.bf16.msra.mxu0 %v1075
    %1419 = vmatprep.subr.bf16.mxu0 0
    %1420 = vmatpush1.bf16.msra.mxu0 %v1076
    %1421 = vmatprep.subr.bf16.mxu0 0
    %1422 = vmatpush1.bf16.msra.mxu0 %v1077
    %1423 = vmatprep.subr.bf16.mxu0 0
    %1424 = vmatpush1.bf16.msra.mxu0 %v1078
    %1425 = vmatprep.subr.bf16.mxu0 0
    %1426 = vmatpush1.bf16.msra.mxu0 %v1079
    %1427 = vmatprep.subr.bf16.mxu0 0
    %1428 = vmatpush1.bf16.msra.mxu0 %v1080
    %1429 = vmatprep.subr.bf16.mxu0 0
    %1430 = vmatpush1.bf16.msra.mxu0 %v1081
    %1431 = vmatprep.subr.bf16.mxu0 0
    %1432 = vmatpush1.bf16.msra.mxu0 %v1082
    %1433 = vmatprep.subr.bf16.mxu0 0
    %1434 = vmatpush1.bf16.msra.mxu0 %v1083
    %1435 = vmatprep.subr.bf16.mxu0 0
    %1436 = vmatpush1.bf16.msra.mxu0 %v1084
    %1437 = vmatprep.mubr.bf16.mxu0 %v367
    %1438 = vmatmul.mubr.bf16.gmra.mrb[0].mxu0 %v353
    %v1439 = vpop.f32.mrb[0].mxu0
    %v1440 = vadd.f32 %v1400, %v1439
    %v1441 = vpop.f32.mrb[0].mxu0
    %v1442 = vpop.f32.mrb[0].mxu0
    %v1443 = vpop.f32.mrb[0].mxu0
    %1444 = vdwg.mxu0
    %1445 = vmatprep.subr.bf16.mxu0 0
    %1446 = vmatpush1.bf16.msra.mxu0 %v1085
    %1447 = vmatprep.subr.bf16.mxu0 0
    %1448 = vmatpush1.bf16.msra.mxu0 %v1086
    %1449 = vmatprep.subr.bf16.mxu0 0
    %1450 = vmatpush1.bf16.msra.mxu0 %v1087
    %1451 = vmatprep.subr.bf16.mxu0 0
    %1452 = vmatpush1.bf16.msra.mxu0 %v1088
    %1453 = vmatprep.subr.bf16.mxu0 0
    %1454 = vmatpush1.bf16.msra.mxu0 %v1089
    %1455 = vmatprep.subr.bf16.mxu0 0
    %1456 = vmatpush1.bf16.msra.mxu0 %v1090
    %1457 = vmatprep.subr.bf16.mxu0 0
    %1458 = vmatpush1.bf16.msra.mxu0 %v1091
    %1459 = vmatprep.subr.bf16.mxu0 0
    %1460 = vmatpush1.bf16.msra.mxu0 %v1092
    %1461 = vmatprep.subr.bf16.mxu0 0
    %1462 = vmatpush1.bf16.msra.mxu0 %v1093
    %1463 = vmatprep.subr.bf16.mxu0 0
    %1464 = vmatpush1.bf16.msra.mxu0 %v1094
    %1465 = vmatprep.subr.bf16.mxu0 0
    %1466 = vmatpush1.bf16.msra.mxu0 %v1095
    %1467 = vmatprep.subr.bf16.mxu0 0
    %1468 = vmatpush1.bf16.msra.mxu0 %v1096
    %1469 = vmatprep.subr.bf16.mxu0 0
    %1470 = vmatpush1.bf16.msra.mxu0 %v1097
    %1471 = vmatprep.subr.bf16.mxu0 0
    %1472 = vmatpush1.bf16.msra.mxu0 %v1098
    %1473 = vmatprep.subr.bf16.mxu0 0
    %1474 = vmatpush1.bf16.msra.mxu0 %v1099
    %1475 = vmatprep.subr.bf16.mxu0 0
    %1476 = vmatpush1.bf16.msra.mxu0 %v1100
    %1477 = vmatprep.mubr.bf16.mxu0 %v371
    %1478 = vmatmul.mubr.bf16.gmra.mrb[0].mxu0 %v369
    %v1479 = vpop.f32.mrb[0].mxu0
    %v1480 = vadd.f32 %v1440, %v1479
    %v1481 = vpop.f32.mrb[0].mxu0
    %v1482 = vpop.f32.mrb[0].mxu0
    %v1483 = vpop.f32.mrb[0].mxu0
    %1484 = vdwg.mxu0
    %1485 = vmatprep.subr.bf16.mxu0 0
    %1486 = vmatpush1.bf16.msra.mxu0 %v1101
    %1487 = vmatprep.subr.bf16.mxu0 0
    %1488 = vmatpush1.bf16.msra.mxu0 %v1102
    %1489 = vmatprep.subr.bf16.mxu0 0
    %1490 = vmatpush1.bf16.msra.mxu0 %v1103
    %1491 = vmatprep.subr.bf16.mxu0 0
    %1492 = vmatpush1.bf16.msra.mxu0 %v1104
    %1493 = vmatprep.subr.bf16.mxu0 0
    %1494 = vmatpush1.bf16.msra.mxu0 %v1105
    %1495 = vmatprep.subr.bf16.mxu0 0
    %1496 = vmatpush1.bf16.msra.mxu0 %v1106
    %1497 = vmatprep.subr.bf16.mxu0 0
    %1498 = vmatpush1.bf16.msra.mxu0 %v1107
    %1499 = vmatprep.subr.bf16.mxu0 0
    %1500 = vmatpush1.bf16.msra.mxu0 %v1108
    %1501 = vmatprep.subr.bf16.mxu0 0
    %1502 = vmatpush1.bf16.msra.mxu0 %v1109
    %1503 = vmatprep.subr.bf16.mxu0 0
    %1504 = vmatpush1.bf16.msra.mxu0 %v1110
    %1505 = vmatprep.subr.bf16.mxu0 0
    %1506 = vmatpush1.bf16.msra.mxu0 %v1111
    %1507 = vmatprep.subr.bf16.mxu0 0
    %1508 = vmatpush1.bf16.msra.mxu0 %v1112
    %1509 = vmatprep.subr.bf16.mxu0 0
    %1510 = vmatpush1.bf16.msra.mxu0 %v1113
    %1511 = vmatprep.subr.bf16.mxu0 0
    %1512 = vmatpush1.bf16.msra.mxu0 %v1114
    %1513 = vmatprep.subr.bf16.mxu0 0
    %1514 = vmatpush1.bf16.msra.mxu0 %v1115
    %1515 = vmatprep.subr.bf16.mxu0 0
    %1516 = vmatpush1.bf16.msra.mxu0 %v1116
    %1517 = vmatprep.mubr.bf16.mxu0 %v409
    %1518 = vmatmul.mubr.bf16.gmra.mrb[0].mxu0 %v395
    %v1519 = vpop.f32.mrb[0].mxu0
    %v1520 = vadd.f32 %v1480, %v1519
    %v1521 = vpop.f32.mrb[0].mxu0
    %v1522 = vpop.f32.mrb[0].mxu0
    %v1523 = vpop.f32.mrb[0].mxu0
    %1524 = vdwg.mxu0
    %1525 = vmatprep.subr.bf16.mxu0 0
    %1526 = vmatpush1.bf16.msra.mxu0 %v1117
    %1527 = vmatprep.subr.bf16.mxu0 0
    %1528 = vmatpush1.bf16.msra.mxu0 %v1118
    %1529 = vmatprep.subr.bf16.mxu0 0
    %1530 = vmatpush1.bf16.msra.mxu0 %v1119
    %1531 = vmatprep.subr.bf16.mxu0 0
    %1532 = vmatpush1.bf16.msra.mxu0 %v1120
    %1533 = vmatprep.subr.bf16.mxu0 0
    %1534 = vmatpush1.bf16.msra.mxu0 %v1121
    %1535 = vmatprep.subr.bf16.mxu0 0
    %1536 = vmatpush1.bf16.msra.mxu0 %v1122
    %1537 = vmatprep.subr.bf16.mxu0 0
    %1538 = vmatpush1.bf16.msra.mxu0 %v1123
    %1539 = vmatprep.subr.bf16.mxu0 0
    %1540 = vmatpush1.bf16.msra.mxu0 %v1124
    %1541 = vmatprep.subr.bf16.mxu0 0
    %1542 = vmatpush1.bf16.msra.mxu0 %v1125
    %1543 = vmatprep.subr.bf16.mxu0 0
    %1544 = vmatpush1.bf16.msra.mxu0 %v1126
    %1545 = vmatprep.subr.bf16.mxu0 0
    %1546 = vmatpush1.bf16.msra.mxu0 %v1127
    %1547 = vmatprep.subr.bf16.mxu0 0
    %1548 = vmatpush1.bf16.msra.mxu0 %v1128
    %1549 = vmatprep.subr.bf16.mxu0 0
    %1550 = vmatpush1.bf16.msra.mxu0 %v1129
    %1551 = vmatprep.subr.bf16.mxu0 0
    %1552 = vmatpush1.bf16.msra.mxu0 %v1130
    %1553 = vmatprep.subr.bf16.mxu0 0
    %1554 = vmatpush1.bf16.msra.mxu0 %v1131
    %1555 = vmatprep.subr.bf16.mxu0 0
    %1556 = vmatpush1.bf16.msra.mxu0 %v1132
    %1557 = vmatprep.mubr.bf16.mxu0 %v419
    %1558 = vmatmul.mubr.bf16.gmra.mrb[0].mxu0 %v417
    %v1559 = vpop.f32.mrb[0].mxu0
    %v1560 = vadd.f32 %v1520, %v1559
    %v1561 = vpop.f32.mrb[0].mxu0
    %v1562 = vpop.f32.mrb[0].mxu0
    %v1563 = vpop.f32.mrb[0].mxu0
    %1564 = vdwg.mxu0
    %1565 = vmatprep.subr.bf16.mxu0 0
    %1566 = vmatpush1.bf16.msra.mxu0 %v1133
    %1567 = vmatprep.subr.bf16.mxu0 0
    %1568 = vmatpush1.bf16.msra.mxu0 %v1134
    %1569 = vmatprep.subr.bf16.mxu0 0
    %1570 = vmatpush1.bf16.msra.mxu0 %v1135
    %1571 = vmatprep.subr.bf16.mxu0 0
    %1572 = vmatpush1.bf16.msra.mxu0 %v1136
    %1573 = vmatprep.subr.bf16.mxu0 0
    %1574 = vmatpush1.bf16.msra.mxu0 %v1137
    %1575 = vmatprep.subr.bf16.mxu0 0
    %1576 = vmatpush1.bf16.msra.mxu0 %v1138
    %1577 = vmatprep.subr.bf16.mxu0 0
    %1578 = vmatpush1.bf16.msra.mxu0 %v1139
    %1579 = vmatprep.subr.bf16.mxu0 0
    %1580 = vmatpush1.bf16.msra.mxu0 %v1140
    %1581 = vmatprep.subr.bf16.mxu0 0
    %1582 = vmatpush1.bf16.msra.mxu0 %v1141
    %1583 = vmatprep.subr.bf16.mxu0 0
    %1584 = vmatpush1.bf16.msra.mxu0 %v1142
    %1585 = vmatprep.subr.bf16.mxu0 0
    %1586 = vmatpush1.bf16.msra.mxu0 %v1143
    %1587 = vmatprep.subr.bf16.mxu0 0
    %1588 = vmatpush1.bf16.msra.mxu0 %v1144
    %1589 = vmatprep.subr.bf16.mxu0 0
    %1590 = vmatpush1.bf16.msra.mxu0 %v1145
    %1591 = vmatprep.subr.bf16.mxu0 0
    %1592 = vmatpush1.bf16.msra.mxu0 %v1146
    %1593 = vmatprep.subr.bf16.mxu0 0
    %1594 = vmatpush1.bf16.msra.mxu0 %v1147
    %1595 = vmatprep.subr.bf16.mxu0 0
    %1596 = vmatpush1.bf16.msra.mxu0 %v1148
    %1597 = vmatprep.mubr.bf16.mxu0 %v416
    %1598 = vmatmul.mubr.bf16.gmra.mrb[0].mxu0 %v402
    %v1599 = vpop.f32.mrb[0].mxu0
    %v1600 = vadd.f32 %v1560, %v1599
    %v1601 = vpop.f32.mrb[0].mxu0
    %v1602 = vpop.f32.mrb[0].mxu0
    %v1603 = vpop.f32.mrb[0].mxu0
    %1604 = vdwg.mxu0
    %1605 = vmatprep.subr.bf16.mxu0 0
    %1606 = vmatpush1.bf16.msra.mxu0 %v1149
    %1607 = vmatprep.subr.bf16.mxu0 0
    %1608 = vmatpush1.bf16.msra.mxu0 %v1150
    %1609 = vmatprep.subr.bf16.mxu0 0
    %1610 = vmatpush1.bf16.msra.mxu0 %v1151
    %1611 = vmatprep.subr.bf16.mxu0 0
    %1612 = vmatpush1.bf16.msra.mxu0 %v1152
    %1613 = vmatprep.subr.bf16.mxu0 0
    %1614 = vmatpush1.bf16.msra.mxu0 %v1153
    %1615 = vmatprep.subr.bf16.mxu0 0
    %1616 = vmatpush1.bf16.msra.mxu0 %v1154
    %1617 = vmatprep.subr.bf16.mxu0 0
    %1618 = vmatpush1.bf16.msra.mxu0 %v1155
    %1619 = vmatprep.subr.bf16.mxu0 0
    %1620 = vmatpush1.bf16.msra.mxu0 %v1156
    %1621 = vmatprep.subr.bf16.mxu0 0
    %1622 = vmatpush1.bf16.msra.mxu0 %v1157
    %1623 = vmatprep.subr.bf16.mxu0 0
    %1624 = vmatpush1.bf16.msra.mxu0 %v1158
    %1625 = vmatprep.subr.bf16.mxu0 0
    %1626 = vmatpush1.bf16.msra.mxu0 %v1159
    %1627 = vmatprep.subr.bf16.mxu0 0
    %1628 = vmatpush1.bf16.msra.mxu0 %v1160
    %1629 = vmatprep.subr.bf16.mxu0 0
    %1630 = vmatpush1.bf16.msra.mxu0 %v1161
    %1631 = vmatprep.subr.bf16.mxu0 0
    %1632 = vmatpush1.bf16.msra.mxu0 %v1162
    %1633 = vmatprep.subr.bf16.mxu0 0
    %1634 = vmatpush1.bf16.msra.mxu0 %v1163
    %1635 = vmatprep.subr.bf16.mxu0 0
    %1636 = vmatpush1.bf16.msra.mxu0 %v1164
    %1637 = vmatprep.mubr.bf16.mxu0 %v420
    %1638 = vmatmul.mubr.bf16.gmra.mrb[0].mxu0 %v418
    %v1639 = vpop.f32.mrb[0].mxu0
    %v1640 = vadd.f32 %v1600, %v1639
    %v1641 = vpop.f32.mrb[0].mxu0
    %v1642 = vpop.f32.mrb[0].mxu0
    %v1643 = vpop.f32.mrb[0].mxu0
    %1644 = vdwg.mxu0
    %1645 = vmatprep.subr.bf16.mxu0 0
    %1646 = vmatpush1.bf16.msra.mxu0 %v1165
    %1647 = vmatprep.subr.bf16.mxu0 0
    %1648 = vmatpush1.bf16.msra.mxu0 %v1166
    %1649 = vmatprep.subr.bf16.mxu0 0
    %1650 = vmatpush1.bf16.msra.mxu0 %v1167
    %1651 = vmatprep.subr.bf16.mxu0 0
    %1652 = vmatpush1.bf16.msra.mxu0 %v1168
    %1653 = vmatprep.subr.bf16.mxu0 0
    %1654 = vmatpush1.bf16.msra.mxu0 %v1169
    %1655 = vmatprep.subr.bf16.mxu0 0
    %1656 = vmatpush1.bf16.msra.mxu0 %v1170
    %1657 = vmatprep.subr.bf16.mxu0 0
    %1658 = vmatpush1.bf16.msra.mxu0 %v1171
    %1659 = vmatprep.subr.bf16.mxu0 0
    %1660 = vmatpush1.bf16.msra.mxu0 %v1172
    %1661 = vmatprep.subr.bf16.mxu0 0
    %1662 = vmatpush1.bf16.msra.mxu0 %v1173
    %1663 = vmatprep.subr.bf16.mxu0 0
    %1664 = vmatpush1.bf16.msra.mxu0 %v1174
    %1665 = vmatprep.subr.bf16.mxu0 0
    %1666 = vmatpush1.bf16.msra.mxu0 %v1175
    %1667 = vmatprep.subr.bf16.mxu0 0
    %1668 = vmatpush1.bf16.msra.mxu0 %v1176
    %1669 = vmatprep.subr.bf16.mxu0 0
    %1670 = vmatpush1.bf16.msra.mxu0 %v1177
    %1671 = vmatprep.subr.bf16.mxu0 0
    %1672 = vmatpush1.bf16.msra.mxu0 %v1178
    %1673 = vmatprep.subr.bf16.mxu0 0
    %1674 = vmatpush1.bf16.msra.mxu0 %v1179
    %1675 = vmatprep.subr.bf16.mxu0 0
    %1676 = vmatpush1.bf16.msra.mxu0 %v1180
    %1677 = vmatprep.mubr.bf16.mxu0 %v442
    %1678 = vmatmul.mubr.bf16.gmra.mrb[0].mxu0 %v435
    %v1679 = vpop.f32.mrb[0].mxu0
    %v1680 = vadd.f32 %v1640, %v1679
    %v1681 = vpop.f32.mrb[0].mxu0
    %v1682 = vpop.f32.mrb[0].mxu0
    %v1683 = vpop.f32.mrb[0].mxu0
    %1684 = vdwg.mxu0
    %v1685 = vmax.f32 %v1680, 0.0
    %v1686 = vpack.c.bf16 %v1685, %v1685
    %v1687 = vld [vmem:[%s3] sm:$0xf]
    %v1688 = vld [vmem:[%s3 + $0x4] sm:$0xf]
    %v1689 = vld [vmem:[%s3 + $0x8] sm:$0xf]
    %v1690 = vld [vmem:[%s3 + $0xc] sm:$0xf]
    %v1691 = vld [vmem:[%s3 + $0x10] sm:$0xf]
    %v1692 = vld [vmem:[%s3 + $0x14] sm:$0xf]
    %v1693 = vld [vmem:[%s3 + $0x18] sm:$0xf]
    %v1694 = vld [vmem:[%s3 + $0x1c] sm:$0xf]
    %v1695 = vld [vmem:[%s3 + $0x20] sm:$0xf]
    %v1696 = vld [vmem:[%s3 + $0x24] sm:$0xf]
    %v1697 = vld [vmem:[%s3 + $0x28] sm:$0xf]
    %v1698 = vld [vmem:[%s3 + $0x2c] sm:$0xf]
    %v1699 = vld [vmem:[%s3 + $0x30] sm:$0xf]
    %v1700 = vld [vmem:[%s3 + $0x34] sm:$0xf]
    %v1701 = vld [vmem:[%s3 + $0x38] sm:$0xf]
    %v1702 = vld [vmem:[%s3 + $0x3c] sm:$0xf]
    %v1703 = vld [vmem:[%s4] sm:$0x1]
    %v1705 = vlaneseq
    %v1706 = vshrl.u32 %v1705, 7
    %v1707 = vsub.s32 0, %v1706
    %v1708 = vrot.slane %v1703, %v1707
    %v1726 = vunpack.c.l.b16 %v1687
    %v1727 = vunpack.c.l.b16 %v1688
    %v1728 = vunpack.c.l.b16 %v1689
    %v1729 = vunpack.c.l.b16 %v1690
    %v1730 = vunpack.c.l.b16 %v1691
    %v1731 = vunpack.c.l.b16 %v1692
    %v1732 = vunpack.c.l.b16 %v1693
    %v1733 = vunpack.c.l.b16 %v1694
    %v1734 = vunpack.c.l.b16 %v1695
    %v1735 = vunpack.c.l.b16 %v1696
    %v1736 = vunpack.c.l.b16 %v1697
    %v1737 = vunpack.c.l.b16 %v1698
    %v1738 = vunpack.c.l.b16 %v1699
    %v1739 = vunpack.c.l.b16 %v1700
    %v1740 = vunpack.c.l.b16 %v1701
    %v1741 = vunpack.c.l.b16 %v1702
    %v1742 = vpack.c.b16 %v1727, %v1726
    %v1743 = vpack.c.b16 %v1729, %v1728
    %v1744 = vpack.c.b16 %v1731, %v1730
    %v1745 = vpack.c.b16 %v1733, %v1732
    %v1746 = vpack.c.b16 %v1735, %v1734
    %v1747 = vpack.c.b16 %v1737, %v1736
    %v1748 = vpack.c.b16 %v1739, %v1738
    %v1749 = vpack.c.b16 %v1741, %v1740
    %1758 = vmatprep.subr.bf16.mxu0 0
    %1759 = vmatpush1.bf16.msra.mxu0 %v1742
    %1760 = vmatprep.subr.bf16.mxu0 0
    %1761 = vmatpush1.bf16.msra.mxu0 %v1743
    %1762 = vmatprep.subr.bf16.mxu0 0
    %1763 = vmatpush1.bf16.msra.mxu0 %v1744
    %1764 = vmatprep.subr.bf16.mxu0 0
    %1765 = vmatpush1.bf16.msra.mxu0 %v1745
    %1766 = vmatprep.subr.bf16.mxu0 0
    %1767 = vmatpush1.bf16.msra.mxu0 %v1746
    %1768 = vmatprep.subr.bf16.mxu0 0
    %1769 = vmatpush1.bf16.msra.mxu0 %v1747
    %1770 = vmatprep.subr.bf16.mxu0 0
    %1771 = vmatpush1.bf16.msra.mxu0 %v1748
    %1772 = vmatprep.subr.bf16.mxu0 0
    %1773 = vmatpush1.bf16.msra.mxu0 %v1749
    %1774 = vmatprep.subr.bf16.mxu0 0
    %1775 = vmatpush1.bf16.msra.mxu0 0
    %1776 = vmatprep.subr.bf16.mxu0 0
    %1777 = vmatpush1.bf16.msra.mxu0 0
    %1778 = vmatprep.subr.bf16.mxu0 0
    %1779 = vmatpush1.bf16.msra.mxu0 0
    %1780 = vmatprep.subr.bf16.mxu0 0
    %1781 = vmatpush1.bf16.msra.mxu0 0
    %1782 = vmatprep.subr.bf16.mxu0 0
    %1783 = vmatpush1.bf16.msra.mxu0 0
    %1784 = vmatprep.subr.bf16.mxu0 0
    %1785 = vmatpush1.bf16.msra.mxu0 0
    %1786 = vmatprep.subr.bf16.mxu0 0
    %1787 = vmatpush1.bf16.msra.mxu0 0
    %1788 = vmatprep.subr.bf16.mxu0 0
    %1789 = vmatpush1.bf16.msra.mxu0 0
    %1790 = vmatprep.mubr.bf16.mxu0 0
    %1791 = vmatmul.mubr.bf16.gmra.mrb[0].mxu0 %v1686
    %v1792 = vpop.f32.mrb[0].mxu0
    %v1793 = vadd.f32 %v1708, %v1792
    %v1794 = vpop.f32.mrb[0].mxu0
    %v1795 = vpop.f32.mrb[0].mxu0
    %v1796 = vpop.f32.mrb[0].mxu0
    %1797 = vdwg.mxu0
    %1798 = vst [vmem:[#allocation2] sm:$0x3] %v1793
    // Predicated region
    $region22: #{simple_cnn_forward.5} parent=1 // pred_check
      _
    $region23: #{simple_cnn_forward.5} parent=1 // pred_check_branch
      %1800 = sbr.rel (0) target = $region25
    $region24: #{simple_cnn_forward.5} parent=1 // pred_region
      %s1802 = ssub.s32 32, 32
      %1803 = vsyncadd [#allocation3], %s1802
      %s1805 = sshll.u32 [#allocation2], 4
      %s1806 = int_to_ptr.vmem [resolvable:$true] %s1805
      %1808 = dma.vmem_to_hbm [thread:$0]  %s1806, 32, %s5, [#allocation3]
    $region25: #{simple_cnn_forward.5} parent=1 // pred_fallthru
      _
    // Predicated region
    $region26: #{simple_cnn_forward.5} parent=1 // pred_check
      _
    $region27: #{simple_cnn_forward.5} parent=1 // pred_check_branch
      %1810 = sbr.rel (0) target = $region29
    $region28: #{simple_cnn_forward.5} parent=1 // pred_region
      %1811 = dma.done [#allocation3], 32
    $region29: #{simple_cnn_forward.5} parent=1 // pred_fallthru
      _
    %1812 = vsyncpa [#allocation3], 1

</llo_original>
